<compile_context>
chip_gen: v6e
topology: v6e:2x2x1
jax: 0.10.0
libtpu: 0.0.40
codegen_flags: <defaults>
</compile_context>

<pallas_src>
import jax
import jax.numpy as jnp
from jax.experimental import pallas as pl
from jax.experimental.pallas import tpu as pltpu

BN_EPS = 1e-5   # PyTorch BatchNorm1d default eps


def _round_up(x, m):
    return (x + m - 1) // m * m


def _choose_tiles(batch, n_points, rows_per_cloud=1024):
    """Pick (batch_tile, point_tile).

    Each grid step runs the 3-layer MLP on bt*nt rows for each of the two
    clouds (2*bt*nt MXU rows in total), targeting ~2048 combined rows so the
    ~0.35us per-step pipeline overhead is amortized and each 256-row MXU pass
    is full, while the live layer-3 activations stay ~8 MiB (safe on every
    generation with a 32 MiB scoped-VMEM limit).  nt is always a multiple of
    8 (sublane tile) so the in-kernel (bt, nt, C) <-> (bt*nt, C) reshapes are
    layout-trivial.
    """
    nt = min(_round_up(n_points, 8), rows_per_cloud)
    bt = max(1, rows_per_cloud // nt)
    bt = min(bt, batch)
    return bt, nt


def _make_residual_kernel(bt, nt):
    """Build the fused (features(p1) - features(p0)) kernel for fixed tiles."""

    def kernel(p0_ref, p1_ref, w1_ref, b1_ref, w2_ref, b2_ref, w3_ref, b3_ref,
               r_ref, f0_acc):
        # p0_ref/p1_ref : (bt, nt, 3) f32   point tiles (N edge-padded host-side)
        # wX_ref        : (Cin, Cout)       BN-folded 1x1 conv weight (f32 / bf16)
        # bX_ref        : (1, Cout)   f32   BN-folded bias
        # r_ref         : (bt, K)     f32   resident output block: running max of
        #                                   f1 over point tiles; overwritten with
        #                                   f1_max - f0_max on the last point tile
        # f0_acc        : (bt, K)     f32   VMEM scratch: running max of f0
        ni = pl.program_id(1)

        def tile_features(pts_ref):
            x = pts_ref[...].reshape(bt * nt, pts_ref.shape[-1])     # [M, 3] f32

            def conv_relu(h, w_ref, b_ref):
                # BN(eval) + conv bias folded host-side: one MXU matmul
                # (f32 accumulation) + f32 bias + ReLU epilogue.
                h = jnp.dot(h.astype(w_ref.dtype), w_ref[...],
                            preferred_element_type=jnp.float32)
                return jnp.maximum(h + b_ref[...], 0.0)

            x = conv_relu(x, w1_ref, b1_ref)                          # [M, 64]
            x = conv_relu(x, w2_ref, b2_ref)                          # [M, 128]
            x = conv_relu(x, w3_ref, b3_ref)                          # [M, K]
            k = x.shape[-1]
            return jnp.max(x.reshape(bt, nt, k), axis=1)              # [bt, K]

        f0_tile = tile_features(p0_ref)
        f1_tile = tile_features(p1_ref)

        @pl.when(ni == 0)
        def _():
            f0_acc[...] = f0_tile
            r_ref[...] = f1_tile

        @pl.when(ni > 0)
        def _():
            f0_acc[...] = jnp.maximum(f0_acc[...], f0_tile)
            r_ref[...] = jnp.maximum(r_ref[...], f1_tile)

        # Last point tile: turn the two running maxes into the residual.
        # The resident output block is only flushed to HBM after the last
        # point tile of this batch block, so intermediate contents are fine.
        @pl.when(ni == pl.num_programs(1) - 1)
        def _():
            r_ref[...] = r_ref[...] - f0_acc[...]

    return kernel


def pointnet_feature_residual(p0, p1, params):
    """r = PointNet(p1) - PointNet(p0).  [B, N, 3] x 2 -> [B, K] float32."""
    assert p0.shape == p1.shape
    B, N, _ = p0.shape
    w1, b1, w2, b2, w3, b3 = params
    K = w3.shape[1]

    bt, nt = _choose_tiles(B, N)
    n_btiles = pl.cdiv(B, bt)
    n_ntiles = pl.cdiv(N, nt)
    Bp, Np = n_btiles * bt, n_ntiles * nt

    p0 = p0.astype(jnp.float32)
    p1 = p1.astype(jnp.float32)
    if (Bp, Np) != (B, N):
        # Edge-pad (replicate existing points / batch rows): duplicated points
        # cannot change a max-pool, so no in-kernel validity mask is needed and
        # padded batch rows are simply sliced off at the end.
        pad = ((0, Bp - B), (0, Np - N), (0, 0))
        p0 = jnp.pad(p0, pad, mode="edge")
        p1 = jnp.pad(p1, pad, mode="edge")

    const2d = lambda bi, ni: (0, 0)          # grid-invariant weights: no re-DMA
    pts_spec = pl.BlockSpec((bt, nt, 3), lambda bi, ni: (bi, ni, 0))

    # Advisory cost estimate (both clouds, all three layers) so XLA schedules
    # the surrounding ops around the kernel instead of serializing.
    flops = 2 * Bp * Np * 2 * (3 * 64 + 64 * 128 + 128 * K)
    bytes_accessed = (2 * Bp * Np * 3 * 4
                      + sum(int(a.size) * a.dtype.itemsize for a in params)
                      + Bp * K * 4)

    r = pl.pallas_call(
        _make_residual_kernel(bt, nt),
        out_shape=jax.ShapeDtypeStruct((Bp, K), jnp.float32),
        grid_spec=pltpu.PrefetchScalarGridSpec(
            num_scalar_prefetch=0,
            grid=(n_btiles, n_ntiles),
            in_specs=[
                pts_spec, pts_spec,
                pl.BlockSpec(w1.shape, const2d), pl.BlockSpec(b1.shape, const2d),
                pl.BlockSpec(w2.shape, const2d), pl.BlockSpec(b2.shape, const2d),
                pl.BlockSpec(w3.shape, const2d), pl.BlockSpec(b3.shape, const2d),
            ],
            out_specs=pl.BlockSpec((bt, K), lambda bi, ni: (bi, 0)),
            scratch_shapes=[pltpu.VMEM((bt, K), jnp.float32)],
        ),
        compiler_params=pltpu.CompilerParams(
            # Batch axis parallel (megacore sharding on v7x when n_btiles >= 2),
            # point axis is the running-max reduction -> arbitrary.
            # TODO(synk): try pltpu.CORE_PARALLEL on the batch axis if a v7x
            # profile shows only one TensorCore active.
            dimension_semantics=("parallel", "arbitrary"),
            # Covers the enlarged live activations on every generation:
            # above v5e's 16 MiB default scoped limit, half of v7x's 64 MiB.
            vmem_limit_bytes=32 * 1024 * 1024,
        ),
        cost_estimate=pl.CostEstimate(
            flops=flops, transcendentals=0, bytes_accessed=bytes_accessed),
    )(p0, p1, w1, b1, w2, b2, w3, b3)
    return r[:B]


def init_pointnet_params(key, dim_k=1024, matmul_dtype=jnp.bfloat16):
    """Deterministic parameters matching Pointnet_Features, BN-folded (eval).

    Conv1d(cin, cout, 1) weight [cout, cin, 1] is stored transposed [cin, cout].
    BatchNorm1d(cout) default init (gamma=1, beta=0, running_mean=0, var=1) is
    folded in eval mode:  w' = w * gamma/sqrt(var+eps)
                          b' = (bias - mean) * gamma/sqrt(var+eps) + beta
    Layer-1 weights stay f32 (negligible FLOPs; avoids casting the raw xyz
    coordinates to bf16); layers 2/3 use `matmul_dtype` (bf16 by default) on
    the MXU with f32 accumulation.  Pass matmul_dtype=jnp.float32 for
    bit-closer numerics vs. the f32 PyTorch reference.
    """
    dims = [(3, 64), (64, 128), (128, dim_k)]
    params = []
    for i, (cin, cout) in enumerate(dims):
        key, kw, kb = jax.random.split(key, 3)
        bound = 1.0 / float(cin) ** 0.5       # PyTorch Conv1d default U(-b, b)
        w = jax.random.uniform(kw, (cin, cout), jnp.float32, -bound, bound)
        b = jax.random.uniform(kb, (cout,), jnp.float32, -bound, bound)
        gamma = jnp.ones((cout,), jnp.float32)
        beta = jnp.zeros((cout,), jnp.float32)
        mean = jnp.zeros((cout,), jnp.float32)
        var = jnp.ones((cout,), jnp.float32)
        scale = gamma * jax.lax.rsqrt(var + BN_EPS)
        w = w * scale[None, :]
        b = (b - mean) * scale + beta
        w_dtype = jnp.float32 if i == 0 else matmul_dtype
        params += [w.astype(w_dtype), b.reshape(1, cout).astype(jnp.float32)]
    return tuple(params)


def analytical_pointnetlk_forward(p0, p1, params, mode="train",
                                  maxiter=10, xtol=1e-7):
    """Mirrors AnalyticalPointNetLKWithFeatures.forward (pointnet extractor).

    Cal_Jac returns an all-zero Jacobian, so H = J^T J is singular and the
    inverse raises -> iclk_analytical takes its except-branch:
        r = ptnet(p1, 0) - ptnet(p0, -1),  g = g0 (identity),  itr = -1.
    # TODO(synk): utils.InvMatrix / utils.ExpMap / utils.transform (the
    # iterative LK refinement loop) are external and unreachable with the
    # all-zero analytical Jacobian, so they are not implemented here.
    """
    del mode, maxiter, xtol
    B = p0.shape[0]
    g = jnp.broadcast_to(jnp.eye(4, dtype=p0.dtype), (B, 4, 4))
    r = pointnet_feature_residual(p0, p1, params)
    return r, g


if __name__ == "__main__":
    key = jax.random.PRNGKey(0)
    kparams, k0, k1 = jax.random.split(key, 3)
    B, N, dim_k = 2, 64, 1024
    params = init_pointnet_params(kparams, dim_k=dim_k)
    p0 = jax.random.normal(k0, (B, N, 3), jnp.float32)
    p1 = jax.random.normal(k1, (B, N, 3), jnp.float32)

    r, g = analytical_pointnetlk_forward(p0, p1, params)
    jax.block_until_ready((r, g))
    assert r.shape == (B, dim_k), r.shape
    assert g.shape == (B, 4, 4), g.shape
    print("KERNEL_OK")
</pallas_src>

<mosaic_0001>
module attributes {stable_mosaic.version = 11 : i64} {
  func.func @kernel(%arg0: i32, %arg1: i32, %arg2: memref<2x64x3xf32, #tpu.memory_space<vmem>>, %arg3: memref<2x64x3xf32, #tpu.memory_space<vmem>>, %arg4: memref<3x64xf32, #tpu.memory_space<vmem>>, %arg5: memref<1x64xf32, #tpu.memory_space<vmem>>, %arg6: memref<64x128xbf16, #tpu.memory_space<vmem>>, %arg7: memref<1x128xf32, #tpu.memory_space<vmem>>, %arg8: memref<128x1024xbf16, #tpu.memory_space<vmem>>, %arg9: memref<1x1024xf32, #tpu.memory_space<vmem>>, %arg10: memref<2x1024xf32, #tpu.memory_space<vmem>>, %arg11: memref<2x1024xf32, #tpu.memory_space<vmem>>) attributes {dimension_semantics = [#tpu.dimension_semantics<parallel>, #tpu.dimension_semantics<arbitrary>], iteration_bounds = array<i64: 1, 1>, scalar_prefetch = 0 : i64, scratch_operands = 1 : i64, tpu.core_type = #tpu.core_type<tc>, window_params = [{transform_indices = @transform_0, window_bounds = array<i64: 2, 64, 3>}, {transform_indices = @transform_1, window_bounds = array<i64: 2, 64, 3>}, {pipeline_mode = #tpu.pipeline_mode<synchronous>, transform_indices = @transform_2, window_bounds = array<i64: 3, 64>}, {pipeline_mode = #tpu.pipeline_mode<synchronous>, transform_indices = @transform_3, window_bounds = array<i64: 1, 64>}, {pipeline_mode = #tpu.pipeline_mode<synchronous>, transform_indices = @transform_4, window_bounds = array<i64: 64, 128>}, {pipeline_mode = #tpu.pipeline_mode<synchronous>, transform_indices = @transform_5, window_bounds = array<i64: 1, 128>}, {pipeline_mode = #tpu.pipeline_mode<synchronous>, transform_indices = @transform_6, window_bounds = array<i64: 128, 1024>}, {pipeline_mode = #tpu.pipeline_mode<synchronous>, transform_indices = @transform_7, window_bounds = array<i64: 1, 1024>}, {transform_indices = @transform_8, window_bounds = array<i64: 2, 1024>}]} {
    %c0 = arith.constant 0 : index
    %c0_0 = arith.constant 0 : index
    %c0_1 = arith.constant 0 : index
    %0 = vector.load %arg2[%c0, %c0_0, %c0_1] : memref<2x64x3xf32, #tpu.memory_space<vmem>>, vector<2x64x3xf32>
    %1 = vector.shape_cast %0 : vector<2x64x3xf32> to vector<128x3xf32>
    %c0_2 = arith.constant 0 : index
    %c0_3 = arith.constant 0 : index
    %2 = vector.load %arg4[%c0_2, %c0_3] : memref<3x64xf32, #tpu.memory_space<vmem>>, vector<3x64xf32>
    %cst = arith.constant dense<0.000000e+00> : vector<128x64xf32>
    %3 = tpu.matmul %1, %2, %cst {dimension_numbers = #tpu.dot_dimension_numbers<[1], [0], [0], [1], [0, 0, 1, 1], [], []>} : vector<128x3xf32>, vector<3x64xf32>, vector<128x64xf32> -> vector<128x64xf32>
    %c0_4 = arith.constant 0 : index
    %c0_5 = arith.constant 0 : index
    %4 = vector.load %arg5[%c0_4, %c0_5] : memref<1x64xf32, #tpu.memory_space<vmem>>, vector<1x64xf32>
    %5 = vector.broadcast %4 : vector<1x64xf32> to vector<128x64xf32>
    %6 = arith.addf %3, %5 : vector<128x64xf32>
    %cst_6 = arith.constant 0.000000e+00 : f32
    %7 = vector.broadcast %cst_6 : f32 to vector<128x64xf32>
    %8 = arith.maximumf %6, %7 : vector<128x64xf32>
    %9 = arith.truncf %8 : vector<128x64xf32> to vector<128x64xbf16>
    %c0_7 = arith.constant 0 : index
    %c0_8 = arith.constant 0 : index
    %10 = vector.load %arg6[%c0_7, %c0_8] : memref<64x128xbf16, #tpu.memory_space<vmem>>, vector<64x128xbf16>
    %cst_9 = arith.constant dense<0.000000e+00> : vector<128x128xf32>
    %11 = tpu.matmul %9, %10, %cst_9 {dimension_numbers = #tpu.dot_dimension_numbers<[1], [0], [0], [1], [0, 0, 1, 1], [], []>} : vector<128x64xbf16>, vector<64x128xbf16>, vector<128x128xf32> -> vector<128x128xf32>
    %c0_10 = arith.constant 0 : index
    %c0_11 = arith.constant 0 : index
    %12 = vector.load %arg7[%c0_10, %c0_11] : memref<1x128xf32, #tpu.memory_space<vmem>>, vector<1x128xf32>
    %13 = vector.broadcast %12 : vector<1x128xf32> to vector<128x128xf32>
    %14 = arith.addf %11, %13 : vector<128x128xf32>
    %cst_12 = arith.constant 0.000000e+00 : f32
    %15 = vector.broadcast %cst_12 : f32 to vector<128x128xf32>
    %16 = arith.maximumf %14, %15 : vector<128x128xf32>
    %17 = arith.truncf %16 : vector<128x128xf32> to vector<128x128xbf16>
    %c0_13 = arith.constant 0 : index
    %c0_14 = arith.constant 0 : index
    %18 = vector.load %arg8[%c0_13, %c0_14] : memref<128x1024xbf16, #tpu.memory_space<vmem>>, vector<128x1024xbf16>
    %cst_15 = arith.constant dense<0.000000e+00> : vector<128x1024xf32>
    %19 = tpu.matmul %17, %18, %cst_15 {dimension_numbers = #tpu.dot_dimension_numbers<[1], [0], [0], [1], [0, 0, 1, 1], [], []>} : vector<128x128xbf16>, vector<128x1024xbf16>, vector<128x1024xf32> -> vector<128x1024xf32>
    %c0_16 = arith.constant 0 : index
    %c0_17 = arith.constant 0 : index
    %20 = vector.load %arg9[%c0_16, %c0_17] : memref<1x1024xf32, #tpu.memory_space<vmem>>, vector<1x1024xf32>
    %21 = vector.broadcast %20 : vector<1x1024xf32> to vector<128x1024xf32>
    %22 = arith.addf %19, %21 : vector<128x1024xf32>
    %cst_18 = arith.constant 0.000000e+00 : f32
    %23 = vector.broadcast %cst_18 : f32 to vector<128x1024xf32>
    %24 = arith.maximumf %22, %23 : vector<128x1024xf32>
    %25 = vector.shape_cast %24 : vector<128x1024xf32> to vector<2x64x1024xf32>
    %cst_19 = arith.constant dense<0xFF800000> : vector<2x1024xf32>
    %26 = vector.multi_reduction <maximumf>, %25, %cst_19 [1] : vector<2x64x1024xf32> to vector<2x1024xf32>
    %c0_20 = arith.constant 0 : index
    %c0_21 = arith.constant 0 : index
    %c0_22 = arith.constant 0 : index
    %27 = vector.load %arg3[%c0_20, %c0_21, %c0_22] : memref<2x64x3xf32, #tpu.memory_space<vmem>>, vector<2x64x3xf32>
    %28 = vector.shape_cast %27 : vector<2x64x3xf32> to vector<128x3xf32>
    %c0_23 = arith.constant 0 : index
    %c0_24 = arith.constant 0 : index
    %29 = vector.load %arg4[%c0_23, %c0_24] : memref<3x64xf32, #tpu.memory_space<vmem>>, vector<3x64xf32>
    %cst_25 = arith.constant dense<0.000000e+00> : vector<128x64xf32>
    %30 = tpu.matmul %28, %29, %cst_25 {dimension_numbers = #tpu.dot_dimension_numbers<[1], [0], [0], [1], [0, 0, 1, 1], [], []>} : vector<128x3xf32>, vector<3x64xf32>, vector<128x64xf32> -> vector<128x64xf32>
    %c0_26 = arith.constant 0 : index
    %c0_27 = arith.constant 0 : index
    %31 = vector.load %arg5[%c0_26, %c0_27] : memref<1x64xf32, #tpu.memory_space<vmem>>, vector<1x64xf32>
    %32 = vector.broadcast %31 : vector<1x64xf32> to vector<128x64xf32>
    %33 = arith.addf %30, %32 : vector<128x64xf32>
    %cst_28 = arith.constant 0.000000e+00 : f32
    %34 = vector.broadcast %cst_28 : f32 to vector<128x64xf32>
    %35 = arith.maximumf %33, %34 : vector<128x64xf32>
    %36 = arith.truncf %35 : vector<128x64xf32> to vector<128x64xbf16>
    %c0_29 = arith.constant 0 : index
    %c0_30 = arith.constant 0 : index
    %37 = vector.load %arg6[%c0_29, %c0_30] : memref<64x128xbf16, #tpu.memory_space<vmem>>, vector<64x128xbf16>
    %cst_31 = arith.constant dense<0.000000e+00> : vector<128x128xf32>
    %38 = tpu.matmul %36, %37, %cst_31 {dimension_numbers = #tpu.dot_dimension_numbers<[1], [0], [0], [1], [0, 0, 1, 1], [], []>} : vector<128x64xbf16>, vector<64x128xbf16>, vector<128x128xf32> -> vector<128x128xf32>
    %c0_32 = arith.constant 0 : index
    %c0_33 = arith.constant 0 : index
    %39 = vector.load %arg7[%c0_32, %c0_33] : memref<1x128xf32, #tpu.memory_space<vmem>>, vector<1x128xf32>
    %40 = vector.broadcast %39 : vector<1x128xf32> to vector<128x128xf32>
    %41 = arith.addf %38, %40 : vector<128x128xf32>
    %cst_34 = arith.constant 0.000000e+00 : f32
    %42 = vector.broadcast %cst_34 : f32 to vector<128x128xf32>
    %43 = arith.maximumf %41, %42 : vector<128x128xf32>
    %44 = arith.truncf %43 : vector<128x128xf32> to vector<128x128xbf16>
    %c0_35 = arith.constant 0 : index
    %c0_36 = arith.constant 0 : index
    %45 = vector.load %arg8[%c0_35, %c0_36] : memref<128x1024xbf16, #tpu.memory_space<vmem>>, vector<128x1024xbf16>
    %cst_37 = arith.constant dense<0.000000e+00> : vector<128x1024xf32>
    %46 = tpu.matmul %44, %45, %cst_37 {dimension_numbers = #tpu.dot_dimension_numbers<[1], [0], [0], [1], [0, 0, 1, 1], [], []>} : vector<128x128xbf16>, vector<128x1024xbf16>, vector<128x1024xf32> -> vector<128x1024xf32>
    %c0_38 = arith.constant 0 : index
    %c0_39 = arith.constant 0 : index
    %47 = vector.load %arg9[%c0_38, %c0_39] : memref<1x1024xf32, #tpu.memory_space<vmem>>, vector<1x1024xf32>
    %48 = vector.broadcast %47 : vector<1x1024xf32> to vector<128x1024xf32>
    %49 = arith.addf %46, %48 : vector<128x1024xf32>
    %cst_40 = arith.constant 0.000000e+00 : f32
    %50 = vector.broadcast %cst_40 : f32 to vector<128x1024xf32>
    %51 = arith.maximumf %49, %50 : vector<128x1024xf32>
    %52 = vector.shape_cast %51 : vector<128x1024xf32> to vector<2x64x1024xf32>
    %cst_41 = arith.constant dense<0xFF800000> : vector<2x1024xf32>
    %53 = vector.multi_reduction <maximumf>, %52, %cst_41 [1] : vector<2x64x1024xf32> to vector<2x1024xf32>
    %c0_i32 = arith.constant 0 : i32
    %54 = arith.cmpi eq, %arg1, %c0_i32 : i32
    %55 = arith.extui %54 : i1 to i32
    %c0_i32_42 = arith.constant 0 : i32
    %56 = arith.cmpi ne, %55, %c0_i32_42 : i32
    scf.if %56 {
      %c0_47 = arith.constant 0 : index
      %c0_48 = arith.constant 0 : index
      %63 = vector.load %arg11[%c0_47, %c0_48] : memref<2x1024xf32, #tpu.memory_space<vmem>>, vector<2x1024xf32>
      tpu.vector_store %arg11[%c0_47, %c0_48], %26 {strides = array<i32>} : memref<2x1024xf32, #tpu.memory_space<vmem>>, vector<2x1024xf32>,
      %c0_49 = arith.constant 0 : index
      %c0_50 = arith.constant 0 : index
      %64 = vector.load %arg10[%c0_49, %c0_50] : memref<2x1024xf32, #tpu.memory_space<vmem>>, vector<2x1024xf32>
      tpu.vector_store %arg10[%c0_49, %c0_50], %53 {strides = array<i32>} : memref<2x1024xf32, #tpu.memory_space<vmem>>, vector<2x1024xf32>,
    } else {
    }
    %c0_i32_43 = arith.constant 0 : i32
    %57 = arith.cmpi sgt, %arg1, %c0_i32_43 : i32
    %58 = arith.extui %57 : i1 to i32
    %c0_i32_44 = arith.constant 0 : i32
    %59 = arith.cmpi ne, %58, %c0_i32_44 : i32
    scf.if %59 {
      %c0_47 = arith.constant 0 : index
      %c0_48 = arith.constant 0 : index
      %63 = vector.load %arg11[%c0_47, %c0_48] : memref<2x1024xf32, #tpu.memory_space<vmem>>, vector<2x1024xf32>
      %64 = arith.maximumf %63, %26 : vector<2x1024xf32>
      %c0_49 = arith.constant 0 : index
      %c0_50 = arith.constant 0 : index
      %65 = vector.load %arg11[%c0_49, %c0_50] : memref<2x1024xf32, #tpu.memory_space<vmem>>, vector<2x1024xf32>
      tpu.vector_store %arg11[%c0_49, %c0_50], %64 {strides = array<i32>} : memref<2x1024xf32, #tpu.memory_space<vmem>>, vector<2x1024xf32>,
      %c0_51 = arith.constant 0 : index
      %c0_52 = arith.constant 0 : index
      %66 = vector.load %arg10[%c0_51, %c0_52] : memref<2x1024xf32, #tpu.memory_space<vmem>>, vector<2x1024xf32>
      %67 = arith.maximumf %66, %53 : vector<2x1024xf32>
      %c0_53 = arith.constant 0 : index
      %c0_54 = arith.constant 0 : index
      %68 = vector.load %arg10[%c0_53, %c0_54] : memref<2x1024xf32, #tpu.memory_space<vmem>>, vector<2x1024xf32>
      tpu.vector_store %arg10[%c0_53, %c0_54], %67 {strides = array<i32>} : memref<2x1024xf32, #tpu.memory_space<vmem>>, vector<2x1024xf32>,
    } else {
    }
    %c0_i32_45 = arith.constant 0 : i32
    %60 = arith.cmpi eq, %arg1, %c0_i32_45 : i32
    %61 = arith.extui %60 : i1 to i32
    %c0_i32_46 = arith.constant 0 : i32
    %62 = arith.cmpi ne, %61, %c0_i32_46 : i32
    scf.if %62 {
      %c0_47 = arith.constant 0 : index
      %c0_48 = arith.constant 0 : index
      %63 = vector.load %arg10[%c0_47, %c0_48] : memref<2x1024xf32, #tpu.memory_space<vmem>>, vector<2x1024xf32>
      %c0_49 = arith.constant 0 : index
      %c0_50 = arith.constant 0 : index
      %64 = vector.load %arg11[%c0_49, %c0_50] : memref<2x1024xf32, #tpu.memory_space<vmem>>, vector<2x1024xf32>
      %65 = arith.subf %63, %64 : vector<2x1024xf32>
      %c0_51 = arith.constant 0 : index
      %c0_52 = arith.constant 0 : index
      %66 = vector.load %arg10[%c0_51, %c0_52] : memref<2x1024xf32, #tpu.memory_space<vmem>>, vector<2x1024xf32>
      tpu.vector_store %arg10[%c0_51, %c0_52], %65 {strides = array<i32>} : memref<2x1024xf32, #tpu.memory_space<vmem>>, vector<2x1024xf32>,
    } else {
    }
    return
  }
  func.func @transform_0(%arg0: i32, %arg1: i32) -> (i32, i32, i32) {
    %c0_i32 = arith.constant 0 : i32
    %c0_i32_0 = arith.constant 0 : i32
    return %arg0, %arg1, %c0_i32 : i32, i32, i32
  }
  func.func @transform_1(%arg0: i32, %arg1: i32) -> (i32, i32, i32) {
    %c0_i32 = arith.constant 0 : i32
    %c0_i32_0 = arith.constant 0 : i32
    return %arg0, %arg1, %c0_i32 : i32, i32, i32
  }
  func.func @transform_2(%arg0: i32, %arg1: i32) -> (i32, i32) {
    %c0_i32 = arith.constant 0 : i32
    %c0_i32_0 = arith.constant 0 : i32
    %c0_i32_1 = arith.constant 0 : i32
    return %c0_i32, %c0_i32_0 : i32, i32
  }
  func.func @transform_3(%arg0: i32, %arg1: i32) -> (i32, i32) {
    %c0_i32 = arith.constant 0 : i32
    %c0_i32_0 = arith.constant 0 : i32
    %c0_i32_1 = arith.constant 0 : i32
    return %c0_i32, %c0_i32_0 : i32, i32
  }
  func.func @transform_4(%arg0: i32, %arg1: i32) -> (i32, i32) {
    %c0_i32 = arith.constant 0 : i32
    %c0_i32_0 = arith.constant 0 : i32
    %c0_i32_1 = arith.constant 0 : i32
    return %c0_i32, %c0_i32_0 : i32, i32
  }
  func.func @transform_5(%arg0: i32, %arg1: i32) -> (i32, i32) {
    %c0_i32 = arith.constant 0 : i32
    %c0_i32_0 = arith.constant 0 : i32
    %c0_i32_1 = arith.constant 0 : i32
    return %c0_i32, %c0_i32_0 : i32, i32
  }
  func.func @transform_6(%arg0: i32, %arg1: i32) -> (i32, i32) {
    %c0_i32 = arith.constant 0 : i32
    %c0_i32_0 = arith.constant 0 : i32
    %c0_i32_1 = arith.constant 0 : i32
    return %c0_i32, %c0_i32_0 : i32, i32
  }
  func.func @transform_7(%arg0: i32, %arg1: i32) -> (i32, i32) {
    %c0_i32 = arith.constant 0 : i32
    %c0_i32_0 = arith.constant 0 : i32
    %c0_i32_1 = arith.constant 0 : i32
    return %c0_i32, %c0_i32_0 : i32, i32
  }
  func.func @transform_8(%arg0: i32, %arg1: i32) -> (i32, i32) {
    %c0_i32 = arith.constant 0 : i32
    %c0_i32_0 = arith.constant 0 : i32
    return %arg0, %c0_i32 : i32, i32
  }
}

</mosaic_0001>

<llo_original>
// kernel: tpu_custom_call.1
$region0: #{tpu_custom_call.1}
  #allocation0 [shape = 'u32[]', space=smem, size = 0x4, offset = 0x4, fixed_abs, tag = 'smem constant byte address 0x4 - core index']
  #allocation1 [shape = 'u32[144,128]{1,0:T(1,128)}', space=vmem, size = 0x12000, scoped, tag = 'internal scratch']
  #allocation2 [shape = 'f32[2,1024]{1,0:T(2,128)}', space=vmem, size = 0x2000, scoped, tag = 'scratch operand']
  %s0 = inlined_call_operand.vmem [shape: f32[2,64,3], index: 0, kind: input, shape index: {}]
  %s1 = inlined_call_operand.vmem [shape: f32[2,64,3], index: 1, kind: input, shape index: {}]
  %s2 = inlined_call_operand.vmem [shape: f32[3,64], index: 2, kind: input, shape index: {}]
  %s3 = inlined_call_operand.vmem [shape: f32[1,64], index: 3, kind: input, shape index: {}]
  %s4 = inlined_call_operand.vmem [shape: bf16[64,128], index: 4, kind: input, shape index: {}]
  %s5 = inlined_call_operand.vmem [shape: f32[1,128], index: 5, kind: input, shape index: {}]
  %s6 = inlined_call_operand.hbm [shape: bf16[128,1024], index: 6, kind: input, shape index: {}]
  %s7 = inlined_call_operand.vmem [shape: f32[1,1024], index: 7, kind: input, shape index: {}]
  %s8 = inlined_call_operand.hbm [shape: f32[2,1024], index: 8, kind: output, shape index: {}]
  %s9 = sld [smem:[#allocation0]]
  $region58: #{tpu_custom_call.1} parent=0
    _
  %s11 = ssub.s32 1, %s9
  %s12 = scalar_select 0, %s11, %s9
  $region1: #{tpu_custom_call.1} parent=0
    #allocation3 [shape = 'u8[262144]{0}', space=vmem, size = 0x40000, scoped, tag = 'input window, operand 6, single buffered']
    #allocation4 [shape = 's32[1]{0}', space=sflag, size = 0x4, scoped, tag = 'scoped memory for tpu_custom_call.1']
    #allocation5 [shape = 's32[1]{0}', space=sflag, size = 0x4, scoped, tag = 'scoped memory for tpu_custom_call.1']
    #allocation6 [shape = 'u8[8192]{0}', space=vmem, size = 0x2000, scoped, tag = 'output window, operand 0, single buffered']
    %13 = vsyncpa [#allocation4], 0
    %14 = vsyncpa [#allocation5], 0
    // Predicated region
    $region2: #{tpu_custom_call.1} parent=1 // pred_check
      _
    $region3: #{tpu_custom_call.1} parent=1 // pred_check_branch
      %16 = sbr.rel (0) target = $region5
    $region4: #{tpu_custom_call.1} parent=1 // pred_region
      _
    $region5: #{tpu_custom_call.1} parent=1 // pred_fallthru
      _
    // Predicated region
    $region6: #{tpu_custom_call.1} parent=1 // pred_check
      _
    $region7: #{tpu_custom_call.1} parent=1 // pred_check_branch
      %18 = sbr.rel (0) target = $region9
    $region8: #{tpu_custom_call.1} parent=1 // pred_region
      _
    $region9: #{tpu_custom_call.1} parent=1 // pred_fallthru
      _
    // Predicated region
    $region10: #{tpu_custom_call.1} parent=1 // pred_check
      _
    $region11: #{tpu_custom_call.1} parent=1 // pred_check_branch
      %20 = sbr.rel (0) target = $region13
    $region12: #{tpu_custom_call.1} parent=1 // pred_region
      _
    $region13: #{tpu_custom_call.1} parent=1 // pred_fallthru
      _
    // Predicated region
    $region14: #{tpu_custom_call.1} parent=1 // pred_check
      _
    $region15: #{tpu_custom_call.1} parent=1 // pred_check_branch
      %22 = sbr.rel (0) target = $region17
    $region16: #{tpu_custom_call.1} parent=1 // pred_region
      _
    $region17: #{tpu_custom_call.1} parent=1 // pred_fallthru
      _
    // Predicated region
    $region18: #{tpu_custom_call.1} parent=1 // pred_check
      _
    $region19: #{tpu_custom_call.1} parent=1 // pred_check_branch
      %24 = sbr.rel (0) target = $region21
    $region20: #{tpu_custom_call.1} parent=1 // pred_region
      _
    $region21: #{tpu_custom_call.1} parent=1 // pred_fallthru
      _
    // Predicated region
    $region22: #{tpu_custom_call.1} parent=1 // pred_check
      _
    $region23: #{tpu_custom_call.1} parent=1 // pred_check_branch
      %26 = sbr.rel (0) target = $region25
    $region24: #{tpu_custom_call.1} parent=1 // pred_region
      _
    $region25: #{tpu_custom_call.1} parent=1 // pred_fallthru
      _
    // Predicated region
    $region26: #{tpu_custom_call.1} parent=1 // pred_check
      _
    $region27: #{tpu_custom_call.1} parent=1 // pred_check_branch
      %28 = sbr.rel (0) target = $region29
    $region28: #{tpu_custom_call.1} parent=1 // pred_region
      %s30 = ssub.s32 8192, 8192
      %31 = vsyncadd [#allocation4], %s30
      %s32 = sshll.u32 [#allocation3], 4
      %s33 = int_to_ptr.vmem [resolvable:$true] %s32
      %38 = dma.hbm_to_vmem [thread:$0]  %s6, 8192, %s33, [#allocation4], 512, 512, 32
    $region29: #{tpu_custom_call.1} parent=1 // pred_fallthru
      _
    // Predicated region
    $region30: #{tpu_custom_call.1} parent=1 // pred_check
      _
    $region31: #{tpu_custom_call.1} parent=1 // pred_check_branch
      %40 = sbr.rel (0) target = $region33
    $region32: #{tpu_custom_call.1} parent=1 // pred_region
      _
    $region33: #{tpu_custom_call.1} parent=1 // pred_fallthru
      _
    // Predicated region
    $region34: #{tpu_custom_call.1} parent=1 // pred_check
      _
    $region35: #{tpu_custom_call.1} parent=1 // pred_check_branch
      %42 = sbr.rel (0) target = $region37
    $region36: #{tpu_custom_call.1} parent=1 // pred_region
      %43 = dma.done [#allocation4], 8192
    $region37: #{tpu_custom_call.1} parent=1 // pred_fallthru
      _
    %v45 = vld [vmem:[%s0] sm:$0xff]
    %v46 = vld [vmem:[%s0 + $0x8] sm:$0xff]
    %v47 = vld [vmem:[%s0 + $0x10] sm:$0xff]
    %v48 = vld [vmem:[%s0 + $0x18] sm:$0xff]
    %v49 = vld [vmem:[%s0 + $0x20] sm:$0xff]
    %v50 = vld [vmem:[%s0 + $0x28] sm:$0xff]
    %v51 = vld [vmem:[%s0 + $0x30] sm:$0xff]
    %v52 = vld [vmem:[%s0 + $0x38] sm:$0xff]
    %v53 = vld [vmem:[%s0 + $0x40] sm:$0xff]
    %v54 = vld [vmem:[%s0 + $0x48] sm:$0xff]
    %v55 = vld [vmem:[%s0 + $0x50] sm:$0xff]
    %v56 = vld [vmem:[%s0 + $0x58] sm:$0xff]
    %v57 = vld [vmem:[%s0 + $0x60] sm:$0xff]
    %v58 = vld [vmem:[%s0 + $0x68] sm:$0xff]
    %v59 = vld [vmem:[%s0 + $0x70] sm:$0xff]
    %v60 = vld [vmem:[%s0 + $0x78] sm:$0xff]
    %v61 = vld [vmem:[%s2] sm:$0x7]
    %v62 = vld [vmem:[%s3] sm:$0x1]
    %v64 = vlaneseq
    %v65 = vshrl.u32 %v64, 7
    %v66 = vsub.s32 0, %v65
    %v67 = vrot.slane %v62, %v66
    %vm69 = vcmask 23552
    %v71 = vsel %vm69, %v45, 0
    %v74 = vsel %vm69, %v46, 0
    %v77 = vsel %vm69, %v47, 0
    %v80 = vsel %vm69, %v48, 0
    %v83 = vsel %vm69, %v49, 0
    %v86 = vsel %vm69, %v50, 0
    %v89 = vsel %vm69, %v51, 0
    %v92 = vsel %vm69, %v52, 0
    %v95 = vsel %vm69, %v53, 0
    %v98 = vsel %vm69, %v54, 0
    %v101 = vsel %vm69, %v55, 0
    %v104 = vsel %vm69, %v56, 0
    %v107 = vsel %vm69, %v57, 0
    %v110 = vsel %vm69, %v58, 0
    %v113 = vsel %vm69, %v59, 0
    %v116 = vsel %vm69, %v60, 0
    %vm118 = vcmask 1042432
    %v120 = vsel %vm118, %v61, 0
    %122 = vmatprep.subr.mxu0 0.0
    %123 = vmatpush1.msra.mxu0 0.0
    %124 = vmatprep.subr.mxu0 0.0
    %125 = vmatpush1.msra.mxu0 0.0
    %126 = vmatprep.subr.mxu0 0.0
    %127 = vmatpush1.msra.mxu0 0.0
    %128 = vmatprep.subr.mxu0 0.0
    %129 = vmatpush1.msra.mxu0 0.0
    %130 = vmatprep.subr.mxu0 0.0
    %131 = vmatpush1.msra.mxu0 0.0
    %132 = vmatprep.subr.mxu0 0.0
    %133 = vmatpush1.msra.mxu0 0.0
    %134 = vmatprep.subr.mxu0 0.0
    %135 = vmatpush1.msra.mxu0 0.0
    %136 = vmatprep.subr.mxu0 0.0
    %137 = vmatpush1.msra.mxu0 0.0
    %138 = vmatprep.subr.mxu0 0.0
    %139 = vmatpush1.msra.mxu0 0.0
    %140 = vmatprep.subr.mxu0 0.0
    %141 = vmatpush1.msra.mxu0 0.0
    %142 = vmatprep.subr.mxu0 0.0
    %143 = vmatpush1.msra.mxu0 0.0
    %144 = vmatprep.subr.mxu0 0.0
    %145 = vmatpush1.msra.mxu0 0.0
    %146 = vmatprep.subr.mxu0 0.0
    %147 = vmatpush1.msra.mxu0 0.0
    %148 = vmatprep.subr.mxu0 0.0
    %149 = vmatpush1.msra.mxu0 0.0
    %150 = vmatprep.subr.mxu0 0.0
    %151 = vmatpush1.msra.mxu0 0.0
    %152 = vmatprep.subr.mxu0 0.0
    %153 = vmatpush1.msra.mxu0 %v120
    %154 = vmatprep.subr.mxu0 0.0
    %155 = vmatpush2.msra.mxu0 0.0
    %156 = vmatprep.subr.mxu0 0.0
    %157 = vmatpush2.msra.mxu0 0.0
    %158 = vmatprep.subr.mxu0 0.0
    %159 = vmatpush2.msra.mxu0 0.0
    %160 = vmatprep.subr.mxu0 0.0
    %161 = vmatpush2.msra.mxu0 0.0
    %162 = vmatprep.subr.mxu0 0.0
    %163 = vmatpush2.msra.mxu0 0.0
    %164 = vmatprep.subr.mxu0 0.0
    %165 = vmatpush2.msra.mxu0 0.0
    %166 = vmatprep.subr.mxu0 0.0
    %167 = vmatpush2.msra.mxu0 0.0
    %168 = vmatprep.subr.mxu0 0.0
    %169 = vmatpush2.msra.mxu0 0.0
    %170 = vmatprep.subr.mxu0 0.0
    %171 = vmatpush2.msra.mxu0 0.0
    %172 = vmatprep.subr.mxu0 0.0
    %173 = vmatpush2.msra.mxu0 0.0
    %174 = vmatprep.subr.mxu0 0.0
    %175 = vmatpush2.msra.mxu0 0.0
    %176 = vmatprep.subr.mxu0 0.0
    %177 = vmatpush2.msra.mxu0 0.0
    %178 = vmatprep.subr.mxu0 0.0
    %179 = vmatpush2.msra.mxu0 0.0
    %180 = vmatprep.subr.mxu0 0.0
    %181 = vmatpush2.msra.mxu0 0.0
    %182 = vmatprep.subr.mxu0 0.0
    %183 = vmatpush2.msra.mxu0 0.0
    %184 = vmatprep.subr.mxu0 0.0
    %185 = vmatpush2.msra.mxu0 0.0
    %186 = vmatprep.mubr.f32.mxu0 0.0
    %187 = vmatmul.mubr.f32.gmra.mxu0 %v71
    %v188 = vpop.f32.mrf.mxu0
    %v189 = vadd.f32 %v67, %v188
    %v190 = vpop.f32.mrf.mxu0
    %191 = vmatprep.mubr.f32.mxu0 0.0
    %192 = vmatmul.mubr.f32.gmra.mxu0 %v74
    %v193 = vpop.f32.mrf.mxu0
    %v194 = vadd.f32 %v67, %v193
    %v195 = vpop.f32.mrf.mxu0
    %196 = vmatprep.mubr.f32.mxu0 0.0
    %197 = vmatmul.mubr.f32.gmra.mxu0 %v77
    %v198 = vpop.f32.mrf.mxu0
    %v199 = vadd.f32 %v67, %v198
    %v200 = vpop.f32.mrf.mxu0
    %201 = vmatprep.mubr.f32.mxu0 0.0
    %202 = vmatmul.mubr.f32.gmra.mxu0 %v80
    %v203 = vpop.f32.mrf.mxu0
    %v204 = vadd.f32 %v67, %v203
    %v205 = vpop.f32.mrf.mxu0
    %206 = vmatprep.mubr.f32.mxu0 0.0
    %207 = vmatmul.mubr.f32.gmra.mxu0 %v83
    %v208 = vpop.f32.mrf.mxu0
    %v209 = vadd.f32 %v67, %v208
    %v210 = vpop.f32.mrf.mxu0
    %211 = vmatprep.mubr.f32.mxu0 0.0
    %212 = vmatmul.mubr.f32.gmra.mxu0 %v86
    %v213 = vpop.f32.mrf.mxu0
    %v214 = vadd.f32 %v67, %v213
    %v215 = vpop.f32.mrf.mxu0
    %216 = vmatprep.mubr.f32.mxu0 0.0
    %217 = vmatmul.mubr.f32.gmra.mxu0 %v89
    %v218 = vpop.f32.mrf.mxu0
    %v219 = vadd.f32 %v67, %v218
    %v220 = vpop.f32.mrf.mxu0
    %221 = vmatprep.mubr.f32.mxu0 0.0
    %222 = vmatmul.mubr.f32.gmra.mxu0 %v92
    %v223 = vpop.f32.mrf.mxu0
    %v224 = vadd.f32 %v67, %v223
    %v225 = vpop.f32.mrf.mxu0
    %226 = vmatprep.mubr.f32.mxu0 0.0
    %227 = vmatmul.mubr.f32.gmra.mxu0 %v95
    %v228 = vpop.f32.mrf.mxu0
    %v229 = vadd.f32 %v67, %v228
    %v230 = vpop.f32.mrf.mxu0
    %231 = vmatprep.mubr.f32.mxu0 0.0
    %232 = vmatmul.mubr.f32.gmra.mxu0 %v98
    %v233 = vpop.f32.mrf.mxu0
    %v234 = vadd.f32 %v67, %v233
    %v235 = vpop.f32.mrf.mxu0
    %236 = vmatprep.mubr.f32.mxu0 0.0
    %237 = vmatmul.mubr.f32.gmra.mxu0 %v101
    %v238 = vpop.f32.mrf.mxu0
    %v239 = vadd.f32 %v67, %v238
    %v240 = vpop.f32.mrf.mxu0
    %241 = vmatprep.mubr.f32.mxu0 0.0
    %242 = vmatmul.mubr.f32.gmra.mxu0 %v104
    %v243 = vpop.f32.mrf.mxu0
    %v244 = vadd.f32 %v67, %v243
    %v245 = vpop.f32.mrf.mxu0
    %246 = vmatprep.mubr.f32.mxu0 0.0
    %247 = vmatmul.mubr.f32.gmra.mxu0 %v107
    %v248 = vpop.f32.mrf.mxu0
    %v249 = vadd.f32 %v67, %v248
    %v250 = vpop.f32.mrf.mxu0
    %251 = vmatprep.mubr.f32.mxu0 0.0
    %252 = vmatmul.mubr.f32.gmra.mxu0 %v110
    %v253 = vpop.f32.mrf.mxu0
    %v254 = vadd.f32 %v67, %v253
    %v255 = vpop.f32.mrf.mxu0
    %256 = vmatprep.mubr.f32.mxu0 0.0
    %257 = vmatmul.mubr.f32.gmra.mxu0 %v113
    %v258 = vpop.f32.mrf.mxu0
    %v259 = vadd.f32 %v67, %v258
    %v260 = vpop.f32.mrf.mxu0
    %261 = vmatprep.mubr.f32.mxu0 0.0
    %262 = vmatmul.mubr.f32.gmra.mxu0 %v116
    %v263 = vpop.f32.mrf.mxu0
    %v264 = vadd.f32 %v67, %v263
    %v265 = vpop.f32.mrf.mxu0
    %266 = vdwg.mxu0
    %v267 = vmax.f32 %v189, 0.0
    %v268 = vmax.f32 %v194, 0.0
    %v269 = vmax.f32 %v199, 0.0
    %v270 = vmax.f32 %v204, 0.0
    %v271 = vmax.f32 %v209, 0.0
    %v272 = vmax.f32 %v214, 0.0
    %v273 = vmax.f32 %v219, 0.0
    %v274 = vmax.f32 %v224, 0.0
    %v275 = vmax.f32 %v229, 0.0
    %v276 = vmax.f32 %v234, 0.0
    %v277 = vmax.f32 %v239, 0.0
    %v278 = vmax.f32 %v244, 0.0
    %v279 = vmax.f32 %v249, 0.0
    %v280 = vmax.f32 %v254, 0.0
    %v281 = vmax.f32 %v259, 0.0
    %v282 = vmax.f32 %v264, 0.0
    %v283 = vpack.c.bf16 %v268, %v267
    %v284 = vpack.c.bf16 %v270, %v269
    %v285 = vpack.c.bf16 %v272, %v271
    %v286 = vpack.c.bf16 %v274, %v273
    %v287 = vpack.c.bf16 %v276, %v275
    %v288 = vpack.c.bf16 %v278, %v277
    %v289 = vpack.c.bf16 %v280, %v279
    %v290 = vpack.c.bf16 %v282, %v281
    %v291 = vld [vmem:[%s4] sm:$0xf]
    %v292 = vld [vmem:[%s4 + $0x4] sm:$0xf]
    %v293 = vld [vmem:[%s4 + $0x8] sm:$0xf]
    %v294 = vld [vmem:[%s4 + $0xc] sm:$0xf]
    %v295 = vld [vmem:[%s4 + $0x10] sm:$0xf]
    %v296 = vld [vmem:[%s4 + $0x14] sm:$0xf]
    %v297 = vld [vmem:[%s4 + $0x18] sm:$0xf]
    %v298 = vld [vmem:[%s4 + $0x1c] sm:$0xf]
    %v299 = vld [vmem:[%s5] sm:$0x1]
    %v301 = vlaneseq
    %v302 = vshrl.u32 %v301, 7
    %v303 = vsub.s32 0, %v302
    %v304 = vrot.slane %v299, %v303
    %v314 = vunpack.c.l.b16 %v291
    %v315 = vunpack.c.l.b16 %v292
    %v316 = vunpack.c.l.b16 %v293
    %v317 = vunpack.c.l.b16 %v294
    %v318 = vunpack.c.l.b16 %v295
    %v319 = vunpack.c.l.b16 %v296
    %v320 = vunpack.c.l.b16 %v297
    %v321 = vunpack.c.l.b16 %v298
    %v322 = vpack.c.b16 %v315, %v314
    %v323 = vpack.c.b16 %v317, %v316
    %v324 = vpack.c.b16 %v319, %v318
    %v325 = vpack.c.b16 %v321, %v320
    %vm330 = vcmask 523264
    %v332 = vsel %vm330, %v283, 0
    %v335 = vsel %vm330, %v284, 0
    %v338 = vsel %vm330, %v285, 0
    %v341 = vsel %vm330, %v286, 0
    %v344 = vsel %vm330, %v287, 0
    %v347 = vsel %vm330, %v288, 0
    %v350 = vsel %vm330, %v289, 0
    %v353 = vsel %vm330, %v290, 0
    %355 = vmatprep.subr.bf16.mxu0 0
    %356 = vmatpush1.bf16.msra.mxu0 0
    %357 = vmatprep.subr.bf16.mxu0 0
    %358 = vmatpush1.bf16.msra.mxu0 0
    %359 = vmatprep.subr.bf16.mxu0 0
    %360 = vmatpush1.bf16.msra.mxu0 0
    %361 = vmatprep.subr.bf16.mxu0 0
    %362 = vmatpush1.bf16.msra.mxu0 0
    %363 = vmatprep.subr.bf16.mxu0 0
    %364 = vmatpush1.bf16.msra.mxu0 %v325
    %365 = vmatprep.subr.bf16.mxu0 0
    %366 = vmatpush1.bf16.msra.mxu0 %v324
    %367 = vmatprep.subr.bf16.mxu0 0
    %368 = vmatpush1.bf16.msra.mxu0 %v323
    %369 = vmatprep.subr.bf16.mxu0 0
    %370 = vmatpush1.bf16.msra.mxu0 %v322
    %371 = vmatprep.subr.bf16.mxu0 0
    %372 = vmatpush2.bf16.msra.mxu0 0
    %373 = vmatprep.subr.bf16.mxu0 0
    %374 = vmatpush2.bf16.msra.mxu0 0
    %375 = vmatprep.subr.bf16.mxu0 0
    %376 = vmatpush2.bf16.msra.mxu0 0
    %377 = vmatprep.subr.bf16.mxu0 0
    %378 = vmatpush2.bf16.msra.mxu0 0
    %379 = vmatprep.subr.bf16.mxu0 0
    %380 = vmatpush2.bf16.msra.mxu0 0
    %381 = vmatprep.subr.bf16.mxu0 0
    %382 = vmatpush2.bf16.msra.mxu0 0
    %383 = vmatprep.subr.bf16.mxu0 0
    %384 = vmatpush2.bf16.msra.mxu0 0
    %385 = vmatprep.subr.bf16.mxu0 0
    %386 = vmatpush2.bf16.msra.mxu0 0
    %387 = vmatprep.mubr.bf16.mxu0 0
    %388 = vmatmul.mubr.bf16.gmra.mxu0 %v332
    %v389 = vpop.f32.mrf.mxu0
    %v390 = vadd.f32 %v304, %v389
    %v391 = vpop.f32.mrf.mxu0
    %v392 = vpop.f32.mrf.mxu0
    %v393 = vadd.f32 %v304, %v392
    %v394 = vpop.f32.mrf.mxu0
    %395 = vmatprep.mubr.bf16.mxu0 0
    %396 = vmatmul.mubr.bf16.gmra.mxu0 %v335
    %v397 = vpop.f32.mrf.mxu0
    %v398 = vadd.f32 %v304, %v397
    %v399 = vpop.f32.mrf.mxu0
    %v400 = vpop.f32.mrf.mxu0
    %v401 = vadd.f32 %v304, %v400
    %v402 = vpop.f32.mrf.mxu0
    %403 = vmatprep.mubr.bf16.mxu0 0
    %404 = vmatmul.mubr.bf16.gmra.mxu0 %v338
    %v405 = vpop.f32.mrf.mxu0
    %v406 = vadd.f32 %v304, %v405
    %v407 = vpop.f32.mrf.mxu0
    %v408 = vpop.f32.mrf.mxu0
    %v409 = vadd.f32 %v304, %v408
    %v410 = vpop.f32.mrf.mxu0
    %411 = vmatprep.mubr.bf16.mxu0 0
    %412 = vmatmul.mubr.bf16.gmra.mxu0 %v341
    %v413 = vpop.f32.mrf.mxu0
    %v414 = vadd.f32 %v304, %v413
    %v415 = vpop.f32.mrf.mxu0
    %v416 = vpop.f32.mrf.mxu0
    %v417 = vadd.f32 %v304, %v416
    %v418 = vpop.f32.mrf.mxu0
    %419 = vmatprep.mubr.bf16.mxu0 0
    %420 = vmatmul.mubr.bf16.gmra.mxu0 %v344
    %v421 = vpop.f32.mrf.mxu0
    %v422 = vadd.f32 %v304, %v421
    %v423 = vpop.f32.mrf.mxu0
    %v424 = vpop.f32.mrf.mxu0
    %v425 = vadd.f32 %v304, %v424
    %v426 = vpop.f32.mrf.mxu0
    %427 = vmatprep.mubr.bf16.mxu0 0
    %428 = vmatmul.mubr.bf16.gmra.mxu0 %v347
    %v429 = vpop.f32.mrf.mxu0
    %v430 = vadd.f32 %v304, %v429
    %v431 = vpop.f32.mrf.mxu0
    %v432 = vpop.f32.mrf.mxu0
    %v433 = vadd.f32 %v304, %v432
    %v434 = vpop.f32.mrf.mxu0
    %435 = vmatprep.mubr.bf16.mxu0 0
    %436 = vmatmul.mubr.bf16.gmra.mxu0 %v350
    %v437 = vpop.f32.mrf.mxu0
    %v438 = vadd.f32 %v304, %v437
    %v439 = vpop.f32.mrf.mxu0
    %v440 = vpop.f32.mrf.mxu0
    %v441 = vadd.f32 %v304, %v440
    %v442 = vpop.f32.mrf.mxu0
    %443 = vmatprep.mubr.bf16.mxu0 0
    %444 = vmatmul.mubr.bf16.gmra.mxu0 %v353
    %v445 = vpop.f32.mrf.mxu0
    %v446 = vadd.f32 %v304, %v445
    %v447 = vpop.f32.mrf.mxu0
    %v448 = vpop.f32.mrf.mxu0
    %v449 = vadd.f32 %v304, %v448
    %v450 = vpop.f32.mrf.mxu0
    %451 = vdwg.mxu0
    %v452 = vmax.f32 %v390, 0.0
    %v453 = vmax.f32 %v393, 0.0
    %v454 = vmax.f32 %v398, 0.0
    %v455 = vmax.f32 %v401, 0.0
    %v456 = vmax.f32 %v406, 0.0
    %v457 = vmax.f32 %v409, 0.0
    %v458 = vmax.f32 %v414, 0.0
    %v459 = vmax.f32 %v417, 0.0
    %v460 = vmax.f32 %v422, 0.0
    %v461 = vmax.f32 %v425, 0.0
    %v462 = vmax.f32 %v430, 0.0
    %v463 = vmax.f32 %v433, 0.0
    %v464 = vmax.f32 %v438, 0.0
    %v465 = vmax.f32 %v441, 0.0
    %v466 = vmax.f32 %v446, 0.0
    %v467 = vmax.f32 %v449, 0.0
    %v468 = vpack.c.bf16 %v453, %v452
    %v469 = vpack.c.bf16 %v455, %v454
    %v470 = vpack.c.bf16 %v457, %v456
    %v471 = vpack.c.bf16 %v459, %v458
    %v472 = vpack.c.bf16 %v461, %v460
    %v473 = vpack.c.bf16 %v463, %v462
    %v474 = vpack.c.bf16 %v465, %v464
    %v475 = vpack.c.bf16 %v467, %v466
    %v476 = vld [vmem:[#allocation3] sm:$0xff]
    %v477 = vld [vmem:[#allocation3 + $0x8] sm:$0xff]
    %v478 = vld [vmem:[#allocation3 + $0x10] sm:$0xff]
    %v479 = vld [vmem:[#allocation3 + $0x18] sm:$0xff]
    %v480 = vld [vmem:[#allocation3 + $0x20] sm:$0xff]
    %v481 = vld [vmem:[#allocation3 + $0x28] sm:$0xff]
    %v482 = vld [vmem:[#allocation3 + $0x30] sm:$0xff]
    %v483 = vld [vmem:[#allocation3 + $0x38] sm:$0xff]
    %v484 = vld [vmem:[#allocation3 + $0x40] sm:$0xff]
    %v485 = vld [vmem:[#allocation3 + $0x48] sm:$0xff]
    %v486 = vld [vmem:[#allocation3 + $0x50] sm:$0xff]
    %v487 = vld [vmem:[#allocation3 + $0x58] sm:$0xff]
    %v488 = vld [vmem:[#allocation3 + $0x60] sm:$0xff]
    %v489 = vld [vmem:[#allocation3 + $0x68] sm:$0xff]
    %v490 = vld [vmem:[#allocation3 + $0x70] sm:$0xff]
    %v491 = vld [vmem:[#allocation3 + $0x78] sm:$0xff]
    %v492 = vld [vmem:[#allocation3 + $0x80] sm:$0xff]
    %v493 = vld [vmem:[#allocation3 + $0x88] sm:$0xff]
    %v494 = vld [vmem:[#allocation3 + $0x90] sm:$0xff]
    %v495 = vld [vmem:[#allocation3 + $0x98] sm:$0xff]
    %v496 = vld [vmem:[#allocation3 + $0xa0] sm:$0xff]
    %v497 = vld [vmem:[#allocation3 + $0xa8] sm:$0xff]
    %v498 = vld [vmem:[#allocation3 + $0xb0] sm:$0xff]
    %v499 = vld [vmem:[#allocation3 + $0xb8] sm:$0xff]
    %v500 = vld [vmem:[#allocation3 + $0xc0] sm:$0xff]
    %v501 = vld [vmem:[#allocation3 + $0xc8] sm:$0xff]
    %v502 = vld [vmem:[#allocation3 + $0xd0] sm:$0xff]
    %v503 = vld [vmem:[#allocation3 + $0xd8] sm:$0xff]
    %v504 = vld [vmem:[#allocation3 + $0xe0] sm:$0xff]
    %v505 = vld [vmem:[#allocation3 + $0xe8] sm:$0xff]
    %v506 = vld [vmem:[#allocation3 + $0xf0] sm:$0xff]
    %v507 = vld [vmem:[#allocation3 + $0xf8] sm:$0xff]
    %v508 = vld [vmem:[#allocation3 + $0x100] sm:$0xff]
    %v509 = vld [vmem:[#allocation3 + $0x108] sm:$0xff]
    %v510 = vld [vmem:[#allocation3 + $0x110] sm:$0xff]
    %v511 = vld [vmem:[#allocation3 + $0x118] sm:$0xff]
    %v512 = vld [vmem:[#allocation3 + $0x120] sm:$0xff]
    %v513 = vld [vmem:[#allocation3 + $0x128] sm:$0xff]
    %v514 = vld [vmem:[#allocation3 + $0x130] sm:$0xff]
    %v515 = vld [vmem:[#allocation3 + $0x138] sm:$0xff]
    %v516 = vld [vmem:[#allocation3 + $0x140] sm:$0xff]
    %v517 = vld [vmem:[#allocation3 + $0x148] sm:$0xff]
    %v518 = vld [vmem:[#allocation3 + $0x150] sm:$0xff]
    %v519 = vld [vmem:[#allocation3 + $0x158] sm:$0xff]
    %v520 = vld [vmem:[#allocation3 + $0x160] sm:$0xff]
    %v521 = vld [vmem:[#allocation3 + $0x168] sm:$0xff]
    %v522 = vld [vmem:[#allocation3 + $0x170] sm:$0xff]
    %v523 = vld [vmem:[#allocation3 + $0x178] sm:$0xff]
    %v524 = vld [vmem:[#allocation3 + $0x180] sm:$0xff]
    %v525 = vld [vmem:[#allocation3 + $0x188] sm:$0xff]
    %v526 = vld [vmem:[#allocation3 + $0x190] sm:$0xff]
    %v527 = vld [vmem:[#allocation3 + $0x198] sm:$0xff]
    %v528 = vld [vmem:[#allocation3 + $0x1a0] sm:$0xff]
    %v529 = vld [vmem:[#allocation3 + $0x1a8] sm:$0xff]
    %v530 = vld [vmem:[#allocation3 + $0x1b0] sm:$0xff]
    %v531 = vld [vmem:[#allocation3 + $0x1b8] sm:$0xff]
    %v532 = vld [vmem:[#allocation3 + $0x1c0] sm:$0xff]
    %v533 = vld [vmem:[#allocation3 + $0x1c8] sm:$0xff]
    %v534 = vld [vmem:[#allocation3 + $0x1d0] sm:$0xff]
    %v535 = vld [vmem:[#allocation3 + $0x1d8] sm:$0xff]
    %v536 = vld [vmem:[#allocation3 + $0x1e0] sm:$0xff]
    %v537 = vld [vmem:[#allocation3 + $0x1e8] sm:$0xff]
    %v538 = vld [vmem:[#allocation3 + $0x1f0] sm:$0xff]
    %v539 = vld [vmem:[#allocation3 + $0x1f8] sm:$0xff]
    %v540 = vld [vmem:[%s7] sm:$0xff]
    %v542 = vlaneseq
    %v543 = vshrl.u32 %v542, 7
    %v544 = vsub.s32 0, %v543
    %v545 = vrot.slane %v540, %v544
    %v546 = vlaneseq
    %v547 = vshrl.u32 %v546, 7
    %v548 = vsub.s32 1, %v547
    %v549 = vrot.slane %v540, %v548
    %v550 = vlaneseq
    %v551 = vshrl.u32 %v550, 7
    %v552 = vsub.s32 2, %v551
    %v553 = vrot.slane %v540, %v552
    %v554 = vlaneseq
    %v555 = vshrl.u32 %v554, 7
    %v556 = vsub.s32 3, %v555
    %v557 = vrot.slane %v540, %v556
    %v558 = vlaneseq
    %v559 = vshrl.u32 %v558, 7
    %v560 = vsub.s32 4, %v559
    %v561 = vrot.slane %v540, %v560
    %v562 = vlaneseq
    %v563 = vshrl.u32 %v562, 7
    %v564 = vsub.s32 5, %v563
    %v565 = vrot.slane %v540, %v564
    %v566 = vlaneseq
    %v567 = vshrl.u32 %v566, 7
    %v568 = vsub.s32 6, %v567
    %v569 = vrot.slane %v540, %v568
    %v570 = vlaneseq
    %v571 = vshrl.u32 %v570, 7
    %v572 = vsub.s32 7, %v571
    %v573 = vrot.slane %v540, %v572
    %v646 = vunpack.c.l.b16 %v476
    %v647 = vunpack.c.h.b16 %v476
    %v648 = vunpack.c.l.b16 %v477
    %v649 = vunpack.c.h.b16 %v477
    %v650 = vunpack.c.l.b16 %v478
    %v651 = vunpack.c.h.b16 %v478
    %v652 = vunpack.c.l.b16 %v479
    %v653 = vunpack.c.h.b16 %v479
    %v654 = vunpack.c.l.b16 %v480
    %v655 = vunpack.c.h.b16 %v480
    %v656 = vunpack.c.l.b16 %v481
    %v657 = vunpack.c.h.b16 %v481
    %v658 = vunpack.c.l.b16 %v482
    %v659 = vunpack.c.h.b16 %v482
    %v660 = vunpack.c.l.b16 %v483
    %v661 = vunpack.c.h.b16 %v483
    %v662 = vunpack.c.l.b16 %v484
    %v663 = vunpack.c.h.b16 %v484
    %v664 = vunpack.c.l.b16 %v485
    %v665 = vunpack.c.h.b16 %v485
    %v666 = vunpack.c.l.b16 %v486
    %v667 = vunpack.c.h.b16 %v486
    %v668 = vunpack.c.l.b16 %v487
    %v669 = vunpack.c.h.b16 %v487
    %v670 = vunpack.c.l.b16 %v488
    %v671 = vunpack.c.h.b16 %v488
    %v672 = vunpack.c.l.b16 %v489
    %v673 = vunpack.c.h.b16 %v489
    %v674 = vunpack.c.l.b16 %v490
    %v675 = vunpack.c.h.b16 %v490
    %v676 = vunpack.c.l.b16 %v491
    %v677 = vunpack.c.h.b16 %v491
    %v678 = vunpack.c.l.b16 %v492
    %v679 = vunpack.c.h.b16 %v492
    %v680 = vunpack.c.l.b16 %v493
    %v681 = vunpack.c.h.b16 %v493
    %v682 = vunpack.c.l.b16 %v494
    %v683 = vunpack.c.h.b16 %v494
    %v684 = vunpack.c.l.b16 %v495
    %v685 = vunpack.c.h.b16 %v495
    %v686 = vunpack.c.l.b16 %v496
    %v687 = vunpack.c.h.b16 %v496
    %v688 = vunpack.c.l.b16 %v497
    %v689 = vunpack.c.h.b16 %v497
    %v690 = vunpack.c.l.b16 %v498
    %v691 = vunpack.c.h.b16 %v498
    %v692 = vunpack.c.l.b16 %v499
    %v693 = vunpack.c.h.b16 %v499
    %v694 = vunpack.c.l.b16 %v500
    %v695 = vunpack.c.h.b16 %v500
    %v696 = vunpack.c.l.b16 %v501
    %v697 = vunpack.c.h.b16 %v501
    %v698 = vunpack.c.l.b16 %v502
    %v699 = vunpack.c.h.b16 %v502
    %v700 = vunpack.c.l.b16 %v503
    %v701 = vunpack.c.h.b16 %v503
    %v702 = vunpack.c.l.b16 %v504
    %v703 = vunpack.c.h.b16 %v504
    %v704 = vunpack.c.l.b16 %v505
    %v705 = vunpack.c.h.b16 %v505
    %v706 = vunpack.c.l.b16 %v506
    %v707 = vunpack.c.h.b16 %v506
    %v708 = vunpack.c.l.b16 %v507
    %v709 = vunpack.c.h.b16 %v507
    %v710 = vunpack.c.l.b16 %v508
    %v711 = vunpack.c.h.b16 %v508
    %v712 = vunpack.c.l.b16 %v509
    %v713 = vunpack.c.h.b16 %v509
    %v714 = vunpack.c.l.b16 %v510
    %v715 = vunpack.c.h.b16 %v510
    %v716 = vunpack.c.l.b16 %v511
    %v717 = vunpack.c.h.b16 %v511
    %v718 = vunpack.c.l.b16 %v512
    %v719 = vunpack.c.h.b16 %v512
    %v720 = vunpack.c.l.b16 %v513
    %v721 = vunpack.c.h.b16 %v513
    %v722 = vunpack.c.l.b16 %v514
    %v723 = vunpack.c.h.b16 %v514
    %v724 = vunpack.c.l.b16 %v515
    %v725 = vunpack.c.h.b16 %v515
    %v726 = vunpack.c.l.b16 %v516
    %v727 = vunpack.c.h.b16 %v516
    %v728 = vunpack.c.l.b16 %v517
    %v729 = vunpack.c.h.b16 %v517
    %v730 = vunpack.c.l.b16 %v518
    %v731 = vunpack.c.h.b16 %v518
    %v732 = vunpack.c.l.b16 %v519
    %v733 = vunpack.c.h.b16 %v519
    %v734 = vunpack.c.l.b16 %v520
    %v735 = vunpack.c.h.b16 %v520
    %v736 = vunpack.c.l.b16 %v521
    %v737 = vunpack.c.h.b16 %v521
    %v738 = vunpack.c.l.b16 %v522
    %v739 = vunpack.c.h.b16 %v522
    %v740 = vunpack.c.l.b16 %v523
    %v741 = vunpack.c.h.b16 %v523
    %v742 = vunpack.c.l.b16 %v524
    %v743 = vunpack.c.h.b16 %v524
    %v744 = vunpack.c.l.b16 %v525
    %v745 = vunpack.c.h.b16 %v525
    %v746 = vunpack.c.l.b16 %v526
    %v747 = vunpack.c.h.b16 %v526
    %v748 = vunpack.c.l.b16 %v527
    %v749 = vunpack.c.h.b16 %v527
    %v750 = vunpack.c.l.b16 %v528
    %v751 = vunpack.c.h.b16 %v528
    %v752 = vunpack.c.l.b16 %v529
    %v753 = vunpack.c.h.b16 %v529
    %v754 = vunpack.c.l.b16 %v530
    %v755 = vunpack.c.h.b16 %v530
    %v756 = vunpack.c.l.b16 %v531
    %v757 = vunpack.c.h.b16 %v531
    %v758 = vunpack.c.l.b16 %v532
    %v759 = vunpack.c.h.b16 %v532
    %v760 = vunpack.c.l.b16 %v533
    %v761 = vunpack.c.h.b16 %v533
    %v762 = vunpack.c.l.b16 %v534
    %v763 = vunpack.c.h.b16 %v534
    %v764 = vunpack.c.l.b16 %v535
    %v765 = vunpack.c.h.b16 %v535
    %v766 = vunpack.c.l.b16 %v536
    %v767 = vunpack.c.h.b16 %v536
    %v768 = vunpack.c.l.b16 %v537
    %v769 = vunpack.c.h.b16 %v537
    %v770 = vunpack.c.l.b16 %v538
    %v771 = vunpack.c.h.b16 %v538
    %v772 = vunpack.c.l.b16 %v539
    %v773 = vunpack.c.h.b16 %v539
    %v774 = vpack.c.b16 %v654, %v646
    %v775 = vpack.c.b16 %v655, %v647
    %v776 = vpack.c.b16 %v656, %v648
    %v777 = vpack.c.b16 %v657, %v649
    %v778 = vpack.c.b16 %v658, %v650
    %v779 = vpack.c.b16 %v659, %v651
    %v780 = vpack.c.b16 %v660, %v652
    %v781 = vpack.c.b16 %v661, %v653
    %v782 = vpack.c.b16 %v670, %v662
    %v783 = vpack.c.b16 %v671, %v663
    %v784 = vpack.c.b16 %v672, %v664
    %v785 = vpack.c.b16 %v673, %v665
    %v786 = vpack.c.b16 %v674, %v666
    %v787 = vpack.c.b16 %v675, %v667
    %v788 = vpack.c.b16 %v676, %v668
    %v789 = vpack.c.b16 %v677, %v669
    %v790 = vpack.c.b16 %v686, %v678
    %v791 = vpack.c.b16 %v687, %v679
    %v792 = vpack.c.b16 %v688, %v680
    %v793 = vpack.c.b16 %v689, %v681
    %v794 = vpack.c.b16 %v690, %v682
    %v795 = vpack.c.b16 %v691, %v683
    %v796 = vpack.c.b16 %v692, %v684
    %v797 = vpack.c.b16 %v693, %v685
    %v798 = vpack.c.b16 %v702, %v694
    %v799 = vpack.c.b16 %v703, %v695
    %v800 = vpack.c.b16 %v704, %v696
    %v801 = vpack.c.b16 %v705, %v697
    %v802 = vpack.c.b16 %v706, %v698
    %v803 = vpack.c.b16 %v707, %v699
    %v804 = vpack.c.b16 %v708, %v700
    %v805 = vpack.c.b16 %v709, %v701
    %v806 = vpack.c.b16 %v718, %v710
    %v807 = vpack.c.b16 %v719, %v711
    %v808 = vpack.c.b16 %v720, %v712
    %v809 = vpack.c.b16 %v721, %v713
    %v810 = vpack.c.b16 %v722, %v714
    %v811 = vpack.c.b16 %v723, %v715
    %v812 = vpack.c.b16 %v724, %v716
    %v813 = vpack.c.b16 %v725, %v717
    %v814 = vpack.c.b16 %v734, %v726
    %v815 = vpack.c.b16 %v735, %v727
    %v816 = vpack.c.b16 %v736, %v728
    %v817 = vpack.c.b16 %v737, %v729
    %v818 = vpack.c.b16 %v738, %v730
    %v819 = vpack.c.b16 %v739, %v731
    %v820 = vpack.c.b16 %v740, %v732
    %v821 = vpack.c.b16 %v741, %v733
    %v822 = vpack.c.b16 %v750, %v742
    %v823 = vpack.c.b16 %v751, %v743
    %v824 = vpack.c.b16 %v752, %v744
    %v825 = vpack.c.b16 %v753, %v745
    %v826 = vpack.c.b16 %v754, %v746
    %v827 = vpack.c.b16 %v755, %v747
    %v828 = vpack.c.b16 %v756, %v748
    %v829 = vpack.c.b16 %v757, %v749
    %v830 = vpack.c.b16 %v766, %v758
    %v831 = vpack.c.b16 %v767, %v759
    %v832 = vpack.c.b16 %v768, %v760
    %v833 = vpack.c.b16 %v769, %v761
    %v834 = vpack.c.b16 %v770, %v762
    %v835 = vpack.c.b16 %v771, %v763
    %v836 = vpack.c.b16 %v772, %v764
    %v837 = vpack.c.b16 %v773, %v765
    %902 = vmatprep.subr.bf16.mxu0 %v831
    %903 = vmatpush1.bf16.msra.mxu0 %v830
    %904 = vmatprep.subr.bf16.mxu0 %v823
    %905 = vmatpush1.bf16.msra.mxu0 %v822
    %906 = vmatprep.subr.bf16.mxu0 %v815
    %907 = vmatpush1.bf16.msra.mxu0 %v814
    %908 = vmatprep.subr.bf16.mxu0 %v807
    %909 = vmatpush1.bf16.msra.mxu0 %v806
    %910 = vmatprep.subr.bf16.mxu0 %v799
    %911 = vmatpush1.bf16.msra.mxu0 %v798
    %912 = vmatprep.subr.bf16.mxu0 %v791
    %913 = vmatpush1.bf16.msra.mxu0 %v790
    %914 = vmatprep.subr.bf16.mxu0 %v783
    %915 = vmatpush1.bf16.msra.mxu0 %v782
    %916 = vmatprep.subr.bf16.mxu0 %v775
    %917 = vmatpush1.bf16.msra.mxu0 %v774
    %918 = vmatprep.subr.bf16.mxu0 0
    %919 = vmatpush2.bf16.msra.mxu0 0
    %920 = vmatprep.subr.bf16.mxu0 0
    %921 = vmatpush2.bf16.msra.mxu0 0
    %922 = vmatprep.subr.bf16.mxu0 0
    %923 = vmatpush2.bf16.msra.mxu0 0
    %924 = vmatprep.subr.bf16.mxu0 0
    %925 = vmatpush2.bf16.msra.mxu0 0
    %926 = vmatprep.subr.bf16.mxu0 0
    %927 = vmatpush2.bf16.msra.mxu0 0
    %928 = vmatprep.subr.bf16.mxu0 0
    %929 = vmatpush2.bf16.msra.mxu0 0
    %930 = vmatprep.subr.bf16.mxu0 0
    %931 = vmatpush2.bf16.msra.mxu0 0
    %932 = vmatprep.subr.bf16.mxu0 0
    %933 = vmatpush2.bf16.msra.mxu0 0
    %934 = vmatprep.mubr.bf16.mxu0 0
    %935 = vmatmul.mubr.bf16.gmra.mxu0 %v468
    %v936 = vpop.f32.mrf.mxu0
    %v937 = vadd.f32 %v545, %v936
    %v938 = vpop.f32.mrf.mxu0
    %v939 = vadd.f32 %v549, %v938
    %v940 = vpop.f32.mrf.mxu0
    %v941 = vadd.f32 %v545, %v940
    %v942 = vpop.f32.mrf.mxu0
    %v943 = vadd.f32 %v549, %v942
    %944 = vmatprep.mubr.bf16.mxu0 0
    %945 = vmatmul.mubr.bf16.gmra.mxu0 %v469
    %v946 = vpop.f32.mrf.mxu0
    %v947 = vadd.f32 %v545, %v946
    %v948 = vpop.f32.mrf.mxu0
    %v949 = vadd.f32 %v549, %v948
    %v950 = vpop.f32.mrf.mxu0
    %v951 = vadd.f32 %v545, %v950
    %v952 = vpop.f32.mrf.mxu0
    %v953 = vadd.f32 %v549, %v952
    %954 = vmatprep.mubr.bf16.mxu0 0
    %955 = vmatmul.mubr.bf16.gmra.mxu0 %v470
    %v956 = vpop.f32.mrf.mxu0
    %v957 = vadd.f32 %v545, %v956
    %v958 = vpop.f32.mrf.mxu0
    %v959 = vadd.f32 %v549, %v958
    %v960 = vpop.f32.mrf.mxu0
    %v961 = vadd.f32 %v545, %v960
    %v962 = vpop.f32.mrf.mxu0
    %v963 = vadd.f32 %v549, %v962
    %964 = vmatprep.mubr.bf16.mxu0 0
    %965 = vmatmul.mubr.bf16.gmra.mxu0 %v471
    %v966 = vpop.f32.mrf.mxu0
    %v967 = vadd.f32 %v545, %v966
    %v968 = vpop.f32.mrf.mxu0
    %v969 = vadd.f32 %v549, %v968
    %v970 = vpop.f32.mrf.mxu0
    %v971 = vadd.f32 %v545, %v970
    %v972 = vpop.f32.mrf.mxu0
    %v973 = vadd.f32 %v549, %v972
    %974 = vmatprep.mubr.bf16.mxu0 0
    %975 = vmatmul.mubr.bf16.gmra.mxu0 %v472
    %v976 = vpop.f32.mrf.mxu0
    %v977 = vadd.f32 %v545, %v976
    %v978 = vpop.f32.mrf.mxu0
    %v979 = vadd.f32 %v549, %v978
    %v980 = vpop.f32.mrf.mxu0
    %v981 = vadd.f32 %v545, %v980
    %v982 = vpop.f32.mrf.mxu0
    %v983 = vadd.f32 %v549, %v982
    %984 = vmatprep.mubr.bf16.mxu0 0
    %985 = vmatmul.mubr.bf16.gmra.mxu0 %v473
    %v986 = vpop.f32.mrf.mxu0
    %v987 = vadd.f32 %v545, %v986
    %v988 = vpop.f32.mrf.mxu0
    %v989 = vadd.f32 %v549, %v988
    %v990 = vpop.f32.mrf.mxu0
    %v991 = vadd.f32 %v545, %v990
    %v992 = vpop.f32.mrf.mxu0
    %v993 = vadd.f32 %v549, %v992
    %994 = vmatprep.mubr.bf16.mxu0 0
    %995 = vmatmul.mubr.bf16.gmra.mxu0 %v474
    %v996 = vpop.f32.mrf.mxu0
    %v997 = vadd.f32 %v545, %v996
    %v998 = vpop.f32.mrf.mxu0
    %v999 = vadd.f32 %v549, %v998
    %v1000 = vpop.f32.mrf.mxu0
    %v1001 = vadd.f32 %v545, %v1000
    %v1002 = vpop.f32.mrf.mxu0
    %v1003 = vadd.f32 %v549, %v1002
    %1004 = vmatprep.mubr.bf16.mxu0 0
    %1005 = vmatmul.mubr.bf16.gmra.mxu0 %v475
    %v1006 = vpop.f32.mrf.mxu0
    %v1007 = vadd.f32 %v545, %v1006
    %v1008 = vpop.f32.mrf.mxu0
    %v1009 = vadd.f32 %v549, %v1008
    %v1010 = vpop.f32.mrf.mxu0
    %v1011 = vadd.f32 %v545, %v1010
    %v1012 = vpop.f32.mrf.mxu0
    %v1013 = vadd.f32 %v549, %v1012
    %1014 = vdwg.mxu0
    %1015 = vmatprep.subr.bf16.mxu0 %v833
    %1016 = vmatpush1.bf16.msra.mxu0 %v832
    %1017 = vmatprep.subr.bf16.mxu0 %v825
    %1018 = vmatpush1.bf16.msra.mxu0 %v824
    %1019 = vmatprep.subr.bf16.mxu0 %v817
    %1020 = vmatpush1.bf16.msra.mxu0 %v816
    %1021 = vmatprep.subr.bf16.mxu0 %v809
    %1022 = vmatpush1.bf16.msra.mxu0 %v808
    %1023 = vmatprep.subr.bf16.mxu0 %v801
    %1024 = vmatpush1.bf16.msra.mxu0 %v800
    %1025 = vmatprep.subr.bf16.mxu0 %v793
    %1026 = vmatpush1.bf16.msra.mxu0 %v792
    %1027 = vmatprep.subr.bf16.mxu0 %v785
    %1028 = vmatpush1.bf16.msra.mxu0 %v784
    %1029 = vmatprep.subr.bf16.mxu0 %v777
    %1030 = vmatpush1.bf16.msra.mxu0 %v776
    %1031 = vmatprep.subr.bf16.mxu0 0
    %1032 = vmatpush2.bf16.msra.mxu0 0
    %1033 = vmatprep.subr.bf16.mxu0 0
    %1034 = vmatpush2.bf16.msra.mxu0 0
    %1035 = vmatprep.subr.bf16.mxu0 0
    %1036 = vmatpush2.bf16.msra.mxu0 0
    %1037 = vmatprep.subr.bf16.mxu0 0
    %1038 = vmatpush2.bf16.msra.mxu0 0
    %1039 = vmatprep.subr.bf16.mxu0 0
    %1040 = vmatpush2.bf16.msra.mxu0 0
    %1041 = vmatprep.subr.bf16.mxu0 0
    %1042 = vmatpush2.bf16.msra.mxu0 0
    %1043 = vmatprep.subr.bf16.mxu0 0
    %1044 = vmatpush2.bf16.msra.mxu0 0
    %1045 = vmatprep.subr.bf16.mxu0 0
    %1046 = vmatpush2.bf16.msra.mxu0 0
    %1047 = vmatprep.mubr.bf16.mxu0 0
    %1048 = vmatmul.mubr.bf16.gmra.mxu0 %v468
    %v1049 = vpop.f32.mrf.mxu0
    %v1050 = vadd.f32 %v553, %v1049
    %v1051 = vpop.f32.mrf.mxu0
    %v1052 = vadd.f32 %v557, %v1051
    %v1053 = vpop.f32.mrf.mxu0
    %v1054 = vadd.f32 %v553, %v1053
    %v1055 = vpop.f32.mrf.mxu0
    %v1056 = vadd.f32 %v557, %v1055
    %1057 = vmatprep.mubr.bf16.mxu0 0
    %1058 = vmatmul.mubr.bf16.gmra.mxu0 %v469
    %v1059 = vpop.f32.mrf.mxu0
    %v1060 = vadd.f32 %v553, %v1059
    %v1061 = vpop.f32.mrf.mxu0
    %v1062 = vadd.f32 %v557, %v1061
    %v1063 = vpop.f32.mrf.mxu0
    %v1064 = vadd.f32 %v553, %v1063
    %v1065 = vpop.f32.mrf.mxu0
    %v1066 = vadd.f32 %v557, %v1065
    %1067 = vmatprep.mubr.bf16.mxu0 0
    %1068 = vmatmul.mubr.bf16.gmra.mxu0 %v470
    %v1069 = vpop.f32.mrf.mxu0
    %v1070 = vadd.f32 %v553, %v1069
    %v1071 = vpop.f32.mrf.mxu0
    %v1072 = vadd.f32 %v557, %v1071
    %v1073 = vpop.f32.mrf.mxu0
    %v1074 = vadd.f32 %v553, %v1073
    %v1075 = vpop.f32.mrf.mxu0
    %v1076 = vadd.f32 %v557, %v1075
    %1077 = vmatprep.mubr.bf16.mxu0 0
    %1078 = vmatmul.mubr.bf16.gmra.mxu0 %v471
    %v1079 = vpop.f32.mrf.mxu0
    %v1080 = vadd.f32 %v553, %v1079
    %v1081 = vpop.f32.mrf.mxu0
    %v1082 = vadd.f32 %v557, %v1081
    %v1083 = vpop.f32.mrf.mxu0
    %v1084 = vadd.f32 %v553, %v1083
    %v1085 = vpop.f32.mrf.mxu0
    %v1086 = vadd.f32 %v557, %v1085
    %1087 = vmatprep.mubr.bf16.mxu0 0
    %1088 = vmatmul.mubr.bf16.gmra.mxu0 %v472
    %v1089 = vpop.f32.mrf.mxu0
    %v1090 = vadd.f32 %v553, %v1089
    %v1091 = vpop.f32.mrf.mxu0
    %v1092 = vadd.f32 %v557, %v1091
    %v1093 = vpop.f32.mrf.mxu0
    %v1094 = vadd.f32 %v553, %v1093
    %v1095 = vpop.f32.mrf.mxu0
    %v1096 = vadd.f32 %v557, %v1095
    %1097 = vmatprep.mubr.bf16.mxu0 0
    %1098 = vmatmul.mubr.bf16.gmra.mxu0 %v473
    %v1099 = vpop.f32.mrf.mxu0
    %v1100 = vadd.f32 %v553, %v1099
    %v1101 = vpop.f32.mrf.mxu0
    %v1102 = vadd.f32 %v557, %v1101
    %v1103 = vpop.f32.mrf.mxu0
    %v1104 = vadd.f32 %v553, %v1103
    %v1105 = vpop.f32.mrf.mxu0
    %v1106 = vadd.f32 %v557, %v1105
    %1107 = vmatprep.mubr.bf16.mxu0 0
    %1108 = vmatmul.mubr.bf16.gmra.mxu0 %v474
    %v1109 = vpop.f32.mrf.mxu0
    %v1110 = vadd.f32 %v553, %v1109
    %v1111 = vpop.f32.mrf.mxu0
    %v1112 = vadd.f32 %v557, %v1111
    %v1113 = vpop.f32.mrf.mxu0
    %v1114 = vadd.f32 %v553, %v1113
    %v1115 = vpop.f32.mrf.mxu0
    %v1116 = vadd.f32 %v557, %v1115
    %1117 = vmatprep.mubr.bf16.mxu0 0
    %1118 = vmatmul.mubr.bf16.gmra.mxu0 %v475
    %v1119 = vpop.f32.mrf.mxu0
    %v1120 = vadd.f32 %v553, %v1119
    %v1121 = vpop.f32.mrf.mxu0
    %v1122 = vadd.f32 %v557, %v1121
    %v1123 = vpop.f32.mrf.mxu0
    %v1124 = vadd.f32 %v553, %v1123
    %v1125 = vpop.f32.mrf.mxu0
    %v1126 = vadd.f32 %v557, %v1125
    %1127 = vdwg.mxu0
    %1128 = vmatprep.subr.bf16.mxu0 %v835
    %1129 = vmatpush1.bf16.msra.mxu0 %v834
    %1130 = vmatprep.subr.bf16.mxu0 %v827
    %1131 = vmatpush1.bf16.msra.mxu0 %v826
    %1132 = vmatprep.subr.bf16.mxu0 %v819
    %1133 = vmatpush1.bf16.msra.mxu0 %v818
    %1134 = vmatprep.subr.bf16.mxu0 %v811
    %1135 = vmatpush1.bf16.msra.mxu0 %v810
    %1136 = vmatprep.subr.bf16.mxu0 %v803
    %1137 = vmatpush1.bf16.msra.mxu0 %v802
    %1138 = vmatprep.subr.bf16.mxu0 %v795
    %1139 = vmatpush1.bf16.msra.mxu0 %v794
    %1140 = vmatprep.subr.bf16.mxu0 %v787
    %1141 = vmatpush1.bf16.msra.mxu0 %v786
    %1142 = vmatprep.subr.bf16.mxu0 %v779
    %1143 = vmatpush1.bf16.msra.mxu0 %v778
    %1144 = vmatprep.subr.bf16.mxu0 0
    %1145 = vmatpush2.bf16.msra.mxu0 0
    %1146 = vmatprep.subr.bf16.mxu0 0
    %1147 = vmatpush2.bf16.msra.mxu0 0
    %1148 = vmatprep.subr.bf16.mxu0 0
    %1149 = vmatpush2.bf16.msra.mxu0 0
    %1150 = vmatprep.subr.bf16.mxu0 0
    %1151 = vmatpush2.bf16.msra.mxu0 0
    %1152 = vmatprep.subr.bf16.mxu0 0
    %1153 = vmatpush2.bf16.msra.mxu0 0
    %1154 = vmatprep.subr.bf16.mxu0 0
    %1155 = vmatpush2.bf16.msra.mxu0 0
    %1156 = vmatprep.subr.bf16.mxu0 0
    %1157 = vmatpush2.bf16.msra.mxu0 0
    %1158 = vmatprep.subr.bf16.mxu0 0
    %1159 = vmatpush2.bf16.msra.mxu0 0
    %1160 = vmatprep.mubr.bf16.mxu0 0
    %1161 = vmatmul.mubr.bf16.gmra.mxu0 %v468
    %v1162 = vpop.f32.mrf.mxu0
    %v1163 = vadd.f32 %v561, %v1162
    %v1164 = vpop.f32.mrf.mxu0
    %v1165 = vadd.f32 %v565, %v1164
    %v1166 = vpop.f32.mrf.mxu0
    %v1167 = vadd.f32 %v561, %v1166
    %v1168 = vpop.f32.mrf.mxu0
    %v1169 = vadd.f32 %v565, %v1168
    %1170 = vmatprep.mubr.bf16.mxu0 0
    %1171 = vmatmul.mubr.bf16.gmra.mxu0 %v469
    %v1172 = vpop.f32.mrf.mxu0
    %v1173 = vadd.f32 %v561, %v1172
    %v1174 = vpop.f32.mrf.mxu0
    %v1175 = vadd.f32 %v565, %v1174
    %v1176 = vpop.f32.mrf.mxu0
    %v1177 = vadd.f32 %v561, %v1176
    %v1178 = vpop.f32.mrf.mxu0
    %v1179 = vadd.f32 %v565, %v1178
    %1180 = vmatprep.mubr.bf16.mxu0 0
    %1181 = vmatmul.mubr.bf16.gmra.mxu0 %v470
    %v1182 = vpop.f32.mrf.mxu0
    %v1183 = vadd.f32 %v561, %v1182
    %v1184 = vpop.f32.mrf.mxu0
    %v1185 = vadd.f32 %v565, %v1184
    %v1186 = vpop.f32.mrf.mxu0
    %v1187 = vadd.f32 %v561, %v1186
    %v1188 = vpop.f32.mrf.mxu0
    %v1189 = vadd.f32 %v565, %v1188
    %1190 = vmatprep.mubr.bf16.mxu0 0
    %1191 = vmatmul.mubr.bf16.gmra.mxu0 %v471
    %v1192 = vpop.f32.mrf.mxu0
    %v1193 = vadd.f32 %v561, %v1192
    %v1194 = vpop.f32.mrf.mxu0
    %v1195 = vadd.f32 %v565, %v1194
    %v1196 = vpop.f32.mrf.mxu0
    %v1197 = vadd.f32 %v561, %v1196
    %v1198 = vpop.f32.mrf.mxu0
    %v1199 = vadd.f32 %v565, %v1198
    %1200 = vmatprep.mubr.bf16.mxu0 0
    %1201 = vmatmul.mubr.bf16.gmra.mxu0 %v472
    %v1202 = vpop.f32.mrf.mxu0
    %v1203 = vadd.f32 %v561, %v1202
    %v1204 = vpop.f32.mrf.mxu0
    %v1205 = vadd.f32 %v565, %v1204
    %v1206 = vpop.f32.mrf.mxu0
    %v1207 = vadd.f32 %v561, %v1206
    %v1208 = vpop.f32.mrf.mxu0
    %v1209 = vadd.f32 %v565, %v1208
    %1210 = vmatprep.mubr.bf16.mxu0 0
    %1211 = vmatmul.mubr.bf16.gmra.mxu0 %v473
    %v1212 = vpop.f32.mrf.mxu0
    %v1213 = vadd.f32 %v561, %v1212
    %v1214 = vpop.f32.mrf.mxu0
    %v1215 = vadd.f32 %v565, %v1214
    %v1216 = vpop.f32.mrf.mxu0
    %v1217 = vadd.f32 %v561, %v1216
    %v1218 = vpop.f32.mrf.mxu0
    %v1219 = vadd.f32 %v565, %v1218
    %1220 = vmatprep.mubr.bf16.mxu0 0
    %1221 = vmatmul.mubr.bf16.gmra.mxu0 %v474
    %v1222 = vpop.f32.mrf.mxu0
    %v1223 = vadd.f32 %v561, %v1222
    %v1224 = vpop.f32.mrf.mxu0
    %v1225 = vadd.f32 %v565, %v1224
    %v1226 = vpop.f32.mrf.mxu0
    %v1227 = vadd.f32 %v561, %v1226
    %v1228 = vpop.f32.mrf.mxu0
    %v1229 = vadd.f32 %v565, %v1228
    %1230 = vmatprep.mubr.bf16.mxu0 0
    %1231 = vmatmul.mubr.bf16.gmra.mxu0 %v475
    %v1232 = vpop.f32.mrf.mxu0
    %v1233 = vadd.f32 %v561, %v1232
    %v1234 = vpop.f32.mrf.mxu0
    %v1235 = vadd.f32 %v565, %v1234
    %v1236 = vpop.f32.mrf.mxu0
    %v1237 = vadd.f32 %v561, %v1236
    %v1238 = vpop.f32.mrf.mxu0
    %v1239 = vadd.f32 %v565, %v1238
    %1240 = vdwg.mxu0
    %1241 = vmatprep.subr.bf16.mxu0 %v837
    %1242 = vmatpush1.bf16.msra.mxu0 %v836
    %1243 = vmatprep.subr.bf16.mxu0 %v829
    %1244 = vmatpush1.bf16.msra.mxu0 %v828
    %1245 = vmatprep.subr.bf16.mxu0 %v821
    %1246 = vmatpush1.bf16.msra.mxu0 %v820
    %1247 = vmatprep.subr.bf16.mxu0 %v813
    %1248 = vmatpush1.bf16.msra.mxu0 %v812
    %1249 = vmatprep.subr.bf16.mxu0 %v805
    %1250 = vmatpush1.bf16.msra.mxu0 %v804
    %1251 = vmatprep.subr.bf16.mxu0 %v797
    %1252 = vmatpush1.bf16.msra.mxu0 %v796
    %1253 = vmatprep.subr.bf16.mxu0 %v789
    %1254 = vmatpush1.bf16.msra.mxu0 %v788
    %1255 = vmatprep.subr.bf16.mxu0 %v781
    %1256 = vmatpush1.bf16.msra.mxu0 %v780
    %1257 = vmatprep.subr.bf16.mxu0 0
    %1258 = vmatpush2.bf16.msra.mxu0 0
    %1259 = vmatprep.subr.bf16.mxu0 0
    %1260 = vmatpush2.bf16.msra.mxu0 0
    %1261 = vmatprep.subr.bf16.mxu0 0
    %1262 = vmatpush2.bf16.msra.mxu0 0
    %1263 = vmatprep.subr.bf16.mxu0 0
    %1264 = vmatpush2.bf16.msra.mxu0 0
    %1265 = vmatprep.subr.bf16.mxu0 0
    %1266 = vmatpush2.bf16.msra.mxu0 0
    %1267 = vmatprep.subr.bf16.mxu0 0
    %1268 = vmatpush2.bf16.msra.mxu0 0
    %1269 = vmatprep.subr.bf16.mxu0 0
    %1270 = vmatpush2.bf16.msra.mxu0 0
    %1271 = vmatprep.subr.bf16.mxu0 0
    %1272 = vmatpush2.bf16.msra.mxu0 0
    %1273 = vmatprep.mubr.bf16.mxu0 0
    %1274 = vmatmul.mubr.bf16.gmra.mxu0 %v468
    %v1275 = vpop.f32.mrf.mxu0
    %v1276 = vadd.f32 %v569, %v1275
    %v1277 = vpop.f32.mrf.mxu0
    %v1278 = vadd.f32 %v573, %v1277
    %v1279 = vpop.f32.mrf.mxu0
    %v1280 = vadd.f32 %v569, %v1279
    %v1281 = vpop.f32.mrf.mxu0
    %v1282 = vadd.f32 %v573, %v1281
    %1283 = vmatprep.mubr.bf16.mxu0 0
    %1284 = vmatmul.mubr.bf16.gmra.mxu0 %v469
    %v1285 = vpop.f32.mrf.mxu0
    %v1286 = vadd.f32 %v569, %v1285
    %v1287 = vpop.f32.mrf.mxu0
    %v1288 = vadd.f32 %v573, %v1287
    %v1289 = vpop.f32.mrf.mxu0
    %v1290 = vadd.f32 %v569, %v1289
    %v1291 = vpop.f32.mrf.mxu0
    %v1292 = vadd.f32 %v573, %v1291
    %1293 = vmatprep.mubr.bf16.mxu0 0
    %1294 = vmatmul.mubr.bf16.gmra.mxu0 %v470
    %v1295 = vpop.f32.mrf.mxu0
    %v1296 = vadd.f32 %v569, %v1295
    %v1297 = vpop.f32.mrf.mxu0
    %v1298 = vadd.f32 %v573, %v1297
    %v1299 = vpop.f32.mrf.mxu0
    %v1300 = vadd.f32 %v569, %v1299
    %v1301 = vpop.f32.mrf.mxu0
    %v1302 = vadd.f32 %v573, %v1301
    %1303 = vmatprep.mubr.bf16.mxu0 0
    %1304 = vmatmul.mubr.bf16.gmra.mxu0 %v471
    %v1305 = vpop.f32.mrf.mxu0
    %v1306 = vadd.f32 %v569, %v1305
    %v1307 = vpop.f32.mrf.mxu0
    %v1308 = vadd.f32 %v573, %v1307
    %v1309 = vpop.f32.mrf.mxu0
    %v1310 = vadd.f32 %v569, %v1309
    %v1311 = vpop.f32.mrf.mxu0
    %v1312 = vadd.f32 %v573, %v1311
    %1313 = vmatprep.mubr.bf16.mxu0 0
    %1314 = vmatmul.mubr.bf16.gmra.mxu0 %v472
    %v1315 = vpop.f32.mrf.mxu0
    %v1316 = vadd.f32 %v569, %v1315
    %v1317 = vpop.f32.mrf.mxu0
    %v1318 = vadd.f32 %v573, %v1317
    %v1319 = vpop.f32.mrf.mxu0
    %v1320 = vadd.f32 %v569, %v1319
    %v1321 = vpop.f32.mrf.mxu0
    %v1322 = vadd.f32 %v573, %v1321
    %1323 = vmatprep.mubr.bf16.mxu0 0
    %1324 = vmatmul.mubr.bf16.gmra.mxu0 %v473
    %v1325 = vpop.f32.mrf.mxu0
    %v1326 = vadd.f32 %v569, %v1325
    %v1327 = vpop.f32.mrf.mxu0
    %v1328 = vadd.f32 %v573, %v1327
    %v1329 = vpop.f32.mrf.mxu0
    %v1330 = vadd.f32 %v569, %v1329
    %v1331 = vpop.f32.mrf.mxu0
    %v1332 = vadd.f32 %v573, %v1331
    %1333 = vmatprep.mubr.bf16.mxu0 0
    %1334 = vmatmul.mubr.bf16.gmra.mxu0 %v474
    %v1335 = vpop.f32.mrf.mxu0
    %v1336 = vadd.f32 %v569, %v1335
    %v1337 = vpop.f32.mrf.mxu0
    %v1338 = vadd.f32 %v573, %v1337
    %v1339 = vpop.f32.mrf.mxu0
    %v1340 = vadd.f32 %v569, %v1339
    %v1341 = vpop.f32.mrf.mxu0
    %v1342 = vadd.f32 %v573, %v1341
    %1343 = vmatprep.mubr.bf16.mxu0 0
    %1344 = vmatmul.mubr.bf16.gmra.mxu0 %v475
    %v1345 = vpop.f32.mrf.mxu0
    %v1346 = vadd.f32 %v569, %v1345
    %v1347 = vpop.f32.mrf.mxu0
    %v1348 = vadd.f32 %v573, %v1347
    %v1349 = vpop.f32.mrf.mxu0
    %v1350 = vadd.f32 %v569, %v1349
    %v1351 = vpop.f32.mrf.mxu0
    %v1352 = vadd.f32 %v573, %v1351
    %1353 = vdwg.mxu0
    %v1354 = vmax.f32 %v937, 0.0
    %v1355 = vmax.f32 %v939, 0.0
    %v1356 = vmax.f32 %v1050, 0.0
    %v1357 = vmax.f32 %v1052, 0.0
    %v1358 = vmax.f32 %v1163, 0.0
    %v1359 = vmax.f32 %v1165, 0.0
    %v1360 = vmax.f32 %v1276, 0.0
    %v1361 = vmax.f32 %v1278, 0.0
    %v1362 = vmax.f32 %v941, 0.0
    %v1363 = vmax.f32 %v943, 0.0
    %v1364 = vmax.f32 %v1054, 0.0
    %v1365 = vmax.f32 %v1056, 0.0
    %v1366 = vmax.f32 %v1167, 0.0
    %v1367 = vmax.f32 %v1169, 0.0
    %v1368 = vmax.f32 %v1280, 0.0
    %v1369 = vmax.f32 %v1282, 0.0
    %v1370 = vmax.f32 %v947, 0.0
    %v1371 = vmax.f32 %v949, 0.0
    %v1372 = vmax.f32 %v1060, 0.0
    %v1373 = vmax.f32 %v1062, 0.0
    %v1374 = vmax.f32 %v1173, 0.0
    %v1375 = vmax.f32 %v1175, 0.0
    %v1376 = vmax.f32 %v1286, 0.0
    %v1377 = vmax.f32 %v1288, 0.0
    %v1378 = vmax.f32 %v951, 0.0
    %v1379 = vmax.f32 %v953, 0.0
    %v1380 = vmax.f32 %v1064, 0.0
    %v1381 = vmax.f32 %v1066, 0.0
    %v1382 = vmax.f32 %v1177, 0.0
    %v1383 = vmax.f32 %v1179, 0.0
    %v1384 = vmax.f32 %v1290, 0.0
    %v1385 = vmax.f32 %v1292, 0.0
    %v1386 = vmax.f32 %v957, 0.0
    %v1387 = vmax.f32 %v959, 0.0
    %v1388 = vmax.f32 %v1070, 0.0
    %v1389 = vmax.f32 %v1072, 0.0
    %v1390 = vmax.f32 %v1183, 0.0
    %v1391 = vmax.f32 %v1185, 0.0
    %v1392 = vmax.f32 %v1296, 0.0
    %v1393 = vmax.f32 %v1298, 0.0
    %v1394 = vmax.f32 %v961, 0.0
    %v1395 = vmax.f32 %v963, 0.0
    %v1396 = vmax.f32 %v1074, 0.0
    %v1397 = vmax.f32 %v1076, 0.0
    %v1398 = vmax.f32 %v1187, 0.0
    %v1399 = vmax.f32 %v1189, 0.0
    %v1400 = vmax.f32 %v1300, 0.0
    %v1401 = vmax.f32 %v1302, 0.0
    %v1402 = vmax.f32 %v967, 0.0
    %v1403 = vmax.f32 %v969, 0.0
    %v1404 = vmax.f32 %v1080, 0.0
    %v1405 = vmax.f32 %v1082, 0.0
    %v1406 = vmax.f32 %v1193, 0.0
    %v1407 = vmax.f32 %v1195, 0.0
    %v1408 = vmax.f32 %v1306, 0.0
    %v1409 = vmax.f32 %v1308, 0.0
    %v1410 = vmax.f32 %v971, 0.0
    %v1411 = vmax.f32 %v973, 0.0
    %v1412 = vmax.f32 %v1084, 0.0
    %v1413 = vmax.f32 %v1086, 0.0
    %v1414 = vmax.f32 %v1197, 0.0
    %v1415 = vmax.f32 %v1199, 0.0
    %v1416 = vmax.f32 %v1310, 0.0
    %v1417 = vmax.f32 %v1312, 0.0
    %v1418 = vmax.f32 %v977, 0.0
    %v1419 = vmax.f32 %v979, 0.0
    %v1420 = vmax.f32 %v1090, 0.0
    %v1421 = vmax.f32 %v1092, 0.0
    %v1422 = vmax.f32 %v1203, 0.0
    %v1423 = vmax.f32 %v1205, 0.0
    %v1424 = vmax.f32 %v1316, 0.0
    %v1425 = vmax.f32 %v1318, 0.0
    %v1426 = vmax.f32 %v981, 0.0
    %v1427 = vmax.f32 %v983, 0.0
    %v1428 = vmax.f32 %v1094, 0.0
    %v1429 = vmax.f32 %v1096, 0.0
    %v1430 = vmax.f32 %v1207, 0.0
    %v1431 = vmax.f32 %v1209, 0.0
    %v1432 = vmax.f32 %v1320, 0.0
    %v1433 = vmax.f32 %v1322, 0.0
    %v1434 = vmax.f32 %v987, 0.0
    %v1435 = vmax.f32 %v989, 0.0
    %v1436 = vmax.f32 %v1100, 0.0
    %v1437 = vmax.f32 %v1102, 0.0
    %v1438 = vmax.f32 %v1213, 0.0
    %v1439 = vmax.f32 %v1215, 0.0
    %v1440 = vmax.f32 %v1326, 0.0
    %v1441 = vmax.f32 %v1328, 0.0
    %v1442 = vmax.f32 %v991, 0.0
    %v1443 = vmax.f32 %v993, 0.0
    %v1444 = vmax.f32 %v1104, 0.0
    %v1445 = vmax.f32 %v1106, 0.0
    %v1446 = vmax.f32 %v1217, 0.0
    %v1447 = vmax.f32 %v1219, 0.0
    %v1448 = vmax.f32 %v1330, 0.0
    %v1449 = vmax.f32 %v1332, 0.0
    %v1450 = vmax.f32 %v997, 0.0
    %v1451 = vmax.f32 %v999, 0.0
    %v1452 = vmax.f32 %v1110, 0.0
    %v1453 = vmax.f32 %v1112, 0.0
    %v1454 = vmax.f32 %v1223, 0.0
    %v1455 = vmax.f32 %v1225, 0.0
    %v1456 = vmax.f32 %v1336, 0.0
    %v1457 = vmax.f32 %v1338, 0.0
    %v1458 = vmax.f32 %v1001, 0.0
    %v1459 = vmax.f32 %v1003, 0.0
    %v1460 = vmax.f32 %v1114, 0.0
    %v1461 = vmax.f32 %v1116, 0.0
    %v1462 = vmax.f32 %v1227, 0.0
    %v1463 = vmax.f32 %v1229, 0.0
    %v1464 = vmax.f32 %v1340, 0.0
    %v1465 = vmax.f32 %v1342, 0.0
    %v1466 = vmax.f32 %v1007, 0.0
    %v1467 = vmax.f32 %v1009, 0.0
    %v1468 = vmax.f32 %v1120, 0.0
    %v1469 = vmax.f32 %v1122, 0.0
    %v1470 = vmax.f32 %v1233, 0.0
    %v1471 = vmax.f32 %v1235, 0.0
    %v1472 = vmax.f32 %v1346, 0.0
    %v1473 = vmax.f32 %v1348, 0.0
    %v1474 = vmax.f32 %v1011, 0.0
    %v1475 = vmax.f32 %v1013, 0.0
    %v1476 = vmax.f32 %v1124, 0.0
    %v1477 = vmax.f32 %v1126, 0.0
    %v1478 = vmax.f32 %v1237, 0.0
    %v1479 = vmax.f32 %v1239, 0.0
    %v1480 = vmax.f32 %v1350, 0.0
    %v1481 = vmax.f32 %v1352, 0.0
    %v1482 = vmax.f32 %v1354, %v1362
    %v1483 = vmax.f32 %v1482, %v1370
    %v1484 = vmax.f32 %v1483, %v1378
    %v1485 = vmax.f32 %v1484, %v1386
    %v1486 = vmax.f32 %v1485, %v1394
    %v1487 = vmax.f32 %v1486, %v1402
    %v1488 = vmax.f32 %v1487, %v1410
    %v1489 = vrot.slane %v1488, 4
    %v1490 = vmax.f32 %v1488, %v1489
    %v1491 = vrot.slane %v1490, 2
    %v1492 = vmax.f32 %v1490, %v1491
    %v1493 = vrot.slane %v1492, 1
    %v1494 = vmax.f32 %v1492, %v1493
    %v1495 = vmax.f32 %v1355, %v1363
    %v1496 = vmax.f32 %v1495, %v1371
    %v1497 = vmax.f32 %v1496, %v1379
    %v1498 = vmax.f32 %v1497, %v1387
    %v1499 = vmax.f32 %v1498, %v1395
    %v1500 = vmax.f32 %v1499, %v1403
    %v1501 = vmax.f32 %v1500, %v1411
    %v1502 = vrot.slane %v1501, 4
    %v1503 = vmax.f32 %v1501, %v1502
    %v1504 = vrot.slane %v1503, 2
    %v1505 = vmax.f32 %v1503, %v1504
    %v1506 = vrot.slane %v1505, 1
    %v1507 = vmax.f32 %v1505, %v1506
    %v1508 = vmax.f32 %v1356, %v1364
    %v1509 = vmax.f32 %v1508, %v1372
    %v1510 = vmax.f32 %v1509, %v1380
    %v1511 = vmax.f32 %v1510, %v1388
    %v1512 = vmax.f32 %v1511, %v1396
    %v1513 = vmax.f32 %v1512, %v1404
    %v1514 = vmax.f32 %v1513, %v1412
    %v1515 = vrot.slane %v1514, 4
    %v1516 = vmax.f32 %v1514, %v1515
    %v1517 = vrot.slane %v1516, 2
    %v1518 = vmax.f32 %v1516, %v1517
    %v1519 = vrot.slane %v1518, 1
    %v1520 = vmax.f32 %v1518, %v1519
    %v1521 = vmax.f32 %v1357, %v1365
    %v1522 = vmax.f32 %v1521, %v1373
    %v1523 = vmax.f32 %v1522, %v1381
    %v1524 = vmax.f32 %v1523, %v1389
    %v1525 = vmax.f32 %v1524, %v1397
    %v1526 = vmax.f32 %v1525, %v1405
    %v1527 = vmax.f32 %v1526, %v1413
    %v1528 = vrot.slane %v1527, 4
    %v1529 = vmax.f32 %v1527, %v1528
    %v1530 = vrot.slane %v1529, 2
    %v1531 = vmax.f32 %v1529, %v1530
    %v1532 = vrot.slane %v1531, 1
    %v1533 = vmax.f32 %v1531, %v1532
    %v1534 = vmax.f32 %v1358, %v1366
    %v1535 = vmax.f32 %v1534, %v1374
    %v1536 = vmax.f32 %v1535, %v1382
    %v1537 = vmax.f32 %v1536, %v1390
    %v1538 = vmax.f32 %v1537, %v1398
    %v1539 = vmax.f32 %v1538, %v1406
    %v1540 = vmax.f32 %v1539, %v1414
    %v1541 = vrot.slane %v1540, 4
    %v1542 = vmax.f32 %v1540, %v1541
    %v1543 = vrot.slane %v1542, 2
    %v1544 = vmax.f32 %v1542, %v1543
    %v1545 = vrot.slane %v1544, 1
    %v1546 = vmax.f32 %v1544, %v1545
    %v1547 = vmax.f32 %v1359, %v1367
    %v1548 = vmax.f32 %v1547, %v1375
    %v1549 = vmax.f32 %v1548, %v1383
    %v1550 = vmax.f32 %v1549, %v1391
    %v1551 = vmax.f32 %v1550, %v1399
    %v1552 = vmax.f32 %v1551, %v1407
    %v1553 = vmax.f32 %v1552, %v1415
    %v1554 = vrot.slane %v1553, 4
    %v1555 = vmax.f32 %v1553, %v1554
    %v1556 = vrot.slane %v1555, 2
    %v1557 = vmax.f32 %v1555, %v1556
    %v1558 = vrot.slane %v1557, 1
    %v1559 = vmax.f32 %v1557, %v1558
    %v1560 = vmax.f32 %v1360, %v1368
    %v1561 = vmax.f32 %v1560, %v1376
    %v1562 = vmax.f32 %v1561, %v1384
    %v1563 = vmax.f32 %v1562, %v1392
    %v1564 = vmax.f32 %v1563, %v1400
    %v1565 = vmax.f32 %v1564, %v1408
    %v1566 = vmax.f32 %v1565, %v1416
    %v1567 = vrot.slane %v1566, 4
    %v1568 = vmax.f32 %v1566, %v1567
    %v1569 = vrot.slane %v1568, 2
    %v1570 = vmax.f32 %v1568, %v1569
    %v1571 = vrot.slane %v1570, 1
    %v1572 = vmax.f32 %v1570, %v1571
    %v1573 = vmax.f32 %v1361, %v1369
    %v1574 = vmax.f32 %v1573, %v1377
    %v1575 = vmax.f32 %v1574, %v1385
    %v1576 = vmax.f32 %v1575, %v1393
    %v1577 = vmax.f32 %v1576, %v1401
    %v1578 = vmax.f32 %v1577, %v1409
    %v1579 = vmax.f32 %v1578, %v1417
    %v1580 = vrot.slane %v1579, 4
    %v1581 = vmax.f32 %v1579, %v1580
    %v1582 = vrot.slane %v1581, 2
    %v1583 = vmax.f32 %v1581, %v1582
    %v1584 = vrot.slane %v1583, 1
    %v1585 = vmax.f32 %v1583, %v1584
    %v1586 = vmax.f32 %v1418, %v1426
    %v1587 = vmax.f32 %v1586, %v1434
    %v1588 = vmax.f32 %v1587, %v1442
    %v1589 = vmax.f32 %v1588, %v1450
    %v1590 = vmax.f32 %v1589, %v1458
    %v1591 = vmax.f32 %v1590, %v1466
    %v1592 = vmax.f32 %v1591, %v1474
    %v1593 = vrot.slane %v1592, 4
    %v1594 = vmax.f32 %v1592, %v1593
    %v1595 = vrot.slane %v1594, 2
    %v1596 = vmax.f32 %v1594, %v1595
    %v1597 = vrot.slane %v1596, 1
    %v1598 = vmax.f32 %v1596, %v1597
    %v1599 = vmax.f32 %v1419, %v1427
    %v1600 = vmax.f32 %v1599, %v1435
    %v1601 = vmax.f32 %v1600, %v1443
    %v1602 = vmax.f32 %v1601, %v1451
    %v1603 = vmax.f32 %v1602, %v1459
    %v1604 = vmax.f32 %v1603, %v1467
    %v1605 = vmax.f32 %v1604, %v1475
    %v1606 = vrot.slane %v1605, 4
    %v1607 = vmax.f32 %v1605, %v1606
    %v1608 = vrot.slane %v1607, 2
    %v1609 = vmax.f32 %v1607, %v1608
    %v1610 = vrot.slane %v1609, 1
    %v1611 = vmax.f32 %v1609, %v1610
    %v1612 = vmax.f32 %v1420, %v1428
    %v1613 = vmax.f32 %v1612, %v1436
    %v1614 = vmax.f32 %v1613, %v1444
    %v1615 = vmax.f32 %v1614, %v1452
    %v1616 = vmax.f32 %v1615, %v1460
    %v1617 = vmax.f32 %v1616, %v1468
    %v1618 = vmax.f32 %v1617, %v1476
    %v1619 = vrot.slane %v1618, 4
    %v1620 = vmax.f32 %v1618, %v1619
    %v1621 = vrot.slane %v1620, 2
    %v1622 = vmax.f32 %v1620, %v1621
    %v1623 = vrot.slane %v1622, 1
    %v1624 = vmax.f32 %v1622, %v1623
    %v1625 = vmax.f32 %v1421, %v1429
    %v1626 = vmax.f32 %v1625, %v1437
    %v1627 = vmax.f32 %v1626, %v1445
    %v1628 = vmax.f32 %v1627, %v1453
    %v1629 = vmax.f32 %v1628, %v1461
    %v1630 = vmax.f32 %v1629, %v1469
    %v1631 = vmax.f32 %v1630, %v1477
    %v1632 = vrot.slane %v1631, 4
    %v1633 = vmax.f32 %v1631, %v1632
    %v1634 = vrot.slane %v1633, 2
    %v1635 = vmax.f32 %v1633, %v1634
    %v1636 = vrot.slane %v1635, 1
    %v1637 = vmax.f32 %v1635, %v1636
    %v1638 = vmax.f32 %v1422, %v1430
    %v1639 = vmax.f32 %v1638, %v1438
    %v1640 = vmax.f32 %v1639, %v1446
    %v1641 = vmax.f32 %v1640, %v1454
    %v1642 = vmax.f32 %v1641, %v1462
    %v1643 = vmax.f32 %v1642, %v1470
    %v1644 = vmax.f32 %v1643, %v1478
    %v1645 = vrot.slane %v1644, 4
    %v1646 = vmax.f32 %v1644, %v1645
    %v1647 = vrot.slane %v1646, 2
    %v1648 = vmax.f32 %v1646, %v1647
    %v1649 = vrot.slane %v1648, 1
    %v1650 = vmax.f32 %v1648, %v1649
    %v1651 = vmax.f32 %v1423, %v1431
    %v1652 = vmax.f32 %v1651, %v1439
    %v1653 = vmax.f32 %v1652, %v1447
    %v1654 = vmax.f32 %v1653, %v1455
    %v1655 = vmax.f32 %v1654, %v1463
    %v1656 = vmax.f32 %v1655, %v1471
    %v1657 = vmax.f32 %v1656, %v1479
    %v1658 = vrot.slane %v1657, 4
    %v1659 = vmax.f32 %v1657, %v1658
    %v1660 = vrot.slane %v1659, 2
    %v1661 = vmax.f32 %v1659, %v1660
    %v1662 = vrot.slane %v1661, 1
    %v1663 = vmax.f32 %v1661, %v1662
    %v1664 = vmax.f32 %v1424, %v1432
    %v1665 = vmax.f32 %v1664, %v1440
    %v1666 = vmax.f32 %v1665, %v1448
    %v1667 = vmax.f32 %v1666, %v1456
    %v1668 = vmax.f32 %v1667, %v1464
    %v1669 = vmax.f32 %v1668, %v1472
    %v1670 = vmax.f32 %v1669, %v1480
    %v1671 = vrot.slane %v1670, 4
    %v1672 = vmax.f32 %v1670, %v1671
    %v1673 = vrot.slane %v1672, 2
    %v1674 = vmax.f32 %v1672, %v1673
    %v1675 = vrot.slane %v1674, 1
    %v1676 = vmax.f32 %v1674, %v1675
    %v1677 = vmax.f32 %v1425, %v1433
    %v1678 = vmax.f32 %v1677, %v1441
    %v1679 = vmax.f32 %v1678, %v1449
    %v1680 = vmax.f32 %v1679, %v1457
    %v1681 = vmax.f32 %v1680, %v1465
    %v1682 = vmax.f32 %v1681, %v1473
    %v1683 = vmax.f32 %v1682, %v1481
    %v1684 = vrot.slane %v1683, 4
    %v1685 = vmax.f32 %v1683, %v1684
    %v1686 = vrot.slane %v1685, 2
    %v1687 = vmax.f32 %v1685, %v1686
    %v1688 = vrot.slane %v1687, 1
    %v1689 = vmax.f32 %v1687, %v1688
    %v1690 = vld [vmem:[%s1] sm:$0xff]
    %v1691 = vld [vmem:[%s1 + $0x8] sm:$0xff]
    %v1692 = vld [vmem:[%s1 + $0x10] sm:$0xff]
    %v1693 = vld [vmem:[%s1 + $0x18] sm:$0xff]
    %v1694 = vld [vmem:[%s1 + $0x20] sm:$0xff]
    %v1695 = vld [vmem:[%s1 + $0x28] sm:$0xff]
    %v1696 = vld [vmem:[%s1 + $0x30] sm:$0xff]
    %v1697 = vld [vmem:[%s1 + $0x38] sm:$0xff]
    %v1698 = vld [vmem:[%s1 + $0x40] sm:$0xff]
    %v1699 = vld [vmem:[%s1 + $0x48] sm:$0xff]
    %v1700 = vld [vmem:[%s1 + $0x50] sm:$0xff]
    %v1701 = vld [vmem:[%s1 + $0x58] sm:$0xff]
    %v1702 = vld [vmem:[%s1 + $0x60] sm:$0xff]
    %v1703 = vld [vmem:[%s1 + $0x68] sm:$0xff]
    %v1704 = vld [vmem:[%s1 + $0x70] sm:$0xff]
    %v1705 = vld [vmem:[%s1 + $0x78] sm:$0xff]
    %v1707 = vsel %vm69, %v1690, 0
    %v1710 = vsel %vm69, %v1691, 0
    %v1713 = vsel %vm69, %v1692, 0
    %v1716 = vsel %vm69, %v1693, 0
    %v1719 = vsel %vm69, %v1694, 0
    %v1722 = vsel %vm69, %v1695, 0
    %v1725 = vsel %vm69, %v1696, 0
    %v1728 = vsel %vm69, %v1697, 0
    %v1731 = vsel %vm69, %v1698, 0
    %v1734 = vsel %vm69, %v1699, 0
    %v1737 = vsel %vm69, %v1700, 0
    %v1740 = vsel %vm69, %v1701, 0
    %v1743 = vsel %vm69, %v1702, 0
    %v1746 = vsel %vm69, %v1703, 0
    %v1749 = vsel %vm69, %v1704, 0
    %v1752 = vsel %vm69, %v1705, 0
    %1754 = vmatprep.subr.mxu0 0.0
    %1755 = vmatpush1.msra.mxu0 0.0
    %1756 = vmatprep.subr.mxu0 0.0
    %1757 = vmatpush1.msra.mxu0 0.0
    %1758 = vmatprep.subr.mxu0 0.0
    %1759 = vmatpush1.msra.mxu0 0.0
    %1760 = vmatprep.subr.mxu0 0.0
    %1761 = vmatpush1.msra.mxu0 0.0
    %1762 = vmatprep.subr.mxu0 0.0
    %1763 = vmatpush1.msra.mxu0 0.0
    %1764 = vmatprep.subr.mxu0 0.0
    %1765 = vmatpush1.msra.mxu0 0.0
    %1766 = vmatprep.subr.mxu0 0.0
    %1767 = vmatpush1.msra.mxu0 0.0
    %1768 = vmatprep.subr.mxu0 0.0
    %1769 = vmatpush1.msra.mxu0 0.0
    %1770 = vmatprep.subr.mxu0 0.0
    %1771 = vmatpush1.msra.mxu0 0.0
    %1772 = vmatprep.subr.mxu0 0.0
    %1773 = vmatpush1.msra.mxu0 0.0
    %1774 = vmatprep.subr.mxu0 0.0
    %1775 = vmatpush1.msra.mxu0 0.0
    %1776 = vmatprep.subr.mxu0 0.0
    %1777 = vmatpush1.msra.mxu0 0.0
    %1778 = vmatprep.subr.mxu0 0.0
    %1779 = vmatpush1.msra.mxu0 0.0
    %1780 = vmatprep.subr.mxu0 0.0
    %1781 = vmatpush1.msra.mxu0 0.0
    %1782 = vmatprep.subr.mxu0 0.0
    %1783 = vmatpush1.msra.mxu0 0.0
    %1784 = vmatprep.subr.mxu0 0.0
    %1785 = vmatpush1.msra.mxu0 %v120
    %1786 = vmatprep.subr.mxu0 0.0
    %1787 = vmatpush2.msra.mxu0 0.0
    %1788 = vmatprep.subr.mxu0 0.0
    %1789 = vmatpush2.msra.mxu0 0.0
    %1790 = vmatprep.subr.mxu0 0.0
    %1791 = vmatpush2.msra.mxu0 0.0
    %1792 = vmatprep.subr.mxu0 0.0
    %1793 = vmatpush2.msra.mxu0 0.0
    %1794 = vmatprep.subr.mxu0 0.0
    %1795 = vmatpush2.msra.mxu0 0.0
    %1796 = vmatprep.subr.mxu0 0.0
    %1797 = vmatpush2.msra.mxu0 0.0
    %1798 = vmatprep.subr.mxu0 0.0
    %1799 = vmatpush2.msra.mxu0 0.0
    %1800 = vmatprep.subr.mxu0 0.0
    %1801 = vmatpush2.msra.mxu0 0.0
    %1802 = vmatprep.subr.mxu0 0.0
    %1803 = vmatpush2.msra.mxu0 0.0
    %1804 = vmatprep.subr.mxu0 0.0
    %1805 = vmatpush2.msra.mxu0 0.0
    %1806 = vmatprep.subr.mxu0 0.0
    %1807 = vmatpush2.msra.mxu0 0.0
    %1808 = vmatprep.subr.mxu0 0.0
    %1809 = vmatpush2.msra.mxu0 0.0
    %1810 = vmatprep.subr.mxu0 0.0
    %1811 = vmatpush2.msra.mxu0 0.0
    %1812 = vmatprep.subr.mxu0 0.0
    %1813 = vmatpush2.msra.mxu0 0.0
    %1814 = vmatprep.subr.mxu0 0.0
    %1815 = vmatpush2.msra.mxu0 0.0
    %1816 = vmatprep.subr.mxu0 0.0
    %1817 = vmatpush2.msra.mxu0 0.0
    %1818 = vmatprep.mubr.f32.mxu0 0.0
    %1819 = vmatmul.mubr.f32.gmra.mxu0 %v1707
    %v1820 = vpop.f32.mrf.mxu0
    %v1821 = vadd.f32 %v67, %v1820
    %v1822 = vpop.f32.mrf.mxu0
    %1823 = vmatprep.mubr.f32.mxu0 0.0
    %1824 = vmatmul.mubr.f32.gmra.mxu0 %v1710
    %v1825 = vpop.f32.mrf.mxu0
    %v1826 = vadd.f32 %v67, %v1825
    %v1827 = vpop.f32.mrf.mxu0
    %1828 = vmatprep.mubr.f32.mxu0 0.0
    %1829 = vmatmul.mubr.f32.gmra.mxu0 %v1713
    %v1830 = vpop.f32.mrf.mxu0
    %v1831 = vadd.f32 %v67, %v1830
    %v1832 = vpop.f32.mrf.mxu0
    %1833 = vmatprep.mubr.f32.mxu0 0.0
    %1834 = vmatmul.mubr.f32.gmra.mxu0 %v1716
    %v1835 = vpop.f32.mrf.mxu0
    %v1836 = vadd.f32 %v67, %v1835
    %v1837 = vpop.f32.mrf.mxu0
    %1838 = vmatprep.mubr.f32.mxu0 0.0
    %1839 = vmatmul.mubr.f32.gmra.mxu0 %v1719
    %v1840 = vpop.f32.mrf.mxu0
    %v1841 = vadd.f32 %v67, %v1840
    %v1842 = vpop.f32.mrf.mxu0
    %1843 = vmatprep.mubr.f32.mxu0 0.0
    %1844 = vmatmul.mubr.f32.gmra.mxu0 %v1722
    %v1845 = vpop.f32.mrf.mxu0
    %v1846 = vadd.f32 %v67, %v1845
    %v1847 = vpop.f32.mrf.mxu0
    %1848 = vmatprep.mubr.f32.mxu0 0.0
    %1849 = vmatmul.mubr.f32.gmra.mxu0 %v1725
    %v1850 = vpop.f32.mrf.mxu0
    %v1851 = vadd.f32 %v67, %v1850
    %v1852 = vpop.f32.mrf.mxu0
    %1853 = vmatprep.mubr.f32.mxu0 0.0
    %1854 = vmatmul.mubr.f32.gmra.mxu0 %v1728
    %v1855 = vpop.f32.mrf.mxu0
    %v1856 = vadd.f32 %v67, %v1855
    %v1857 = vpop.f32.mrf.mxu0
    %1858 = vmatprep.mubr.f32.mxu0 0.0
    %1859 = vmatmul.mubr.f32.gmra.mxu0 %v1731
    %v1860 = vpop.f32.mrf.mxu0
    %v1861 = vadd.f32 %v67, %v1860
    %v1862 = vpop.f32.mrf.mxu0
    %1863 = vmatprep.mubr.f32.mxu0 0.0
    %1864 = vmatmul.mubr.f32.gmra.mxu0 %v1734
    %v1865 = vpop.f32.mrf.mxu0
    %v1866 = vadd.f32 %v67, %v1865
    %v1867 = vpop.f32.mrf.mxu0
    %1868 = vmatprep.mubr.f32.mxu0 0.0
    %1869 = vmatmul.mubr.f32.gmra.mxu0 %v1737
    %v1870 = vpop.f32.mrf.mxu0
    %v1871 = vadd.f32 %v67, %v1870
    %v1872 = vpop.f32.mrf.mxu0
    %1873 = vmatprep.mubr.f32.mxu0 0.0
    %1874 = vmatmul.mubr.f32.gmra.mxu0 %v1740
    %v1875 = vpop.f32.mrf.mxu0
    %v1876 = vadd.f32 %v67, %v1875
    %v1877 = vpop.f32.mrf.mxu0
    %1878 = vmatprep.mubr.f32.mxu0 0.0
    %1879 = vmatmul.mubr.f32.gmra.mxu0 %v1743
    %v1880 = vpop.f32.mrf.mxu0
    %v1881 = vadd.f32 %v67, %v1880
    %v1882 = vpop.f32.mrf.mxu0
    %1883 = vmatprep.mubr.f32.mxu0 0.0
    %1884 = vmatmul.mubr.f32.gmra.mxu0 %v1746
    %v1885 = vpop.f32.mrf.mxu0
    %v1886 = vadd.f32 %v67, %v1885
    %v1887 = vpop.f32.mrf.mxu0
    %1888 = vmatprep.mubr.f32.mxu0 0.0
    %1889 = vmatmul.mubr.f32.gmra.mxu0 %v1749
    %v1890 = vpop.f32.mrf.mxu0
    %v1891 = vadd.f32 %v67, %v1890
    %v1892 = vpop.f32.mrf.mxu0
    %1893 = vmatprep.mubr.f32.mxu0 0.0
    %1894 = vmatmul.mubr.f32.gmra.mxu0 %v1752
    %v1895 = vpop.f32.mrf.mxu0
    %v1896 = vadd.f32 %v67, %v1895
    %v1897 = vpop.f32.mrf.mxu0
    %1898 = vdwg.mxu0
    %v1899 = vmax.f32 %v1821, 0.0
    %v1900 = vmax.f32 %v1826, 0.0
    %v1901 = vmax.f32 %v1831, 0.0
    %v1902 = vmax.f32 %v1836, 0.0
    %v1903 = vmax.f32 %v1841, 0.0
    %v1904 = vmax.f32 %v1846, 0.0
    %v1905 = vmax.f32 %v1851, 0.0
    %v1906 = vmax.f32 %v1856, 0.0
    %v1907 = vmax.f32 %v1861, 0.0
    %v1908 = vmax.f32 %v1866, 0.0
    %v1909 = vmax.f32 %v1871, 0.0
    %v1910 = vmax.f32 %v1876, 0.0
    %v1911 = vmax.f32 %v1881, 0.0
    %v1912 = vmax.f32 %v1886, 0.0
    %v1913 = vmax.f32 %v1891, 0.0
    %v1914 = vmax.f32 %v1896, 0.0
    %v1915 = vpack.c.bf16 %v1900, %v1899
    %v1916 = vpack.c.bf16 %v1902, %v1901
    %v1917 = vpack.c.bf16 %v1904, %v1903
    %v1918 = vpack.c.bf16 %v1906, %v1905
    %v1919 = vpack.c.bf16 %v1908, %v1907
    %v1920 = vpack.c.bf16 %v1910, %v1909
    %v1921 = vpack.c.bf16 %v1912, %v1911
    %v1922 = vpack.c.bf16 %v1914, %v1913
    %v1924 = vsel %vm330, %v1915, 0
    %v1927 = vsel %vm330, %v1916, 0
    %v1930 = vsel %vm330, %v1917, 0
    %v1933 = vsel %vm330, %v1918, 0
    %v1936 = vsel %vm330, %v1919, 0
    %v1939 = vsel %vm330, %v1920, 0
    %v1942 = vsel %vm330, %v1921, 0
    %v1945 = vsel %vm330, %v1922, 0
    %1947 = vmatprep.subr.bf16.mxu0 0
    %1948 = vmatpush1.bf16.msra.mxu0 0
    %1949 = vmatprep.subr.bf16.mxu0 0
    %1950 = vmatpush1.bf16.msra.mxu0 0
    %1951 = vmatprep.subr.bf16.mxu0 0
    %1952 = vmatpush1.bf16.msra.mxu0 0
    %1953 = vmatprep.subr.bf16.mxu0 0
    %1954 = vmatpush1.bf16.msra.mxu0 0
    %1955 = vmatprep.subr.bf16.mxu0 0
    %1956 = vmatpush1.bf16.msra.mxu0 %v325
    %1957 = vmatprep.subr.bf16.mxu0 0
    %1958 = vmatpush1.bf16.msra.mxu0 %v324
    %1959 = vmatprep.subr.bf16.mxu0 0
    %1960 = vmatpush1.bf16.msra.mxu0 %v323
    %1961 = vmatprep.subr.bf16.mxu0 0
    %1962 = vmatpush1.bf16.msra.mxu0 %v322
    %1963 = vmatprep.subr.bf16.mxu0 0
    %1964 = vmatpush2.bf16.msra.mxu0 0
    %1965 = vmatprep.subr.bf16.mxu0 0
    %1966 = vmatpush2.bf16.msra.mxu0 0
    %1967 = vmatprep.subr.bf16.mxu0 0
    %1968 = vmatpush2.bf16.msra.mxu0 0
    %1969 = vmatprep.subr.bf16.mxu0 0
    %1970 = vmatpush2.bf16.msra.mxu0 0
    %1971 = vmatprep.subr.bf16.mxu0 0
    %1972 = vmatpush2.bf16.msra.mxu0 0
    %1973 = vmatprep.subr.bf16.mxu0 0
    %1974 = vmatpush2.bf16.msra.mxu0 0
    %1975 = vmatprep.subr.bf16.mxu0 0
    %1976 = vmatpush2.bf16.msra.mxu0 0
    %1977 = vmatprep.subr.bf16.mxu0 0
    %1978 = vmatpush2.bf16.msra.mxu0 0
    %1979 = vmatprep.mubr.bf16.mxu0 0
    %1980 = vmatmul.mubr.bf16.gmra.mxu0 %v1924
    %v1981 = vpop.f32.mrf.mxu0
    %v1982 = vadd.f32 %v304, %v1981
    %v1983 = vpop.f32.mrf.mxu0
    %v1984 = vpop.f32.mrf.mxu0
    %v1985 = vadd.f32 %v304, %v1984
    %v1986 = vpop.f32.mrf.mxu0
    %1987 = vmatprep.mubr.bf16.mxu0 0
    %1988 = vmatmul.mubr.bf16.gmra.mxu0 %v1927
    %v1989 = vpop.f32.mrf.mxu0
    %v1990 = vadd.f32 %v304, %v1989
    %v1991 = vpop.f32.mrf.mxu0
    %v1992 = vpop.f32.mrf.mxu0
    %v1993 = vadd.f32 %v304, %v1992
    %v1994 = vpop.f32.mrf.mxu0
    %1995 = vmatprep.mubr.bf16.mxu0 0
    %1996 = vmatmul.mubr.bf16.gmra.mxu0 %v1930
    %v1997 = vpop.f32.mrf.mxu0
    %v1998 = vadd.f32 %v304, %v1997
    %v1999 = vpop.f32.mrf.mxu0
    %v2000 = vpop.f32.mrf.mxu0
    %v2001 = vadd.f32 %v304, %v2000
    %v2002 = vpop.f32.mrf.mxu0
    %2003 = vmatprep.mubr.bf16.mxu0 0
    %2004 = vmatmul.mubr.bf16.gmra.mxu0 %v1933
    %v2005 = vpop.f32.mrf.mxu0
    %v2006 = vadd.f32 %v304, %v2005
    %v2007 = vpop.f32.mrf.mxu0
    %v2008 = vpop.f32.mrf.mxu0
    %v2009 = vadd.f32 %v304, %v2008
    %v2010 = vpop.f32.mrf.mxu0
    %2011 = vmatprep.mubr.bf16.mxu0 0
    %2012 = vmatmul.mubr.bf16.gmra.mxu0 %v1936
    %v2013 = vpop.f32.mrf.mxu0
    %v2014 = vadd.f32 %v304, %v2013
    %v2015 = vpop.f32.mrf.mxu0
    %v2016 = vpop.f32.mrf.mxu0
    %v2017 = vadd.f32 %v304, %v2016
    %v2018 = vpop.f32.mrf.mxu0
    %2019 = vmatprep.mubr.bf16.mxu0 0
    %2020 = vmatmul.mubr.bf16.gmra.mxu0 %v1939
    %v2021 = vpop.f32.mrf.mxu0
    %v2022 = vadd.f32 %v304, %v2021
    %v2023 = vpop.f32.mrf.mxu0
    %v2024 = vpop.f32.mrf.mxu0
    %v2025 = vadd.f32 %v304, %v2024
    %v2026 = vpop.f32.mrf.mxu0
    %2027 = vmatprep.mubr.bf16.mxu0 0
    %2028 = vmatmul.mubr.bf16.gmra.mxu0 %v1942
    %v2029 = vpop.f32.mrf.mxu0
    %v2030 = vadd.f32 %v304, %v2029
    %v2031 = vpop.f32.mrf.mxu0
    %v2032 = vpop.f32.mrf.mxu0
    %v2033 = vadd.f32 %v304, %v2032
    %v2034 = vpop.f32.mrf.mxu0
    %2035 = vmatprep.mubr.bf16.mxu0 0
    %2036 = vmatmul.mubr.bf16.gmra.mxu0 %v1945
    %v2037 = vpop.f32.mrf.mxu0
    %v2038 = vadd.f32 %v304, %v2037
    %v2039 = vpop.f32.mrf.mxu0
    %v2040 = vpop.f32.mrf.mxu0
    %v2041 = vadd.f32 %v304, %v2040
    %v2042 = vpop.f32.mrf.mxu0
    %2043 = vdwg.mxu0
    %v2044 = vmax.f32 %v1982, 0.0
    %v2045 = vmax.f32 %v1985, 0.0
    %v2046 = vmax.f32 %v1990, 0.0
    %v2047 = vmax.f32 %v1993, 0.0
    %v2048 = vmax.f32 %v1998, 0.0
    %v2049 = vmax.f32 %v2001, 0.0
    %v2050 = vmax.f32 %v2006, 0.0
    %v2051 = vmax.f32 %v2009, 0.0
    %v2052 = vmax.f32 %v2014, 0.0
    %v2053 = vmax.f32 %v2017, 0.0
    %v2054 = vmax.f32 %v2022, 0.0
    %v2055 = vmax.f32 %v2025, 0.0
    %v2056 = vmax.f32 %v2030, 0.0
    %v2057 = vmax.f32 %v2033, 0.0
    %v2058 = vmax.f32 %v2038, 0.0
    %v2059 = vmax.f32 %v2041, 0.0
    %v2060 = vpack.c.bf16 %v2045, %v2044
    %v2061 = vpack.c.bf16 %v2047, %v2046
    %v2062 = vpack.c.bf16 %v2049, %v2048
    %v2063 = vpack.c.bf16 %v2051, %v2050
    %v2064 = vpack.c.bf16 %v2053, %v2052
    %v2065 = vpack.c.bf16 %v2055, %v2054
    %v2066 = vpack.c.bf16 %v2057, %v2056
    %v2067 = vpack.c.bf16 %v2059, %v2058
    %2068 = vmatprep.subr.bf16.mxu0 %v831
    %2069 = vmatpush1.bf16.msra.mxu0 %v830
    %2070 = vmatprep.subr.bf16.mxu0 %v823
    %2071 = vmatpush1.bf16.msra.mxu0 %v822
    %2072 = vmatprep.subr.bf16.mxu0 %v815
    %2073 = vmatpush1.bf16.msra.mxu0 %v814
    %2074 = vmatprep.subr.bf16.mxu0 %v807
    %2075 = vmatpush1.bf16.msra.mxu0 %v806
    %2076 = vmatprep.subr.bf16.mxu0 %v799
    %2077 = vmatpush1.bf16.msra.mxu0 %v798
    %2078 = vmatprep.subr.bf16.mxu0 %v791
    %2079 = vmatpush1.bf16.msra.mxu0 %v790
    %2080 = vmatprep.subr.bf16.mxu0 %v783
    %2081 = vmatpush1.bf16.msra.mxu0 %v782
    %2082 = vmatprep.subr.bf16.mxu0 %v775
    %2083 = vmatpush1.bf16.msra.mxu0 %v774
    %2084 = vmatprep.subr.bf16.mxu0 0
    %2085 = vmatpush2.bf16.msra.mxu0 0
    %2086 = vmatprep.subr.bf16.mxu0 0
    %2087 = vmatpush2.bf16.msra.mxu0 0
    %2088 = vmatprep.subr.bf16.mxu0 0
    %2089 = vmatpush2.bf16.msra.mxu0 0
    %2090 = vmatprep.subr.bf16.mxu0 0
    %2091 = vmatpush2.bf16.msra.mxu0 0
    %2092 = vmatprep.subr.bf16.mxu0 0
    %2093 = vmatpush2.bf16.msra.mxu0 0
    %2094 = vmatprep.subr.bf16.mxu0 0
    %2095 = vmatpush2.bf16.msra.mxu0 0
    %2096 = vmatprep.subr.bf16.mxu0 0
    %2097 = vmatpush2.bf16.msra.mxu0 0
    %2098 = vmatprep.subr.bf16.mxu0 0
    %2099 = vmatpush2.bf16.msra.mxu0 0
    %2100 = vmatprep.mubr.bf16.mxu0 0
    %2101 = vmatmul.mubr.bf16.gmra.mxu0 %v2060
    %v2102 = vpop.f32.mrf.mxu0
    %v2103 = vadd.f32 %v545, %v2102
    %v2104 = vpop.f32.mrf.mxu0
    %v2105 = vadd.f32 %v549, %v2104
    %v2106 = vpop.f32.mrf.mxu0
    %v2107 = vadd.f32 %v545, %v2106
    %v2108 = vpop.f32.mrf.mxu0
    %v2109 = vadd.f32 %v549, %v2108
    %2110 = vmatprep.mubr.bf16.mxu0 0
    %2111 = vmatmul.mubr.bf16.gmra.mxu0 %v2061
    %v2112 = vpop.f32.mrf.mxu0
    %v2113 = vadd.f32 %v545, %v2112
    %v2114 = vpop.f32.mrf.mxu0
    %v2115 = vadd.f32 %v549, %v2114
    %v2116 = vpop.f32.mrf.mxu0
    %v2117 = vadd.f32 %v545, %v2116
    %v2118 = vpop.f32.mrf.mxu0
    %v2119 = vadd.f32 %v549, %v2118
    %2120 = vmatprep.mubr.bf16.mxu0 0
    %2121 = vmatmul.mubr.bf16.gmra.mxu0 %v2062
    %v2122 = vpop.f32.mrf.mxu0
    %v2123 = vadd.f32 %v545, %v2122
    %v2124 = vpop.f32.mrf.mxu0
    %v2125 = vadd.f32 %v549, %v2124
    %v2126 = vpop.f32.mrf.mxu0
    %v2127 = vadd.f32 %v545, %v2126
    %v2128 = vpop.f32.mrf.mxu0
    %v2129 = vadd.f32 %v549, %v2128
    %2130 = vmatprep.mubr.bf16.mxu0 0
    %2131 = vmatmul.mubr.bf16.gmra.mxu0 %v2063
    %v2132 = vpop.f32.mrf.mxu0
    %v2133 = vadd.f32 %v545, %v2132
    %v2134 = vpop.f32.mrf.mxu0
    %v2135 = vadd.f32 %v549, %v2134
    %v2136 = vpop.f32.mrf.mxu0
    %v2137 = vadd.f32 %v545, %v2136
    %v2138 = vpop.f32.mrf.mxu0
    %v2139 = vadd.f32 %v549, %v2138
    %2140 = vmatprep.mubr.bf16.mxu0 0
    %2141 = vmatmul.mubr.bf16.gmra.mxu0 %v2064
    %v2142 = vpop.f32.mrf.mxu0
    %v2143 = vadd.f32 %v545, %v2142
    %v2144 = vpop.f32.mrf.mxu0
    %v2145 = vadd.f32 %v549, %v2144
    %v2146 = vpop.f32.mrf.mxu0
    %v2147 = vadd.f32 %v545, %v2146
    %v2148 = vpop.f32.mrf.mxu0
    %v2149 = vadd.f32 %v549, %v2148
    %2150 = vmatprep.mubr.bf16.mxu0 0
    %2151 = vmatmul.mubr.bf16.gmra.mxu0 %v2065
    %v2152 = vpop.f32.mrf.mxu0
    %v2153 = vadd.f32 %v545, %v2152
    %v2154 = vpop.f32.mrf.mxu0
    %v2155 = vadd.f32 %v549, %v2154
    %v2156 = vpop.f32.mrf.mxu0
    %v2157 = vadd.f32 %v545, %v2156
    %v2158 = vpop.f32.mrf.mxu0
    %v2159 = vadd.f32 %v549, %v2158
    %2160 = vmatprep.mubr.bf16.mxu0 0
    %2161 = vmatmul.mubr.bf16.gmra.mxu0 %v2066
    %v2162 = vpop.f32.mrf.mxu0
    %v2163 = vadd.f32 %v545, %v2162
    %v2164 = vpop.f32.mrf.mxu0
    %v2165 = vadd.f32 %v549, %v2164
    %v2166 = vpop.f32.mrf.mxu0
    %v2167 = vadd.f32 %v545, %v2166
    %v2168 = vpop.f32.mrf.mxu0
    %v2169 = vadd.f32 %v549, %v2168
    %2170 = vmatprep.mubr.bf16.mxu0 0
    %2171 = vmatmul.mubr.bf16.gmra.mxu0 %v2067
    %v2172 = vpop.f32.mrf.mxu0
    %v2173 = vadd.f32 %v545, %v2172
    %v2174 = vpop.f32.mrf.mxu0
    %v2175 = vadd.f32 %v549, %v2174
    %v2176 = vpop.f32.mrf.mxu0
    %v2177 = vadd.f32 %v545, %v2176
    %v2178 = vpop.f32.mrf.mxu0
    %v2179 = vadd.f32 %v549, %v2178
    %2180 = vdwg.mxu0
    %2181 = vmatprep.subr.bf16.mxu0 %v833
    %2182 = vmatpush1.bf16.msra.mxu0 %v832
    %2183 = vmatprep.subr.bf16.mxu0 %v825
    %2184 = vmatpush1.bf16.msra.mxu0 %v824
    %2185 = vmatprep.subr.bf16.mxu0 %v817
    %2186 = vmatpush1.bf16.msra.mxu0 %v816
    %2187 = vmatprep.subr.bf16.mxu0 %v809
    %2188 = vmatpush1.bf16.msra.mxu0 %v808
    %2189 = vmatprep.subr.bf16.mxu0 %v801
    %2190 = vmatpush1.bf16.msra.mxu0 %v800
    %2191 = vmatprep.subr.bf16.mxu0 %v793
    %2192 = vmatpush1.bf16.msra.mxu0 %v792
    %2193 = vmatprep.subr.bf16.mxu0 %v785
    %2194 = vmatpush1.bf16.msra.mxu0 %v784
    %2195 = vmatprep.subr.bf16.mxu0 %v777
    %2196 = vmatpush1.bf16.msra.mxu0 %v776
    %2197 = vmatprep.subr.bf16.mxu0 0
    %2198 = vmatpush2.bf16.msra.mxu0 0
    %2199 = vmatprep.subr.bf16.mxu0 0
    %2200 = vmatpush2.bf16.msra.mxu0 0
    %2201 = vmatprep.subr.bf16.mxu0 0
    %2202 = vmatpush2.bf16.msra.mxu0 0
    %2203 = vmatprep.subr.bf16.mxu0 0
    %2204 = vmatpush2.bf16.msra.mxu0 0
    %2205 = vmatprep.subr.bf16.mxu0 0
    %2206 = vmatpush2.bf16.msra.mxu0 0
    %2207 = vmatprep.subr.bf16.mxu0 0
    %2208 = vmatpush2.bf16.msra.mxu0 0
    %2209 = vmatprep.subr.bf16.mxu0 0
    %2210 = vmatpush2.bf16.msra.mxu0 0
    %2211 = vmatprep.subr.bf16.mxu0 0
    %2212 = vmatpush2.bf16.msra.mxu0 0
    %2213 = vmatprep.mubr.bf16.mxu0 0
    %2214 = vmatmul.mubr.bf16.gmra.mxu0 %v2060
    %v2215 = vpop.f32.mrf.mxu0
    %v2216 = vadd.f32 %v553, %v2215
    %v2217 = vpop.f32.mrf.mxu0
    %v2218 = vadd.f32 %v557, %v2217
    %v2219 = vpop.f32.mrf.mxu0
    %v2220 = vadd.f32 %v553, %v2219
    %v2221 = vpop.f32.mrf.mxu0
    %v2222 = vadd.f32 %v557, %v2221
    %2223 = vmatprep.mubr.bf16.mxu0 0
    %2224 = vmatmul.mubr.bf16.gmra.mxu0 %v2061
    %v2225 = vpop.f32.mrf.mxu0
    %v2226 = vadd.f32 %v553, %v2225
    %v2227 = vpop.f32.mrf.mxu0
    %v2228 = vadd.f32 %v557, %v2227
    %v2229 = vpop.f32.mrf.mxu0
    %v2230 = vadd.f32 %v553, %v2229
    %v2231 = vpop.f32.mrf.mxu0
    %v2232 = vadd.f32 %v557, %v2231
    %2233 = vmatprep.mubr.bf16.mxu0 0
    %2234 = vmatmul.mubr.bf16.gmra.mxu0 %v2062
    %v2235 = vpop.f32.mrf.mxu0
    %v2236 = vadd.f32 %v553, %v2235
    %v2237 = vpop.f32.mrf.mxu0
    %v2238 = vadd.f32 %v557, %v2237
    %v2239 = vpop.f32.mrf.mxu0
    %v2240 = vadd.f32 %v553, %v2239
    %v2241 = vpop.f32.mrf.mxu0
    %v2242 = vadd.f32 %v557, %v2241
    %2243 = vmatprep.mubr.bf16.mxu0 0
    %2244 = vmatmul.mubr.bf16.gmra.mxu0 %v2063
    %v2245 = vpop.f32.mrf.mxu0
    %v2246 = vadd.f32 %v553, %v2245
    %v2247 = vpop.f32.mrf.mxu0
    %v2248 = vadd.f32 %v557, %v2247
    %v2249 = vpop.f32.mrf.mxu0
    %v2250 = vadd.f32 %v553, %v2249
    %v2251 = vpop.f32.mrf.mxu0
    %v2252 = vadd.f32 %v557, %v2251
    %2253 = vmatprep.mubr.bf16.mxu0 0
    %2254 = vmatmul.mubr.bf16.gmra.mxu0 %v2064
    %v2255 = vpop.f32.mrf.mxu0
    %v2256 = vadd.f32 %v553, %v2255
    %v2257 = vpop.f32.mrf.mxu0
    %v2258 = vadd.f32 %v557, %v2257
    %v2259 = vpop.f32.mrf.mxu0
    %v2260 = vadd.f32 %v553, %v2259
    %v2261 = vpop.f32.mrf.mxu0
    %v2262 = vadd.f32 %v557, %v2261
    %2263 = vmatprep.mubr.bf16.mxu0 0
    %2264 = vmatmul.mubr.bf16.gmra.mxu0 %v2065
    %v2265 = vpop.f32.mrf.mxu0
    %v2266 = vadd.f32 %v553, %v2265
    %v2267 = vpop.f32.mrf.mxu0
    %v2268 = vadd.f32 %v557, %v2267
    %v2269 = vpop.f32.mrf.mxu0
    %v2270 = vadd.f32 %v553, %v2269
    %v2271 = vpop.f32.mrf.mxu0
    %v2272 = vadd.f32 %v557, %v2271
    %2273 = vmatprep.mubr.bf16.mxu0 0
    %2274 = vmatmul.mubr.bf16.gmra.mxu0 %v2066
    %v2275 = vpop.f32.mrf.mxu0
    %v2276 = vadd.f32 %v553, %v2275
    %v2277 = vpop.f32.mrf.mxu0
    %v2278 = vadd.f32 %v557, %v2277
    %v2279 = vpop.f32.mrf.mxu0
    %v2280 = vadd.f32 %v553, %v2279
    %v2281 = vpop.f32.mrf.mxu0
    %v2282 = vadd.f32 %v557, %v2281
    %2283 = vmatprep.mubr.bf16.mxu0 0
    %2284 = vmatmul.mubr.bf16.gmra.mxu0 %v2067
    %v2285 = vpop.f32.mrf.mxu0
    %v2286 = vadd.f32 %v553, %v2285
    %v2287 = vpop.f32.mrf.mxu0
    %v2288 = vadd.f32 %v557, %v2287
    %v2289 = vpop.f32.mrf.mxu0
    %v2290 = vadd.f32 %v553, %v2289
    %v2291 = vpop.f32.mrf.mxu0
    %v2292 = vadd.f32 %v557, %v2291
    %2293 = vdwg.mxu0
    %2294 = vmatprep.subr.bf16.mxu0 %v835
    %2295 = vmatpush1.bf16.msra.mxu0 %v834
    %2296 = vmatprep.subr.bf16.mxu0 %v827
    %2297 = vmatpush1.bf16.msra.mxu0 %v826
    %2298 = vmatprep.subr.bf16.mxu0 %v819
    %2299 = vmatpush1.bf16.msra.mxu0 %v818
    %2300 = vmatprep.subr.bf16.mxu0 %v811
    %2301 = vmatpush1.bf16.msra.mxu0 %v810
    %2302 = vmatprep.subr.bf16.mxu0 %v803
    %2303 = vmatpush1.bf16.msra.mxu0 %v802
    %2304 = vmatprep.subr.bf16.mxu0 %v795
    %2305 = vmatpush1.bf16.msra.mxu0 %v794
    %2306 = vmatprep.subr.bf16.mxu0 %v787
    %2307 = vmatpush1.bf16.msra.mxu0 %v786
    %2308 = vmatprep.subr.bf16.mxu0 %v779
    %2309 = vmatpush1.bf16.msra.mxu0 %v778
    %2310 = vmatprep.subr.bf16.mxu0 0
    %2311 = vmatpush2.bf16.msra.mxu0 0
    %2312 = vmatprep.subr.bf16.mxu0 0
    %2313 = vmatpush2.bf16.msra.mxu0 0
    %2314 = vmatprep.subr.bf16.mxu0 0
    %2315 = vmatpush2.bf16.msra.mxu0 0
    %2316 = vmatprep.subr.bf16.mxu0 0
    %2317 = vmatpush2.bf16.msra.mxu0 0
    %2318 = vmatprep.subr.bf16.mxu0 0
    %2319 = vmatpush2.bf16.msra.mxu0 0
    %2320 = vmatprep.subr.bf16.mxu0 0
    %2321 = vmatpush2.bf16.msra.mxu0 0
    %2322 = vmatprep.subr.bf16.mxu0 0
    %2323 = vmatpush2.bf16.msra.mxu0 0
    %2324 = vmatprep.subr.bf16.mxu0 0
    %2325 = vmatpush2.bf16.msra.mxu0 0
    %2326 = vmatprep.mubr.bf16.mxu0 0
    %2327 = vmatmul.mubr.bf16.gmra.mxu0 %v2060
    %v2328 = vpop.f32.mrf.mxu0
    %v2329 = vadd.f32 %v561, %v2328
    %v2330 = vpop.f32.mrf.mxu0
    %v2331 = vadd.f32 %v565, %v2330
    %v2332 = vpop.f32.mrf.mxu0
    %v2333 = vadd.f32 %v561, %v2332
    %v2334 = vpop.f32.mrf.mxu0
    %v2335 = vadd.f32 %v565, %v2334
    %2336 = vmatprep.mubr.bf16.mxu0 0
    %2337 = vmatmul.mubr.bf16.gmra.mxu0 %v2061
    %v2338 = vpop.f32.mrf.mxu0
    %v2339 = vadd.f32 %v561, %v2338
    %v2340 = vpop.f32.mrf.mxu0
    %v2341 = vadd.f32 %v565, %v2340
    %v2342 = vpop.f32.mrf.mxu0
    %v2343 = vadd.f32 %v561, %v2342
    %v2344 = vpop.f32.mrf.mxu0
    %v2345 = vadd.f32 %v565, %v2344
    %2346 = vmatprep.mubr.bf16.mxu0 0
    %2347 = vmatmul.mubr.bf16.gmra.mxu0 %v2062
    %v2348 = vpop.f32.mrf.mxu0
    %v2349 = vadd.f32 %v561, %v2348
    %v2350 = vpop.f32.mrf.mxu0
    %v2351 = vadd.f32 %v565, %v2350
    %v2352 = vpop.f32.mrf.mxu0
    %v2353 = vadd.f32 %v561, %v2352
    %v2354 = vpop.f32.mrf.mxu0
    %v2355 = vadd.f32 %v565, %v2354
    %2356 = vmatprep.mubr.bf16.mxu0 0
    %2357 = vmatmul.mubr.bf16.gmra.mxu0 %v2063
    %v2358 = vpop.f32.mrf.mxu0
    %v2359 = vadd.f32 %v561, %v2358
    %v2360 = vpop.f32.mrf.mxu0
    %v2361 = vadd.f32 %v565, %v2360
    %v2362 = vpop.f32.mrf.mxu0
    %v2363 = vadd.f32 %v561, %v2362
    %v2364 = vpop.f32.mrf.mxu0
    %v2365 = vadd.f32 %v565, %v2364
    %2366 = vmatprep.mubr.bf16.mxu0 0
    %2367 = vmatmul.mubr.bf16.gmra.mxu0 %v2064
    %v2368 = vpop.f32.mrf.mxu0
    %v2369 = vadd.f32 %v561, %v2368
    %v2370 = vpop.f32.mrf.mxu0
    %v2371 = vadd.f32 %v565, %v2370
    %v2372 = vpop.f32.mrf.mxu0
    %v2373 = vadd.f32 %v561, %v2372
    %v2374 = vpop.f32.mrf.mxu0
    %v2375 = vadd.f32 %v565, %v2374
    %2376 = vmatprep.mubr.bf16.mxu0 0
    %2377 = vmatmul.mubr.bf16.gmra.mxu0 %v2065
    %v2378 = vpop.f32.mrf.mxu0
    %v2379 = vadd.f32 %v561, %v2378
    %v2380 = vpop.f32.mrf.mxu0
    %v2381 = vadd.f32 %v565, %v2380
    %v2382 = vpop.f32.mrf.mxu0
    %v2383 = vadd.f32 %v561, %v2382
    %v2384 = vpop.f32.mrf.mxu0
    %v2385 = vadd.f32 %v565, %v2384
    %2386 = vmatprep.mubr.bf16.mxu0 0
    %2387 = vmatmul.mubr.bf16.gmra.mxu0 %v2066
    %v2388 = vpop.f32.mrf.mxu0
    %v2389 = vadd.f32 %v561, %v2388
    %v2390 = vpop.f32.mrf.mxu0
    %v2391 = vadd.f32 %v565, %v2390
    %v2392 = vpop.f32.mrf.mxu0
    %v2393 = vadd.f32 %v561, %v2392
    %v2394 = vpop.f32.mrf.mxu0
    %v2395 = vadd.f32 %v565, %v2394
    %2396 = vmatprep.mubr.bf16.mxu0 0
    %2397 = vmatmul.mubr.bf16.gmra.mxu0 %v2067
    %v2398 = vpop.f32.mrf.mxu0
    %v2399 = vadd.f32 %v561, %v2398
    %v2400 = vpop.f32.mrf.mxu0
    %v2401 = vadd.f32 %v565, %v2400
    %v2402 = vpop.f32.mrf.mxu0
    %v2403 = vadd.f32 %v561, %v2402
    %v2404 = vpop.f32.mrf.mxu0
    %v2405 = vadd.f32 %v565, %v2404
    %2406 = vdwg.mxu0
    %2407 = vmatprep.subr.bf16.mxu0 %v837
    %2408 = vmatpush1.bf16.msra.mxu0 %v836
    %2409 = vmatprep.subr.bf16.mxu0 %v829
    %2410 = vmatpush1.bf16.msra.mxu0 %v828
    %2411 = vmatprep.subr.bf16.mxu0 %v821
    %2412 = vmatpush1.bf16.msra.mxu0 %v820
    %2413 = vmatprep.subr.bf16.mxu0 %v813
    %2414 = vmatpush1.bf16.msra.mxu0 %v812
    %2415 = vmatprep.subr.bf16.mxu0 %v805
    %2416 = vmatpush1.bf16.msra.mxu0 %v804
    %2417 = vmatprep.subr.bf16.mxu0 %v797
    %2418 = vmatpush1.bf16.msra.mxu0 %v796
    %2419 = vmatprep.subr.bf16.mxu0 %v789
    %2420 = vmatpush1.bf16.msra.mxu0 %v788
    %2421 = vmatprep.subr.bf16.mxu0 %v781
    %2422 = vmatpush1.bf16.msra.mxu0 %v780
    %2423 = vmatprep.subr.bf16.mxu0 0
    %2424 = vmatpush2.bf16.msra.mxu0 0
    %2425 = vmatprep.subr.bf16.mxu0 0
    %2426 = vmatpush2.bf16.msra.mxu0 0
    %2427 = vmatprep.subr.bf16.mxu0 0
    %2428 = vmatpush2.bf16.msra.mxu0 0
    %2429 = vmatprep.subr.bf16.mxu0 0
    %2430 = vmatpush2.bf16.msra.mxu0 0
    %2431 = vmatprep.subr.bf16.mxu0 0
    %2432 = vmatpush2.bf16.msra.mxu0 0
    %2433 = vmatprep.subr.bf16.mxu0 0
    %2434 = vmatpush2.bf16.msra.mxu0 0
    %2435 = vmatprep.subr.bf16.mxu0 0
    %2436 = vmatpush2.bf16.msra.mxu0 0
    %2437 = vmatprep.subr.bf16.mxu0 0
    %2438 = vmatpush2.bf16.msra.mxu0 0
    %2439 = vmatprep.mubr.bf16.mxu0 0
    %2440 = vmatmul.mubr.bf16.gmra.mxu0 %v2060
    %v2441 = vpop.f32.mrf.mxu0
    %v2442 = vadd.f32 %v569, %v2441
    %v2443 = vpop.f32.mrf.mxu0
    %v2444 = vadd.f32 %v573, %v2443
    %v2445 = vpop.f32.mrf.mxu0
    %v2446 = vadd.f32 %v569, %v2445
    %v2447 = vpop.f32.mrf.mxu0
    %v2448 = vadd.f32 %v573, %v2447
    %2449 = vmatprep.mubr.bf16.mxu0 0
    %2450 = vmatmul.mubr.bf16.gmra.mxu0 %v2061
    %v2451 = vpop.f32.mrf.mxu0
    %v2452 = vadd.f32 %v569, %v2451
    %v2453 = vpop.f32.mrf.mxu0
    %v2454 = vadd.f32 %v573, %v2453
    %v2455 = vpop.f32.mrf.mxu0
    %v2456 = vadd.f32 %v569, %v2455
    %v2457 = vpop.f32.mrf.mxu0
    %v2458 = vadd.f32 %v573, %v2457
    %2459 = vmatprep.mubr.bf16.mxu0 0
    %2460 = vmatmul.mubr.bf16.gmra.mxu0 %v2062
    %v2461 = vpop.f32.mrf.mxu0
    %v2462 = vadd.f32 %v569, %v2461
    %v2463 = vpop.f32.mrf.mxu0
    %v2464 = vadd.f32 %v573, %v2463
    %v2465 = vpop.f32.mrf.mxu0
    %v2466 = vadd.f32 %v569, %v2465
    %v2467 = vpop.f32.mrf.mxu0
    %v2468 = vadd.f32 %v573, %v2467
    %2469 = vmatprep.mubr.bf16.mxu0 0
    %2470 = vmatmul.mubr.bf16.gmra.mxu0 %v2063
    %v2471 = vpop.f32.mrf.mxu0
    %v2472 = vadd.f32 %v569, %v2471
    %v2473 = vpop.f32.mrf.mxu0
    %v2474 = vadd.f32 %v573, %v2473
    %v2475 = vpop.f32.mrf.mxu0
    %v2476 = vadd.f32 %v569, %v2475
    %v2477 = vpop.f32.mrf.mxu0
    %v2478 = vadd.f32 %v573, %v2477
    %2479 = vmatprep.mubr.bf16.mxu0 0
    %2480 = vmatmul.mubr.bf16.gmra.mxu0 %v2064
    %v2481 = vpop.f32.mrf.mxu0
    %v2482 = vadd.f32 %v569, %v2481
    %v2483 = vpop.f32.mrf.mxu0
    %v2484 = vadd.f32 %v573, %v2483
    %v2485 = vpop.f32.mrf.mxu0
    %v2486 = vadd.f32 %v569, %v2485
    %v2487 = vpop.f32.mrf.mxu0
    %v2488 = vadd.f32 %v573, %v2487
    %2489 = vmatprep.mubr.bf16.mxu0 0
    %2490 = vmatmul.mubr.bf16.gmra.mxu0 %v2065
    %v2491 = vpop.f32.mrf.mxu0
    %v2492 = vadd.f32 %v569, %v2491
    %v2493 = vpop.f32.mrf.mxu0
    %v2494 = vadd.f32 %v573, %v2493
    %v2495 = vpop.f32.mrf.mxu0
    %v2496 = vadd.f32 %v569, %v2495
    %v2497 = vpop.f32.mrf.mxu0
    %v2498 = vadd.f32 %v573, %v2497
    %2499 = vmatprep.mubr.bf16.mxu0 0
    %2500 = vmatmul.mubr.bf16.gmra.mxu0 %v2066
    %v2501 = vpop.f32.mrf.mxu0
    %v2502 = vadd.f32 %v569, %v2501
    %v2503 = vpop.f32.mrf.mxu0
    %v2504 = vadd.f32 %v573, %v2503
    %v2505 = vpop.f32.mrf.mxu0
    %v2506 = vadd.f32 %v569, %v2505
    %v2507 = vpop.f32.mrf.mxu0
    %v2508 = vadd.f32 %v573, %v2507
    %2509 = vmatprep.mubr.bf16.mxu0 0
    %2510 = vmatmul.mubr.bf16.gmra.mxu0 %v2067
    %v2511 = vpop.f32.mrf.mxu0
    %v2512 = vadd.f32 %v569, %v2511
    %v2513 = vpop.f32.mrf.mxu0
    %v2514 = vadd.f32 %v573, %v2513
    %v2515 = vpop.f32.mrf.mxu0
    %v2516 = vadd.f32 %v569, %v2515
    %v2517 = vpop.f32.mrf.mxu0
    %v2518 = vadd.f32 %v573, %v2517
    %2519 = vdwg.mxu0
    %v2520 = vmax.f32 %v2103, 0.0
    %v2521 = vmax.f32 %v2105, 0.0
    %v2522 = vmax.f32 %v2216, 0.0
    %v2523 = vmax.f32 %v2218, 0.0
    %v2524 = vmax.f32 %v2329, 0.0
    %v2525 = vmax.f32 %v2331, 0.0
    %v2526 = vmax.f32 %v2442, 0.0
    %v2527 = vmax.f32 %v2444, 0.0
    %v2528 = vmax.f32 %v2107, 0.0
    %v2529 = vmax.f32 %v2109, 0.0
    %v2530 = vmax.f32 %v2220, 0.0
    %v2531 = vmax.f32 %v2222, 0.0
    %v2532 = vmax.f32 %v2333, 0.0
    %v2533 = vmax.f32 %v2335, 0.0
    %v2534 = vmax.f32 %v2446, 0.0
    %v2535 = vmax.f32 %v2448, 0.0
    %v2536 = vmax.f32 %v2113, 0.0
    %v2537 = vmax.f32 %v2115, 0.0
    %v2538 = vmax.f32 %v2226, 0.0
    %v2539 = vmax.f32 %v2228, 0.0
    %v2540 = vmax.f32 %v2339, 0.0
    %v2541 = vmax.f32 %v2341, 0.0
    %v2542 = vmax.f32 %v2452, 0.0
    %v2543 = vmax.f32 %v2454, 0.0
    %v2544 = vmax.f32 %v2117, 0.0
    %v2545 = vmax.f32 %v2119, 0.0
    %v2546 = vmax.f32 %v2230, 0.0
    %v2547 = vmax.f32 %v2232, 0.0
    %v2548 = vmax.f32 %v2343, 0.0
    %v2549 = vmax.f32 %v2345, 0.0
    %v2550 = vmax.f32 %v2456, 0.0
    %v2551 = vmax.f32 %v2458, 0.0
    %v2552 = vmax.f32 %v2123, 0.0
    %v2553 = vmax.f32 %v2125, 0.0
    %v2554 = vmax.f32 %v2236, 0.0
    %v2555 = vmax.f32 %v2238, 0.0
    %v2556 = vmax.f32 %v2349, 0.0
    %v2557 = vmax.f32 %v2351, 0.0
    %v2558 = vmax.f32 %v2462, 0.0
    %v2559 = vmax.f32 %v2464, 0.0
    %v2560 = vmax.f32 %v2127, 0.0
    %v2561 = vmax.f32 %v2129, 0.0
    %v2562 = vmax.f32 %v2240, 0.0
    %v2563 = vmax.f32 %v2242, 0.0
    %v2564 = vmax.f32 %v2353, 0.0
    %v2565 = vmax.f32 %v2355, 0.0
    %v2566 = vmax.f32 %v2466, 0.0
    %v2567 = vmax.f32 %v2468, 0.0
    %v2568 = vmax.f32 %v2133, 0.0
    %v2569 = vmax.f32 %v2135, 0.0
    %v2570 = vmax.f32 %v2246, 0.0
    %v2571 = vmax.f32 %v2248, 0.0
    %v2572 = vmax.f32 %v2359, 0.0
    %v2573 = vmax.f32 %v2361, 0.0
    %v2574 = vmax.f32 %v2472, 0.0
    %v2575 = vmax.f32 %v2474, 0.0
    %v2576 = vmax.f32 %v2137, 0.0
    %v2577 = vmax.f32 %v2139, 0.0
    %v2578 = vmax.f32 %v2250, 0.0
    %v2579 = vmax.f32 %v2252, 0.0
    %v2580 = vmax.f32 %v2363, 0.0
    %v2581 = vmax.f32 %v2365, 0.0
    %v2582 = vmax.f32 %v2476, 0.0
    %v2583 = vmax.f32 %v2478, 0.0
    %v2584 = vmax.f32 %v2143, 0.0
    %v2585 = vmax.f32 %v2145, 0.0
    %v2586 = vmax.f32 %v2256, 0.0
    %v2587 = vmax.f32 %v2258, 0.0
    %v2588 = vmax.f32 %v2369, 0.0
    %v2589 = vmax.f32 %v2371, 0.0
    %v2590 = vmax.f32 %v2482, 0.0
    %v2591 = vmax.f32 %v2484, 0.0
    %v2592 = vmax.f32 %v2147, 0.0
    %v2593 = vmax.f32 %v2149, 0.0
    %v2594 = vmax.f32 %v2260, 0.0
    %v2595 = vmax.f32 %v2262, 0.0
    %v2596 = vmax.f32 %v2373, 0.0
    %v2597 = vmax.f32 %v2375, 0.0
    %v2598 = vmax.f32 %v2486, 0.0
    %v2599 = vmax.f32 %v2488, 0.0
    %v2600 = vmax.f32 %v2153, 0.0
    %v2601 = vmax.f32 %v2155, 0.0
    %v2602 = vmax.f32 %v2266, 0.0
    %v2603 = vmax.f32 %v2268, 0.0
    %v2604 = vmax.f32 %v2379, 0.0
    %v2605 = vmax.f32 %v2381, 0.0
    %v2606 = vmax.f32 %v2492, 0.0
    %v2607 = vmax.f32 %v2494, 0.0
    %v2608 = vmax.f32 %v2157, 0.0
    %v2609 = vmax.f32 %v2159, 0.0
    %v2610 = vmax.f32 %v2270, 0.0
    %v2611 = vmax.f32 %v2272, 0.0
    %v2612 = vmax.f32 %v2383, 0.0
    %v2613 = vmax.f32 %v2385, 0.0
    %v2614 = vmax.f32 %v2496, 0.0
    %v2615 = vmax.f32 %v2498, 0.0
    %v2616 = vmax.f32 %v2163, 0.0
    %v2617 = vmax.f32 %v2165, 0.0
    %v2618 = vmax.f32 %v2276, 0.0
    %v2619 = vmax.f32 %v2278, 0.0
    %v2620 = vmax.f32 %v2389, 0.0
    %v2621 = vmax.f32 %v2391, 0.0
    %v2622 = vmax.f32 %v2502, 0.0
    %v2623 = vmax.f32 %v2504, 0.0
    %v2624 = vmax.f32 %v2167, 0.0
    %v2625 = vmax.f32 %v2169, 0.0
    %v2626 = vmax.f32 %v2280, 0.0
    %v2627 = vmax.f32 %v2282, 0.0
    %v2628 = vmax.f32 %v2393, 0.0
    %v2629 = vmax.f32 %v2395, 0.0
    %v2630 = vmax.f32 %v2506, 0.0
    %v2631 = vmax.f32 %v2508, 0.0
    %v2632 = vmax.f32 %v2173, 0.0
    %v2633 = vmax.f32 %v2175, 0.0
    %v2634 = vmax.f32 %v2286, 0.0
    %v2635 = vmax.f32 %v2288, 0.0
    %v2636 = vmax.f32 %v2399, 0.0
    %v2637 = vmax.f32 %v2401, 0.0
    %v2638 = vmax.f32 %v2512, 0.0
    %v2639 = vmax.f32 %v2514, 0.0
    %v2640 = vmax.f32 %v2177, 0.0
    %v2641 = vmax.f32 %v2179, 0.0
    %v2642 = vmax.f32 %v2290, 0.0
    %v2643 = vmax.f32 %v2292, 0.0
    %v2644 = vmax.f32 %v2403, 0.0
    %v2645 = vmax.f32 %v2405, 0.0
    %v2646 = vmax.f32 %v2516, 0.0
    %v2647 = vmax.f32 %v2518, 0.0
    %v2648 = vmax.f32 %v2520, %v2528
    %v2649 = vmax.f32 %v2648, %v2536
    %v2650 = vmax.f32 %v2649, %v2544
    %v2651 = vmax.f32 %v2650, %v2552
    %v2652 = vmax.f32 %v2651, %v2560
    %v2653 = vmax.f32 %v2652, %v2568
    %v2654 = vmax.f32 %v2653, %v2576
    %v2655 = vrot.slane %v2654, 4
    %v2656 = vmax.f32 %v2654, %v2655
    %v2657 = vrot.slane %v2656, 2
    %v2658 = vmax.f32 %v2656, %v2657
    %v2659 = vrot.slane %v2658, 1
    %v2660 = vmax.f32 %v2658, %v2659
    %v2661 = vmax.f32 %v2521, %v2529
    %v2662 = vmax.f32 %v2661, %v2537
    %v2663 = vmax.f32 %v2662, %v2545
    %v2664 = vmax.f32 %v2663, %v2553
    %v2665 = vmax.f32 %v2664, %v2561
    %v2666 = vmax.f32 %v2665, %v2569
    %v2667 = vmax.f32 %v2666, %v2577
    %v2668 = vrot.slane %v2667, 4
    %v2669 = vmax.f32 %v2667, %v2668
    %v2670 = vrot.slane %v2669, 2
    %v2671 = vmax.f32 %v2669, %v2670
    %v2672 = vrot.slane %v2671, 1
    %v2673 = vmax.f32 %v2671, %v2672
    %v2674 = vmax.f32 %v2522, %v2530
    %v2675 = vmax.f32 %v2674, %v2538
    %v2676 = vmax.f32 %v2675, %v2546
    %v2677 = vmax.f32 %v2676, %v2554
    %v2678 = vmax.f32 %v2677, %v2562
    %v2679 = vmax.f32 %v2678, %v2570
    %v2680 = vmax.f32 %v2679, %v2578
    %v2681 = vrot.slane %v2680, 4
    %v2682 = vmax.f32 %v2680, %v2681
    %v2683 = vrot.slane %v2682, 2
    %v2684 = vmax.f32 %v2682, %v2683
    %v2685 = vrot.slane %v2684, 1
    %v2686 = vmax.f32 %v2684, %v2685
    %v2687 = vmax.f32 %v2523, %v2531
    %v2688 = vmax.f32 %v2687, %v2539
    %v2689 = vmax.f32 %v2688, %v2547
    %v2690 = vmax.f32 %v2689, %v2555
    %v2691 = vmax.f32 %v2690, %v2563
    %v2692 = vmax.f32 %v2691, %v2571
    %v2693 = vmax.f32 %v2692, %v2579
    %v2694 = vrot.slane %v2693, 4
    %v2695 = vmax.f32 %v2693, %v2694
    %v2696 = vrot.slane %v2695, 2
    %v2697 = vmax.f32 %v2695, %v2696
    %v2698 = vrot.slane %v2697, 1
    %v2699 = vmax.f32 %v2697, %v2698
    %v2700 = vmax.f32 %v2524, %v2532
    %v2701 = vmax.f32 %v2700, %v2540
    %v2702 = vmax.f32 %v2701, %v2548
    %v2703 = vmax.f32 %v2702, %v2556
    %v2704 = vmax.f32 %v2703, %v2564
    %v2705 = vmax.f32 %v2704, %v2572
    %v2706 = vmax.f32 %v2705, %v2580
    %v2707 = vrot.slane %v2706, 4
    %v2708 = vmax.f32 %v2706, %v2707
    %v2709 = vrot.slane %v2708, 2
    %v2710 = vmax.f32 %v2708, %v2709
    %v2711 = vrot.slane %v2710, 1
    %v2712 = vmax.f32 %v2710, %v2711
    %v2713 = vmax.f32 %v2525, %v2533
    %v2714 = vmax.f32 %v2713, %v2541
    %v2715 = vmax.f32 %v2714, %v2549
    %v2716 = vmax.f32 %v2715, %v2557
    %v2717 = vmax.f32 %v2716, %v2565
    %v2718 = vmax.f32 %v2717, %v2573
    %v2719 = vmax.f32 %v2718, %v2581
    %v2720 = vrot.slane %v2719, 4
    %v2721 = vmax.f32 %v2719, %v2720
    %v2722 = vrot.slane %v2721, 2
    %v2723 = vmax.f32 %v2721, %v2722
    %v2724 = vrot.slane %v2723, 1
    %v2725 = vmax.f32 %v2723, %v2724
    %v2726 = vmax.f32 %v2526, %v2534
    %v2727 = vmax.f32 %v2726, %v2542
    %v2728 = vmax.f32 %v2727, %v2550
    %v2729 = vmax.f32 %v2728, %v2558
    %v2730 = vmax.f32 %v2729, %v2566
    %v2731 = vmax.f32 %v2730, %v2574
    %v2732 = vmax.f32 %v2731, %v2582
    %v2733 = vrot.slane %v2732, 4
    %v2734 = vmax.f32 %v2732, %v2733
    %v2735 = vrot.slane %v2734, 2
    %v2736 = vmax.f32 %v2734, %v2735
    %v2737 = vrot.slane %v2736, 1
    %v2738 = vmax.f32 %v2736, %v2737
    %v2739 = vmax.f32 %v2527, %v2535
    %v2740 = vmax.f32 %v2739, %v2543
    %v2741 = vmax.f32 %v2740, %v2551
    %v2742 = vmax.f32 %v2741, %v2559
    %v2743 = vmax.f32 %v2742, %v2567
    %v2744 = vmax.f32 %v2743, %v2575
    %v2745 = vmax.f32 %v2744, %v2583
    %v2746 = vrot.slane %v2745, 4
    %v2747 = vmax.f32 %v2745, %v2746
    %v2748 = vrot.slane %v2747, 2
    %v2749 = vmax.f32 %v2747, %v2748
    %v2750 = vrot.slane %v2749, 1
    %v2751 = vmax.f32 %v2749, %v2750
    %v2752 = vmax.f32 %v2584, %v2592
    %v2753 = vmax.f32 %v2752, %v2600
    %v2754 = vmax.f32 %v2753, %v2608
    %v2755 = vmax.f32 %v2754, %v2616
    %v2756 = vmax.f32 %v2755, %v2624
    %v2757 = vmax.f32 %v2756, %v2632
    %v2758 = vmax.f32 %v2757, %v2640
    %v2759 = vrot.slane %v2758, 4
    %v2760 = vmax.f32 %v2758, %v2759
    %v2761 = vrot.slane %v2760, 2
    %v2762 = vmax.f32 %v2760, %v2761
    %v2763 = vrot.slane %v2762, 1
    %v2764 = vmax.f32 %v2762, %v2763
    %v2765 = vmax.f32 %v2585, %v2593
    %v2766 = vmax.f32 %v2765, %v2601
    %v2767 = vmax.f32 %v2766, %v2609
    %v2768 = vmax.f32 %v2767, %v2617
    %v2769 = vmax.f32 %v2768, %v2625
    %v2770 = vmax.f32 %v2769, %v2633
    %v2771 = vmax.f32 %v2770, %v2641
    %v2772 = vrot.slane %v2771, 4
    %v2773 = vmax.f32 %v2771, %v2772
    %v2774 = vrot.slane %v2773, 2
    %v2775 = vmax.f32 %v2773, %v2774
    %v2776 = vrot.slane %v2775, 1
    %v2777 = vmax.f32 %v2775, %v2776
    %v2778 = vmax.f32 %v2586, %v2594
    %v2779 = vmax.f32 %v2778, %v2602
    %v2780 = vmax.f32 %v2779, %v2610
    %v2781 = vmax.f32 %v2780, %v2618
    %v2782 = vmax.f32 %v2781, %v2626
    %v2783 = vmax.f32 %v2782, %v2634
    %v2784 = vmax.f32 %v2783, %v2642
    %v2785 = vrot.slane %v2784, 4
    %v2786 = vmax.f32 %v2784, %v2785
    %v2787 = vrot.slane %v2786, 2
    %v2788 = vmax.f32 %v2786, %v2787
    %v2789 = vrot.slane %v2788, 1
    %v2790 = vmax.f32 %v2788, %v2789
    %v2791 = vmax.f32 %v2587, %v2595
    %v2792 = vmax.f32 %v2791, %v2603
    %v2793 = vmax.f32 %v2792, %v2611
    %v2794 = vmax.f32 %v2793, %v2619
    %v2795 = vmax.f32 %v2794, %v2627
    %v2796 = vmax.f32 %v2795, %v2635
    %v2797 = vmax.f32 %v2796, %v2643
    %v2798 = vrot.slane %v2797, 4
    %v2799 = vmax.f32 %v2797, %v2798
    %v2800 = vrot.slane %v2799, 2
    %v2801 = vmax.f32 %v2799, %v2800
    %v2802 = vrot.slane %v2801, 1
    %v2803 = vmax.f32 %v2801, %v2802
    %v2804 = vmax.f32 %v2588, %v2596
    %v2805 = vmax.f32 %v2804, %v2604
    %v2806 = vmax.f32 %v2805, %v2612
    %v2807 = vmax.f32 %v2806, %v2620
    %v2808 = vmax.f32 %v2807, %v2628
    %v2809 = vmax.f32 %v2808, %v2636
    %v2810 = vmax.f32 %v2809, %v2644
    %v2811 = vrot.slane %v2810, 4
    %v2812 = vmax.f32 %v2810, %v2811
    %v2813 = vrot.slane %v2812, 2
    %v2814 = vmax.f32 %v2812, %v2813
    %v2815 = vrot.slane %v2814, 1
    %v2816 = vmax.f32 %v2814, %v2815
    %v2817 = vmax.f32 %v2589, %v2597
    %v2818 = vmax.f32 %v2817, %v2605
    %v2819 = vmax.f32 %v2818, %v2613
    %v2820 = vmax.f32 %v2819, %v2621
    %v2821 = vmax.f32 %v2820, %v2629
    %v2822 = vmax.f32 %v2821, %v2637
    %v2823 = vmax.f32 %v2822, %v2645
    %v2824 = vrot.slane %v2823, 4
    %v2825 = vmax.f32 %v2823, %v2824
    %v2826 = vrot.slane %v2825, 2
    %v2827 = vmax.f32 %v2825, %v2826
    %v2828 = vrot.slane %v2827, 1
    %v2829 = vmax.f32 %v2827, %v2828
    %v2830 = vmax.f32 %v2590, %v2598
    %v2831 = vmax.f32 %v2830, %v2606
    %v2832 = vmax.f32 %v2831, %v2614
    %v2833 = vmax.f32 %v2832, %v2622
    %v2834 = vmax.f32 %v2833, %v2630
    %v2835 = vmax.f32 %v2834, %v2638
    %v2836 = vmax.f32 %v2835, %v2646
    %v2837 = vrot.slane %v2836, 4
    %v2838 = vmax.f32 %v2836, %v2837
    %v2839 = vrot.slane %v2838, 2
    %v2840 = vmax.f32 %v2838, %v2839
    %v2841 = vrot.slane %v2840, 1
    %v2842 = vmax.f32 %v2840, %v2841
    %v2843 = vmax.f32 %v2591, %v2599
    %v2844 = vmax.f32 %v2843, %v2607
    %v2845 = vmax.f32 %v2844, %v2615
    %v2846 = vmax.f32 %v2845, %v2623
    %v2847 = vmax.f32 %v2846, %v2631
    %v2848 = vmax.f32 %v2847, %v2639
    %v2849 = vmax.f32 %v2848, %v2647
    %v2850 = vrot.slane %v2849, 4
    %v2851 = vmax.f32 %v2849, %v2850
    %v2852 = vrot.slane %v2851, 2
    %v2853 = vmax.f32 %v2851, %v2852
    %v2854 = vrot.slane %v2853, 1
    %v2855 = vmax.f32 %v2853, %v2854
    %p2856 = scmp.eq.s32.totalorder 0, 0
    // Predicated region
    $region38: #{tpu_custom_call.1} parent=1 // pred_check
      %p2857 = pneg %p2856
    $region39: #{tpu_custom_call.1} parent=1 // pred_check_branch
      %2859 = sbr.rel (%p2857) target = $region41
    $region40: #{tpu_custom_call.1} parent=1 // pred_region
      %v2876 = vcombine.low %v1494, %v1507
      %v2877 = vcombine.low %v1520, %v1533
      %v2879 = vunpack.c.l.s4 1983009808
      %v2880 = vunpack.c.0.s8 %v2879
      %v2881 = vlaneseq
      %v2882 = vshrl.u32 %v2881, 7
      %v2883 = vsub.s32 %v2880, %v2882
      %v2884 = vrot.slane %v2876, %v2883
      %v2886 = vunpack.c.l.s4 1983009808
      %v2887 = vunpack.c.0.s8 %v2886
      %v2888 = vlaneseq
      %v2889 = vshrl.u32 %v2888, 7
      %v2890 = vsub.s32 %v2887, %v2889
      %v2891 = vrot.slane %v2877, %v2890
      %v2892 = vcombine.low %v2884, %v2891
      %v2893 = vcombine.low %v1546, %v1559
      %v2894 = vcombine.low %v1572, %v1585
      %v2896 = vunpack.c.l.s4 1983009808
      %v2897 = vunpack.c.0.s8 %v2896
      %v2898 = vlaneseq
      %v2899 = vshrl.u32 %v2898, 7
      %v2900 = vsub.s32 %v2897, %v2899
      %v2901 = vrot.slane %v2893, %v2900
      %v2903 = vunpack.c.l.s4 1983009808
      %v2904 = vunpack.c.0.s8 %v2903
      %v2905 = vlaneseq
      %v2906 = vshrl.u32 %v2905, 7
      %v2907 = vsub.s32 %v2904, %v2906
      %v2908 = vrot.slane %v2894, %v2907
      %v2909 = vcombine.low %v2901, %v2908
      %v2910 = vcombine.low %v1598, %v1611
      %v2911 = vcombine.low %v1624, %v1637
      %v2913 = vunpack.c.l.s4 1983009808
      %v2914 = vunpack.c.0.s8 %v2913
      %v2915 = vlaneseq
      %v2916 = vshrl.u32 %v2915, 7
      %v2917 = vsub.s32 %v2914, %v2916
      %v2918 = vrot.slane %v2910, %v2917
      %v2920 = vunpack.c.l.s4 1983009808
      %v2921 = vunpack.c.0.s8 %v2920
      %v2922 = vlaneseq
      %v2923 = vshrl.u32 %v2922, 7
      %v2924 = vsub.s32 %v2921, %v2923
      %v2925 = vrot.slane %v2911, %v2924
      %v2926 = vcombine.low %v2918, %v2925
      %v2927 = vcombine.low %v1650, %v1663
      %v2928 = vcombine.low %v1676, %v1689
      %v2930 = vunpack.c.l.s4 1983009808
      %v2931 = vunpack.c.0.s8 %v2930
      %v2932 = vlaneseq
      %v2933 = vshrl.u32 %v2932, 7
      %v2934 = vsub.s32 %v2931, %v2933
      %v2935 = vrot.slane %v2927, %v2934
      %v2937 = vunpack.c.l.s4 1983009808
      %v2938 = vunpack.c.0.s8 %v2937
      %v2939 = vlaneseq
      %v2940 = vshrl.u32 %v2939, 7
      %v2941 = vsub.s32 %v2938, %v2940
      %v2942 = vrot.slane %v2928, %v2941
      %v2943 = vcombine.low %v2935, %v2942
      %vm2944 = vcmask 1044484
      %v2945 = vsel %vm2944, %v2892, %v2892
      %vm2946 = vcmask 1046534
      %v2947 = vsel %vm2946, %v2892, %v2945
      %v2948 = vrot.slane %v2926, 7
      %vm2949 = vcmask 1041409
      %v2950 = vsel %vm2949, %v2948, %v2947
      %vm2951 = vcmask 1043459
      %v2952 = vsel %vm2951, %v2948, %v2950
      %vm2953 = vcmask 1045509
      %v2954 = vsel %vm2953, %v2948, %v2952
      %vm2955 = vcmask 1047559
      %v2956 = vsel %vm2955, %v2948, %v2954
      %v2957 = vsel %vm2944, %v2909, %v2909
      %v2958 = vsel %vm2946, %v2909, %v2957
      %v2959 = vrot.slane %v2943, 7
      %v2960 = vsel %vm2949, %v2959, %v2958
      %v2961 = vsel %vm2951, %v2959, %v2960
      %v2962 = vsel %vm2953, %v2959, %v2961
      %v2963 = vsel %vm2955, %v2959, %v2962
      %2966 = vst [vmem:[#allocation2] sm:$0xff] %v2956
      %2967 = vst [vmem:[#allocation2 + $0x8] sm:$0xff] %v2963
      %v2984 = vcombine.low %v2660, %v2673
      %v2985 = vcombine.low %v2686, %v2699
      %v2987 = vunpack.c.l.s4 1983009808
      %v2988 = vunpack.c.0.s8 %v2987
      %v2989 = vlaneseq
      %v2990 = vshrl.u32 %v2989, 7
      %v2991 = vsub.s32 %v2988, %v2990
      %v2992 = vrot.slane %v2984, %v2991
      %v2994 = vunpack.c.l.s4 1983009808
      %v2995 = vunpack.c.0.s8 %v2994
      %v2996 = vlaneseq
      %v2997 = vshrl.u32 %v2996, 7
      %v2998 = vsub.s32 %v2995, %v2997
      %v2999 = vrot.slane %v2985, %v2998
      %v3000 = vcombine.low %v2992, %v2999
      %v3001 = vcombine.low %v2712, %v2725
      %v3002 = vcombine.low %v2738, %v2751
      %v3004 = vunpack.c.l.s4 1983009808
      %v3005 = vunpack.c.0.s8 %v3004
      %v3006 = vlaneseq
      %v3007 = vshrl.u32 %v3006, 7
      %v3008 = vsub.s32 %v3005, %v3007
      %v3009 = vrot.slane %v3001, %v3008
      %v3011 = vunpack.c.l.s4 1983009808
      %v3012 = vunpack.c.0.s8 %v3011
      %v3013 = vlaneseq
      %v3014 = vshrl.u32 %v3013, 7
      %v3015 = vsub.s32 %v3012, %v3014
      %v3016 = vrot.slane %v3002, %v3015
      %v3017 = vcombine.low %v3009, %v3016
      %v3018 = vcombine.low %v2764, %v2777
      %v3019 = vcombine.low %v2790, %v2803
      %v3021 = vunpack.c.l.s4 1983009808
      %v3022 = vunpack.c.0.s8 %v3021
      %v3023 = vlaneseq
      %v3024 = vshrl.u32 %v3023, 7
      %v3025 = vsub.s32 %v3022, %v3024
      %v3026 = vrot.slane %v3018, %v3025
      %v3028 = vunpack.c.l.s4 1983009808
      %v3029 = vunpack.c.0.s8 %v3028
      %v3030 = vlaneseq
      %v3031 = vshrl.u32 %v3030, 7
      %v3032 = vsub.s32 %v3029, %v3031
      %v3033 = vrot.slane %v3019, %v3032
      %v3034 = vcombine.low %v3026, %v3033
      %v3035 = vcombine.low %v2816, %v2829
      %v3036 = vcombine.low %v2842, %v2855
      %v3038 = vunpack.c.l.s4 1983009808
      %v3039 = vunpack.c.0.s8 %v3038
      %v3040 = vlaneseq
      %v3041 = vshrl.u32 %v3040, 7
      %v3042 = vsub.s32 %v3039, %v3041
      %v3043 = vrot.slane %v3035, %v3042
      %v3045 = vunpack.c.l.s4 1983009808
      %v3046 = vunpack.c.0.s8 %v3045
      %v3047 = vlaneseq
      %v3048 = vshrl.u32 %v3047, 7
      %v3049 = vsub.s32 %v3046, %v3048
      %v3050 = vrot.slane %v3036, %v3049
      %v3051 = vcombine.low %v3043, %v3050
      %v3052 = vsel %vm2944, %v3000, %v3000
      %v3053 = vsel %vm2946, %v3000, %v3052
      %v3054 = vrot.slane %v3034, 7
      %v3055 = vsel %vm2949, %v3054, %v3053
      %v3056 = vsel %vm2951, %v3054, %v3055
      %v3057 = vsel %vm2953, %v3054, %v3056
      %v3058 = vsel %vm2955, %v3054, %v3057
      %v3059 = vsel %vm2944, %v3017, %v3017
      %v3060 = vsel %vm2946, %v3017, %v3059
      %v3061 = vrot.slane %v3051, 7
      %v3062 = vsel %vm2949, %v3061, %v3060
      %v3063 = vsel %vm2951, %v3061, %v3062
      %v3064 = vsel %vm2953, %v3061, %v3063
      %v3065 = vsel %vm2955, %v3061, %v3064
      %3068 = vst [vmem:[#allocation6] sm:$0xff] %v3058
      %3069 = vst [vmem:[#allocation6 + $0x8] sm:$0xff] %v3065
    $region41: #{tpu_custom_call.1} parent=1 // pred_fallthru
      _
    %p3070 = scmp.gt.s32.totalorder 0, 0
    // Predicated region
    $region42: #{tpu_custom_call.1} parent=1 // pred_check
      %p3071 = pneg %p3070
    $region43: #{tpu_custom_call.1} parent=1 // pred_check_branch
      %3073 = sbr.rel (%p3071) target = $region45
    $region44: #{tpu_custom_call.1} parent=1 // pred_region
      %v3074 = vld [vmem:[#allocation2] sm:$0xff]
      %v3075 = vld [vmem:[#allocation2 + $0x8] sm:$0xff]
      %v3092 = vcombine.low %v1494, %v1507
      %v3093 = vcombine.low %v1520, %v1533
      %v3095 = vunpack.c.l.s4 1983009808
      %v3096 = vunpack.c.0.s8 %v3095
      %v3097 = vlaneseq
      %v3098 = vshrl.u32 %v3097, 7
      %v3099 = vsub.s32 %v3096, %v3098
      %v3100 = vrot.slane %v3092, %v3099
      %v3102 = vunpack.c.l.s4 1983009808
      %v3103 = vunpack.c.0.s8 %v3102
      %v3104 = vlaneseq
      %v3105 = vshrl.u32 %v3104, 7
      %v3106 = vsub.s32 %v3103, %v3105
      %v3107 = vrot.slane %v3093, %v3106
      %v3108 = vcombine.low %v3100, %v3107
      %v3109 = vcombine.low %v1546, %v1559
      %v3110 = vcombine.low %v1572, %v1585
      %v3112 = vunpack.c.l.s4 1983009808
      %v3113 = vunpack.c.0.s8 %v3112
      %v3114 = vlaneseq
      %v3115 = vshrl.u32 %v3114, 7
      %v3116 = vsub.s32 %v3113, %v3115
      %v3117 = vrot.slane %v3109, %v3116
      %v3119 = vunpack.c.l.s4 1983009808
      %v3120 = vunpack.c.0.s8 %v3119
      %v3121 = vlaneseq
      %v3122 = vshrl.u32 %v3121, 7
      %v3123 = vsub.s32 %v3120, %v3122
      %v3124 = vrot.slane %v3110, %v3123
      %v3125 = vcombine.low %v3117, %v3124
      %v3126 = vcombine.low %v1598, %v1611
      %v3127 = vcombine.low %v1624, %v1637
      %v3129 = vunpack.c.l.s4 1983009808
      %v3130 = vunpack.c.0.s8 %v3129
      %v3131 = vlaneseq
      %v3132 = vshrl.u32 %v3131, 7
      %v3133 = vsub.s32 %v3130, %v3132
      %v3134 = vrot.slane %v3126, %v3133
      %v3136 = vunpack.c.l.s4 1983009808
      %v3137 = vunpack.c.0.s8 %v3136
      %v3138 = vlaneseq
      %v3139 = vshrl.u32 %v3138, 7
      %v3140 = vsub.s32 %v3137, %v3139
      %v3141 = vrot.slane %v3127, %v3140
      %v3142 = vcombine.low %v3134, %v3141
      %v3143 = vcombine.low %v1650, %v1663
      %v3144 = vcombine.low %v1676, %v1689
      %v3146 = vunpack.c.l.s4 1983009808
      %v3147 = vunpack.c.0.s8 %v3146
      %v3148 = vlaneseq
      %v3149 = vshrl.u32 %v3148, 7
      %v3150 = vsub.s32 %v3147, %v3149
      %v3151 = vrot.slane %v3143, %v3150
      %v3153 = vunpack.c.l.s4 1983009808
      %v3154 = vunpack.c.0.s8 %v3153
      %v3155 = vlaneseq
      %v3156 = vshrl.u32 %v3155, 7
      %v3157 = vsub.s32 %v3154, %v3156
      %v3158 = vrot.slane %v3144, %v3157
      %v3159 = vcombine.low %v3151, %v3158
      %vm3160 = vcmask 1044484
      %v3161 = vsel %vm3160, %v3108, %v3108
      %vm3162 = vcmask 1046534
      %v3163 = vsel %vm3162, %v3108, %v3161
      %v3164 = vrot.slane %v3142, 7
      %vm3165 = vcmask 1041409
      %v3166 = vsel %vm3165, %v3164, %v3163
      %vm3167 = vcmask 1043459
      %v3168 = vsel %vm3167, %v3164, %v3166
      %vm3169 = vcmask 1045509
      %v3170 = vsel %vm3169, %v3164, %v3168
      %vm3171 = vcmask 1047559
      %v3172 = vsel %vm3171, %v3164, %v3170
      %v3173 = vsel %vm3160, %v3125, %v3125
      %v3174 = vsel %vm3162, %v3125, %v3173
      %v3175 = vrot.slane %v3159, 7
      %v3176 = vsel %vm3165, %v3175, %v3174
      %v3177 = vsel %vm3167, %v3175, %v3176
      %v3178 = vsel %vm3169, %v3175, %v3177
      %v3179 = vsel %vm3171, %v3175, %v3178
      %v3182 = vmax.f32 %v3074, %v3172
      %v3183 = vmax.f32 %v3075, %v3179
      %3184 = vst [vmem:[#allocation2] sm:$0xff] %v3182
      %3185 = vst [vmem:[#allocation2 + $0x8] sm:$0xff] %v3183
      %v3186 = vld [vmem:[#allocation6] sm:$0xff]
      %v3187 = vld [vmem:[#allocation6 + $0x8] sm:$0xff]
      %v3204 = vcombine.low %v2660, %v2673
      %v3205 = vcombine.low %v2686, %v2699
      %v3207 = vunpack.c.l.s4 1983009808
      %v3208 = vunpack.c.0.s8 %v3207
      %v3209 = vlaneseq
      %v3210 = vshrl.u32 %v3209, 7
      %v3211 = vsub.s32 %v3208, %v3210
      %v3212 = vrot.slane %v3204, %v3211
      %v3214 = vunpack.c.l.s4 1983009808
      %v3215 = vunpack.c.0.s8 %v3214
      %v3216 = vlaneseq
      %v3217 = vshrl.u32 %v3216, 7
      %v3218 = vsub.s32 %v3215, %v3217
      %v3219 = vrot.slane %v3205, %v3218
      %v3220 = vcombine.low %v3212, %v3219
      %v3221 = vcombine.low %v2712, %v2725
      %v3222 = vcombine.low %v2738, %v2751
      %v3224 = vunpack.c.l.s4 1983009808
      %v3225 = vunpack.c.0.s8 %v3224
      %v3226 = vlaneseq
      %v3227 = vshrl.u32 %v3226, 7
      %v3228 = vsub.s32 %v3225, %v3227
      %v3229 = vrot.slane %v3221, %v3228
      %v3231 = vunpack.c.l.s4 1983009808
      %v3232 = vunpack.c.0.s8 %v3231
      %v3233 = vlaneseq
      %v3234 = vshrl.u32 %v3233, 7
      %v3235 = vsub.s32 %v3232, %v3234
      %v3236 = vrot.slane %v3222, %v3235
      %v3237 = vcombine.low %v3229, %v3236
      %v3238 = vcombine.low %v2764, %v2777
      %v3239 = vcombine.low %v2790, %v2803
      %v3241 = vunpack.c.l.s4 1983009808
      %v3242 = vunpack.c.0.s8 %v3241
      %v3243 = vlaneseq
      %v3244 = vshrl.u32 %v3243, 7
      %v3245 = vsub.s32 %v3242, %v3244
      %v3246 = vrot.slane %v3238, %v3245
      %v3248 = vunpack.c.l.s4 1983009808
      %v3249 = vunpack.c.0.s8 %v3248
      %v3250 = vlaneseq
      %v3251 = vshrl.u32 %v3250, 7
      %v3252 = vsub.s32 %v3249, %v3251
      %v3253 = vrot.slane %v3239, %v3252
      %v3254 = vcombine.low %v3246, %v3253
      %v3255 = vcombine.low %v2816, %v2829
      %v3256 = vcombine.low %v2842, %v2855
      %v3258 = vunpack.c.l.s4 1983009808
      %v3259 = vunpack.c.0.s8 %v3258
      %v3260 = vlaneseq
      %v3261 = vshrl.u32 %v3260, 7
      %v3262 = vsub.s32 %v3259, %v3261
      %v3263 = vrot.slane %v3255, %v3262
      %v3265 = vunpack.c.l.s4 1983009808
      %v3266 = vunpack.c.0.s8 %v3265
      %v3267 = vlaneseq
      %v3268 = vshrl.u32 %v3267, 7
      %v3269 = vsub.s32 %v3266, %v3268
      %v3270 = vrot.slane %v3256, %v3269
      %v3271 = vcombine.low %v3263, %v3270
      %v3272 = vsel %vm3160, %v3220, %v3220
      %v3273 = vsel %vm3162, %v3220, %v3272
      %v3274 = vrot.slane %v3254, 7
      %v3275 = vsel %vm3165, %v3274, %v3273
      %v3276 = vsel %vm3167, %v3274, %v3275
      %v3277 = vsel %vm3169, %v3274, %v3276
      %v3278 = vsel %vm3171, %v3274, %v3277
      %v3279 = vsel %vm3160, %v3237, %v3237
      %v3280 = vsel %vm3162, %v3237, %v3279
      %v3281 = vrot.slane %v3271, 7
      %v3282 = vsel %vm3165, %v3281, %v3280
      %v3283 = vsel %vm3167, %v3281, %v3282
      %v3284 = vsel %vm3169, %v3281, %v3283
      %v3285 = vsel %vm3171, %v3281, %v3284
      %v3288 = vmax.f32 %v3186, %v3278
      %v3289 = vmax.f32 %v3187, %v3285
      %3290 = vst [vmem:[#allocation6] sm:$0xff] %v3288
      %3291 = vst [vmem:[#allocation6 + $0x8] sm:$0xff] %v3289
    $region45: #{tpu_custom_call.1} parent=1 // pred_fallthru
      _
    // Predicated region
    $region46: #{tpu_custom_call.1} parent=1 // pred_check
      %p3292 = pneg %p2856
    $region47: #{tpu_custom_call.1} parent=1 // pred_check_branch
      %3294 = sbr.rel (%p3292) target = $region49
    $region48: #{tpu_custom_call.1} parent=1 // pred_region
      %v3295 = vld [vmem:[#allocation6] sm:$0xff]
      %v3296 = vld [vmem:[#allocation6 + $0x8] sm:$0xff]
      %v3297 = vld [vmem:[#allocation2] sm:$0xff]
      %v3298 = vld [vmem:[#allocation2 + $0x8] sm:$0xff]
      %v3299 = vsub.f32 %v3295, %v3297
      %v3300 = vsub.f32 %v3296, %v3298
      %3301 = vst [vmem:[#allocation6] sm:$0xff] %v3299
      %3302 = vst [vmem:[#allocation6 + $0x8] sm:$0xff] %v3300
    $region49: #{tpu_custom_call.1} parent=1 // pred_fallthru
      _
    // Predicated region
    $region50: #{tpu_custom_call.1} parent=1 // pred_check
      _
    $region51: #{tpu_custom_call.1} parent=1 // pred_check_branch
      %3304 = sbr.rel (0) target = $region53
    $region52: #{tpu_custom_call.1} parent=1 // pred_region
      %s3306 = ssub.s32 256, 256
      %3307 = vsyncadd [#allocation5], %s3306
      %s3309 = sshll.u32 [#allocation6], 4
      %s3310 = int_to_ptr.vmem [resolvable:$true] %s3309
      %3312 = dma.vmem_to_hbm [thread:$0]  %s3310, 256, %s8, [#allocation5]
    $region53: #{tpu_custom_call.1} parent=1 // pred_fallthru
      _
    // Predicated region
    $region54: #{tpu_custom_call.1} parent=1 // pred_check
      _
    $region55: #{tpu_custom_call.1} parent=1 // pred_check_branch
      %3314 = sbr.rel (0) target = $region57
    $region56: #{tpu_custom_call.1} parent=1 // pred_region
      %3315 = dma.done [#allocation5], 256
    $region57: #{tpu_custom_call.1} parent=1 // pred_fallthru
      _
    %3316 = vsyncpa [#allocation4], 1
    %3317 = vsyncpa [#allocation5], 1

</llo_original>
